<compile_context>
chip_gen: v7x
topology: tpu7x:2x2x1
jax: 0.10.0
libtpu: 0.0.40
codegen_flags: <defaults>
</compile_context>

<pallas_src>
import numpy as np
import jax
import jax.numpy as jnp
from jax import lax
from jax.experimental import pallas as pl
from jax.experimental.pallas import tpu as pltpu

LANES = 128
L = 32            # signal length (forced by the residual add + Linear(96, 64))
META_SEQ = 8      # forced by MetaNet.net2 Linear(8, 16)
META_FEAT = 5     # forced by MetaNet.net1 Linear(5, 32)
MET_OFF = 64      # met lives at lanes 64..103 of the merged input slab
GROUP = 40        # lane-group width per conv chain (max intermediate length is 33)
OFFS = (0, GROUP, 2 * GROUP)

# (kernel_size, dilation, padding) for each Conv1d in the three chains
NET1 = [(2, 1, 1), (2, 1, 0), (2, 2, 1), (2, 4, 2), (2, 8, 4), (2, 16, 8), (2, 32, 16)]
NET2 = [(4, 1, 1), (4, 1, 2), (4, 2, 3), (4, 4, 6), (4, 8, 12), (4, 16, 24), (4, 32, 48)]
NET3 = [(3, 1, 1), (3, 2, 2), (3, 4, 4), (3, 8, 8), (3, 16, 16), (3, 32, 32)]
CHAIN_ACTS = (
    ("relu", "relu", "relu", "tanh", "tanh", "tanh", None),
    ("relu", "relu", "relu", "tanh", "tanh", "tanh", None),
    ("relu", "relu", "relu", "tanh", "tanh", None),
)
# Packed per-step activations for conv steps 0..5.  Step 6 has no activation and is
# folded into the Linear(96,64) head on the host.  At step 5 only chains 1&2 get tanh
# ("tanh01"); chain3 already finished its last (activation-free) conv at that step.
STEP_ACTS6 = ("relu", "relu", "relu", "tanh", "tanh", "tanh01")

# Indices into the stacked weight / bias operands.
RES_W, RES_B = 0, 0        # 8 matrices, 8 biases
RES2_W, RES2_B = 8, 8      # 8 matrices, 8 biases
META_W, META_B = 16, 16    # 5 matrices, 3 biases
HEAD_W, HEAD_B = 21, 19    # 4 matrices, 4 biases
N_W, N_B = 25, 23


# ------------------------------ fused kernel -------------------------------

def fused_total_kernel(x_ref, W_ref, B_ref, out_ref):
    def mm(a_bf16, w_bf16):            # bf16 x bf16 MXU matmul, f32 accumulate
        return jnp.dot(a_bf16, w_bf16, preferred_element_type=jnp.float32)

    def dilated_resid(v_in_f32, w0, b0):
        """DilatedNet(v) + v on a (tb,128) lane-packed slab (signal lanes 0..31)."""
        v_res = v_in_f32.astype(jnp.bfloat16)     # bf16 residual holder (vreg pressure)
        v = v_res
        for step, act in enumerate(STEP_ACTS6):   # block-diag Toeplitz conv steps 0..5
            t = mm(v, W_ref[w0 + step]) + B_ref[b0 + step]
            if act == "relu":
                v = jnp.maximum(t, 0.0).astype(jnp.bfloat16)
            elif act == "tanh":
                v = jnp.tanh(t.astype(jnp.bfloat16))
            else:  # "tanh01": tanh only on chain-1/2 lane groups; lazy iota mask
                lane = lax.broadcasted_iota(jnp.int32, t.shape, 1)
                t16 = t.astype(jnp.bfloat16)
                v = jnp.where(lane < 2 * GROUP, jnp.tanh(t16), t16)
        # folded (conv-step-7 @ Linear(96,64)) + Tanh   (Dropout = identity)
        h = jnp.tanh((mm(v, W_ref[w0 + 6]) + B_ref[b0 + 6]).astype(jnp.bfloat16))
        y = mm(h, W_ref[w0 + 7]) + B_ref[b0 + 7]   # Linear(64,32), f32
        return y + v_res.astype(jnp.float32)       # residual add (TotalNet.forward)

    x_slab = x_ref[...]                            # lanes 0..31 = x, 64..103 = met
    o = dilated_resid(x_slab, RES_W, RES_B)
    o = dilated_resid(o, RES2_W, RES2_B)

    # MetaNet — transpose_(1,2) folded into the packed block structure; the
    # activation-free Linear(32,7) @ Linear(8,16) pair is pre-multiplied on the host.
    m = x_slab.astype(jnp.bfloat16)
    u_a = jnp.tanh((mm(m, W_ref[META_W + 0]) + B_ref[META_B + 0]).astype(jnp.bfloat16))
    u_b = jnp.tanh((mm(m, W_ref[META_W + 1]) + B_ref[META_B + 0]).astype(jnp.bfloat16))
    h2 = jnp.tanh((mm(u_a, W_ref[META_W + 2]) + mm(u_b, W_ref[META_W + 3])
                   + B_ref[META_B + 1]).astype(jnp.bfloat16))
    met_vec = mm(h2, W_ref[META_W + 4]) + B_ref[META_B + 2]   # lands at lanes 32..38

    # final head on cat((o, met), dim=1) realised as disjoint lane groups of one slab
    z = (o + met_vec).astype(jnp.bfloat16)
    h = jnp.tanh((mm(z, W_ref[HEAD_W + 0]) + B_ref[HEAD_B + 0]).astype(jnp.bfloat16))
    h = jnp.tanh((mm(h, W_ref[HEAD_W + 1]) + B_ref[HEAD_B + 1]).astype(jnp.bfloat16))
    h = jnp.tanh((mm(h, W_ref[HEAD_W + 2]) + B_ref[HEAD_B + 2]).astype(jnp.bfloat16))
    out_ref[...] = 1.0 + mm(h, W_ref[HEAD_W + 3]) + B_ref[HEAD_B + 3]


# ---------------------- parameter init (deterministic) ---------------------

def _linear_init(key, fan_in, fan_out):
    kw, kb = jax.random.split(key)
    s = 1.0 / np.sqrt(fan_in)
    W = jax.random.uniform(kw, (fan_in, fan_out), jnp.float32, -s, s)
    b = jax.random.uniform(kb, (fan_out,), jnp.float32, -s, s)
    return W, b


def _conv_init(key, k):
    kw, kb = jax.random.split(key)
    s = 1.0 / np.sqrt(k)
    w = jax.random.uniform(kw, (k,), jnp.float32, -s, s)
    b = jax.random.uniform(kb, (), jnp.float32, -s, s)
    return w, b


def init_dilated_raw(key):
    keys = iter(jax.random.split(key, 22))
    return {
        "net1": [_conv_init(next(keys), k) for (k, _, _) in NET1],
        "net2": [_conv_init(next(keys), k) for (k, _, _) in NET2],
        "net3": [_conv_init(next(keys), k) for (k, _, _) in NET3],
        "head1": _linear_init(next(keys), 96, 64),
        "head2": _linear_init(next(keys), 64, 32),
    }


def init_raw_params(key):
    k_res, k_res2, k_meta, k_head = jax.random.split(key, 4)
    km = jax.random.split(k_meta, 4)
    kh = jax.random.split(k_head, 4)
    return {
        "res": init_dilated_raw(k_res),
        "res2": init_dilated_raw(k_res2),
        "meta": {
            "l1": _linear_init(km[0], 5, 32),
            "l2": _linear_init(km[1], 32, 7),
            "l3": _linear_init(km[2], 8, 16),
            "l4": _linear_init(km[3], 16, 1),
        },
        "head": [
            _linear_init(kh[0], 39, 128),
            _linear_init(kh[1], 128, 128),
            _linear_init(kh[2], 128, 128),
            _linear_init(kh[3], 128, 32),
        ],
    }


# ------------------- pack params into lane-packed matrices -----------------

def _toeplitz_local(w, k, d, p, lin):
    """1->1 channel dilated Conv1d (cross-correlation, zero pad) as a GROUPxGROUP block."""
    lout = lin + 2 * p - d * (k - 1)
    T = np.zeros((GROUP, GROUP), np.float32)
    for t in range(lout):
        for j in range(k):
            i = t + j * d - p
            if 0 <= i < lin:
                T[i, t] += float(w[j])
    return T, lout


def pack_dilated(raw):
    """One DilatedNet as 8 (128,128) matrices: 6 packed conv steps + folded
    (conv-step-7 @ Linear(96,64)) + Linear(64,32).  All folding in f32."""
    cfgs = (NET1, NET2, NET3)
    params = (raw["net1"], raw["net2"], raw["net3"])
    Ws = np.zeros((9, LANES, LANES), np.float32)
    Bs = np.zeros((9, 1, LANES), np.float32)
    lin = [L, L, L]
    for step in range(7):
        for c in range(3):
            goff = OFFS[c]
            if step < len(cfgs[c]):
                k, d, p = cfgs[c][step]
                w, b = params[c][step]
                T, lout = _toeplitz_local(np.asarray(w, np.float32), k, d, p, lin[c])
                # step 0 reads the input signal from lanes 0..31 (replication folded in)
                row_off = 0 if step == 0 else goff
                Ws[step, row_off:row_off + GROUP, goff:goff + GROUP] = T
                Bs[step, 0, goff:goff + lout] = float(np.asarray(b))
                lin[c] = lout
            else:
                # chain3 has only 6 convs: identity pass-through at the last step
                for t in range(lin[c]):
                    Ws[step, goff + t, goff + t] = 1.0
    # head Linear(96,64): packed-state lane OFFS[c]+i  <->  concat row 32*c+i
    W1, b1 = raw["head1"]
    W2, b2 = raw["head2"]
    W1 = np.asarray(W1, np.float32)
    for c in range(3):
        Ws[7, OFFS[c]:OFFS[c] + 32, :64] = W1[32 * c:32 * (c + 1), :]
    Bs[7, 0, :64] = np.asarray(b1, np.float32)
    Ws[8, :64, :32] = np.asarray(W2, np.float32)
    Bs[8, 0, :32] = np.asarray(b2, np.float32)
    # fold the activation-free conv step 6 into the Linear(96,64) matrix (f32 products)
    Wf = np.zeros((8, LANES, LANES), np.float32)
    Bf = np.zeros((8, 1, LANES), np.float32)
    Wf[:6] = Ws[:6]
    Bf[:6] = Bs[:6]
    Wf[6] = Ws[6] @ Ws[7]
    Bf[6] = Bs[6] @ Ws[7] + Bs[7]
    Wf[7] = Ws[8]
    Bf[7] = Bs[8]
    return Wf, Bf


def pack_meta(raw_meta):
    """MetaNet as 5 flat block matrices; transpose_(1,2) folded into the block
    structure; the activation-free Linear(32,7) @ Linear(8,16) pair pre-multiplied."""
    W1, b1 = raw_meta["l1"]; W2, b2 = raw_meta["l2"]
    W3, b3 = raw_meta["l3"]; W4, b4 = raw_meta["l4"]
    W1 = np.asarray(W1, np.float32); b1 = np.asarray(b1, np.float32)
    W2 = np.asarray(W2, np.float32); b2 = np.asarray(b2, np.float32)
    W3 = np.asarray(W3, np.float32); b3 = np.asarray(b3, np.float32)
    W4 = np.asarray(W4, np.float32); b4 = np.asarray(b4, np.float32)
    Ws = np.zeros((6, LANES, LANES), np.float32)
    Bs = np.zeros((4, 1, LANES), np.float32)
    # stage-1 Linear(5,32): slab lane MET_OFF+5s+f -> lane 32*s'+j (seq halves a/b)
    for sp in range(4):
        Ws[0, MET_OFF + 5 * sp:MET_OFF + 5 * sp + 5, 32 * sp:32 * sp + 32] = W1
        Ws[1, MET_OFF + 5 * (sp + 4):MET_OFF + 5 * (sp + 4) + 5, 32 * sp:32 * sp + 32] = W1
        Bs[0, 0, 32 * sp:32 * sp + 32] = b1
    # stage-1 Linear(32,7): output lane 7s+c
    for sp in range(4):
        Ws[2, 32 * sp:32 * sp + 32, 7 * sp:7 * sp + 7] = W2
        Ws[3, 32 * sp:32 * sp + 32, 7 * (sp + 4):7 * (sp + 4) + 7] = W2
    for s in range(8):
        Bs[1, 0, 7 * s:7 * s + 7] = b2
    # stage-2 Linear(8,16) contracting the seq axis (this IS the transpose fold):
    #   lane 7s+c -> lane 16c+k with weight W3[s,k]
    for s in range(8):
        for c in range(7):
            Ws[4, 7 * s + c, 16 * c:16 * c + 16] = W3[s, :]
    for c in range(7):
        Bs[2, 0, 16 * c:16 * c + 16] = b3
    # stage-2 Linear(16,1): result lands directly at lanes 32..38 of the head input
    for c in range(7):
        Ws[5, 16 * c:16 * c + 16, 32 + c] = W4[:, 0]
        Bs[3, 0, 32 + c] = b4[0]
    # fold Linear(32,7) into Linear(8,16) (no activation between them), in f32
    Wf = np.zeros((5, LANES, LANES), np.float32)
    Bf = np.zeros((3, 1, LANES), np.float32)
    Wf[0] = Ws[0]
    Wf[1] = Ws[1]
    Wf[2] = Ws[2] @ Ws[4]
    Wf[3] = Ws[3] @ Ws[4]
    Wf[4] = Ws[5]
    Bf[0] = Bs[0]
    Bf[1] = Bs[1] @ Ws[4] + Bs[2]
    Bf[2] = Bs[3]
    return Wf, Bf


def pack_head(raw_head):
    (W1, b1), (W2, b2), (W3, b3), (W4, b4) = raw_head
    Ws = np.zeros((4, LANES, LANES), np.float32)
    Bs = np.zeros((4, 1, LANES), np.float32)
    Ws[0, :39, :] = np.asarray(W1, np.float32)      # rows 0..31 <- o, rows 32..38 <- met
    Bs[0, 0, :] = np.asarray(b1, np.float32)
    Ws[1, :, :] = np.asarray(W2, np.float32)
    Bs[1, 0, :] = np.asarray(b2, np.float32)
    Ws[2, :, :] = np.asarray(W3, np.float32)
    Bs[2, 0, :] = np.asarray(b3, np.float32)
    Ws[3, :, :32] = np.asarray(W4, np.float32)
    Bs[3, 0, :32] = np.asarray(b4, np.float32)
    return Ws, Bs


def pack_params(raw):
    rW, rB = pack_dilated(raw["res"])
    r2W, r2B = pack_dilated(raw["res2"])
    mW, mB = pack_meta(raw["meta"])
    hW, hB = pack_head(raw["head"])
    W = np.concatenate([rW, r2W, mW, hW], axis=0)    # (25, 128, 128)
    Bv = np.concatenate([rB, r2B, mB, hB], axis=0)   # (23, 1, 128)
    assert W.shape[0] == N_W and Bv.shape[0] == N_B
    return jnp.asarray(W, jnp.bfloat16), jnp.asarray(Bv, jnp.float32)


# ------------------------------ forward pass -------------------------------

def _round_up(n, m):
    return ((n + m - 1) // m) * m


def total_net_pallas(x, met, l, packed, row_tile=256):
    del l  # `l` is unused in TotalNet.forward
    W, Bv = packed
    B = x.shape[0]
    BP8 = _round_up(B, 8)
    TB = min(row_tile, BP8)
    if BP8 > 8:
        # at least 2 grid steps so ("parallel",) can shard across both v7x TensorCores
        TB = min(TB, _round_up((BP8 + 1) // 2, 8))
    BP = _round_up(BP8, TB)

    # single merged input slab: x -> lanes 0..31, flattened met -> lanes 64..103
    slab = jnp.zeros((BP, LANES), jnp.float32)
    slab = slab.at[:B, :L].set(x.astype(jnp.float32))
    slab = slab.at[:B, MET_OFF:MET_OFF + META_SEQ * META_FEAT].set(
        met.reshape(B, META_SEQ * META_FEAT).astype(jnp.float32))

    row_spec = pl.BlockSpec((TB, LANES), lambda i: (i, 0))
    w_spec = pl.BlockSpec((N_W, LANES, LANES), lambda i: (0, 0, 0))
    b_spec = pl.BlockSpec((N_B, 1, LANES), lambda i: (0, 0, 0))

    n_mm = 25   # matmuls per row slab (2*8 dilated + 5 meta + 4 head)
    n_tanh = 14
    cost = pl.CostEstimate(
        flops=2 * BP * LANES * LANES * n_mm,
        transcendentals=BP * LANES * n_tanh,
        bytes_accessed=BP * LANES * 4 * 2 + int(W.size) * 2 + int(Bv.size) * 4,
    )

    out = pl.pallas_call(
        fused_total_kernel,
        out_shape=jax.ShapeDtypeStruct((BP, LANES), jnp.float32),
        grid_spec=pltpu.PrefetchScalarGridSpec(
            num_scalar_prefetch=0,
            grid=(BP // TB,),
            in_specs=[row_spec, w_spec, b_spec],
            out_specs=row_spec,
        ),
        compiler_params=pltpu.CompilerParams(dimension_semantics=("parallel",)),
        cost_estimate=cost,
    )(slab, W, Bv)
    return out[:B, :L]


# --------------------------- pure-JAX reference ----------------------------

def _conv1d_ref(x, w, b, d, p):
    out = lax.conv_general_dilated(
        x[:, None, :], jnp.asarray(w)[None, None, :],
        window_strides=(1,), padding=[(p, p)], rhs_dilation=(d,),
        dimension_numbers=("NCH", "OIH", "NCH"))
    return out[:, 0, :] + b


def dilated_ref(x, raw):
    chains = []
    for cfg, params, acts in zip((NET1, NET2, NET3),
                                 (raw["net1"], raw["net2"], raw["net3"]), CHAIN_ACTS):
        v = x
        for (k, d, p), (w, b), a in zip(cfg, params, acts):
            v = _conv1d_ref(v, w, b, d, p)
            if a == "relu":
                v = jnp.maximum(v, 0.0)
            elif a == "tanh":
                v = jnp.tanh(v)
        chains.append(v)
    z = jnp.concatenate(chains, axis=1)
    W1, b1 = raw["head1"]; W2, b2 = raw["head2"]
    return jnp.tanh(z @ W1 + b1) @ W2 + b2


def meta_ref(m, mp):
    W1, b1 = mp["l1"]; W2, b2 = mp["l2"]; W3, b3 = mp["l3"]; W4, b4 = mp["l4"]
    t = jnp.tanh(m @ W1 + b1) @ W2 + b2          # (B, 8, 7)
    t = jnp.swapaxes(t, 1, 2)                    # (B, 7, 8)
    h = jnp.tanh(t @ W3 + b3) @ W4 + b4          # (B, 7, 1)
    return h[..., 0]


def total_ref(x, met, raw):
    o = dilated_ref(x, raw["res"]) + x
    o = dilated_ref(o, raw["res2"]) + o
    mv = meta_ref(met, raw["meta"])
    z = jnp.concatenate([o, mv], axis=1)
    (W1, b1), (W2, b2), (W3, b3), (W4, b4) = raw["head"]
    h = jnp.tanh(z @ W1 + b1)
    h = jnp.tanh(h @ W2 + b2)
    h = jnp.tanh(h @ W3 + b3)
    return 1.0 + h @ W4 + b4


# ----------------------------------- main -----------------------------------

if __name__ == "__main__":
    key = jax.random.PRNGKey(0)
    kx, km, kp = jax.random.split(key, 3)
    B = 2
    x = jax.random.normal(kx, (B, L), jnp.float32)
    met = jax.random.normal(km, (B, META_SEQ, META_FEAT), jnp.float32)
    l = jnp.full((B,), L, jnp.int32)  # unused by the forward pass (kept for parity)

    raw = init_raw_params(kp)
    packed = pack_params(raw)

    fwd = jax.jit(lambda x_, m_, l_: total_net_pallas(x_, m_, l_, packed))
    out = jax.block_until_ready(fwd(x, met, l))

    ref = jax.block_until_ready(total_ref(x, met, raw))
    assert out.shape == (B, 32)
    if not np.allclose(np.asarray(out), np.asarray(ref), atol=5e-2, rtol=5e-2):
        raise AssertionError("Pallas output does not match pure-JAX reference")
    print("KERNEL_OK")
</pallas_src>

<mosaic_0001>
module attributes {stable_mosaic.version = 11 : i64} {
  func.func @fused_total_kernel(%arg0: i32, %arg1: memref<8x128xf32, #tpu.memory_space<vmem>>, %arg2: memref<25x128x128xbf16, #tpu.memory_space<vmem>>, %arg3: memref<23x1x128xf32, #tpu.memory_space<vmem>>, %arg4: memref<8x128xf32, #tpu.memory_space<vmem>>) attributes {dimension_semantics = [#tpu.dimension_semantics<parallel>], iteration_bounds = array<i64: 1>, scalar_prefetch = 0 : i64, scratch_operands = 0 : i64, tpu.core_type = #tpu.core_type<tc>, window_params = [{transform_indices = @transform_0, window_bounds = array<i64: 8, 128>}, {pipeline_mode = #tpu.pipeline_mode<synchronous>, transform_indices = @transform_1, window_bounds = array<i64: 25, 128, 128>}, {pipeline_mode = #tpu.pipeline_mode<synchronous>, transform_indices = @transform_2, window_bounds = array<i64: 23, 1, 128>}, {transform_indices = @transform_3, window_bounds = array<i64: 8, 128>}]} {
    %c0 = arith.constant 0 : index
    %c0_0 = arith.constant 0 : index
    %0 = vector.load %arg1[%c0, %c0_0] : memref<8x128xf32, #tpu.memory_space<vmem>>, vector<8x128xf32>
    %1 = arith.truncf %0 : vector<8x128xf32> to vector<8x128xbf16>
    %c0_1 = arith.constant 0 : index
    %c0_2 = arith.constant 0 : index
    %c0_3 = arith.constant 0 : index
    %2 = vector.load %arg2[%c0_1, %c0_2, %c0_3] : memref<25x128x128xbf16, #tpu.memory_space<vmem>>, vector<1x128x128xbf16>
    %3 = vector.shape_cast %2 : vector<1x128x128xbf16> to vector<128x128xbf16>
    %cst = arith.constant dense<0.000000e+00> : vector<8x128xf32>
    %4 = tpu.matmul %1, %3, %cst {dimension_numbers = #tpu.dot_dimension_numbers<[1], [0], [0], [1], [0, 0, 1, 1], [], []>} : vector<8x128xbf16>, vector<128x128xbf16>, vector<8x128xf32> -> vector<8x128xf32>
    %c0_4 = arith.constant 0 : index
    %c0_5 = arith.constant 0 : index
    %c0_6 = arith.constant 0 : index
    %5 = vector.load %arg3[%c0_4, %c0_5, %c0_6] : memref<23x1x128xf32, #tpu.memory_space<vmem>>, vector<1x1x128xf32>
    %6 = vector.shape_cast %5 : vector<1x1x128xf32> to vector<1x128xf32>
    %7 = vector.broadcast %6 : vector<1x128xf32> to vector<8x128xf32>
    %8 = arith.addf %4, %7 : vector<8x128xf32>
    %cst_7 = arith.constant 0.000000e+00 : f32
    %9 = vector.broadcast %cst_7 : f32 to vector<8x128xf32>
    %10 = arith.maximumf %8, %9 : vector<8x128xf32>
    %11 = arith.truncf %10 : vector<8x128xf32> to vector<8x128xbf16>
    %c1 = arith.constant 1 : index
    %c0_8 = arith.constant 0 : index
    %c0_9 = arith.constant 0 : index
    %12 = vector.load %arg2[%c1, %c0_8, %c0_9] : memref<25x128x128xbf16, #tpu.memory_space<vmem>>, vector<1x128x128xbf16>
    %13 = vector.shape_cast %12 : vector<1x128x128xbf16> to vector<128x128xbf16>
    %cst_10 = arith.constant dense<0.000000e+00> : vector<8x128xf32>
    %14 = tpu.matmul %11, %13, %cst_10 {dimension_numbers = #tpu.dot_dimension_numbers<[1], [0], [0], [1], [0, 0, 1, 1], [], []>} : vector<8x128xbf16>, vector<128x128xbf16>, vector<8x128xf32> -> vector<8x128xf32>
    %c1_11 = arith.constant 1 : index
    %c0_12 = arith.constant 0 : index
    %c0_13 = arith.constant 0 : index
    %15 = vector.load %arg3[%c1_11, %c0_12, %c0_13] : memref<23x1x128xf32, #tpu.memory_space<vmem>>, vector<1x1x128xf32>
    %16 = vector.shape_cast %15 : vector<1x1x128xf32> to vector<1x128xf32>
    %17 = vector.broadcast %16 : vector<1x128xf32> to vector<8x128xf32>
    %18 = arith.addf %14, %17 : vector<8x128xf32>
    %cst_14 = arith.constant 0.000000e+00 : f32
    %19 = vector.broadcast %cst_14 : f32 to vector<8x128xf32>
    %20 = arith.maximumf %18, %19 : vector<8x128xf32>
    %21 = arith.truncf %20 : vector<8x128xf32> to vector<8x128xbf16>
    %c2 = arith.constant 2 : index
    %c0_15 = arith.constant 0 : index
    %c0_16 = arith.constant 0 : index
    %22 = vector.load %arg2[%c2, %c0_15, %c0_16] : memref<25x128x128xbf16, #tpu.memory_space<vmem>>, vector<1x128x128xbf16>
    %23 = vector.shape_cast %22 : vector<1x128x128xbf16> to vector<128x128xbf16>
    %cst_17 = arith.constant dense<0.000000e+00> : vector<8x128xf32>
    %24 = tpu.matmul %21, %23, %cst_17 {dimension_numbers = #tpu.dot_dimension_numbers<[1], [0], [0], [1], [0, 0, 1, 1], [], []>} : vector<8x128xbf16>, vector<128x128xbf16>, vector<8x128xf32> -> vector<8x128xf32>
    %c2_18 = arith.constant 2 : index
    %c0_19 = arith.constant 0 : index
    %c0_20 = arith.constant 0 : index
    %25 = vector.load %arg3[%c2_18, %c0_19, %c0_20] : memref<23x1x128xf32, #tpu.memory_space<vmem>>, vector<1x1x128xf32>
    %26 = vector.shape_cast %25 : vector<1x1x128xf32> to vector<1x128xf32>
    %27 = vector.broadcast %26 : vector<1x128xf32> to vector<8x128xf32>
    %28 = arith.addf %24, %27 : vector<8x128xf32>
    %cst_21 = arith.constant 0.000000e+00 : f32
    %29 = vector.broadcast %cst_21 : f32 to vector<8x128xf32>
    %30 = arith.maximumf %28, %29 : vector<8x128xf32>
    %31 = arith.truncf %30 : vector<8x128xf32> to vector<8x128xbf16>
    %c3 = arith.constant 3 : index
    %c0_22 = arith.constant 0 : index
    %c0_23 = arith.constant 0 : index
    %32 = vector.load %arg2[%c3, %c0_22, %c0_23] : memref<25x128x128xbf16, #tpu.memory_space<vmem>>, vector<1x128x128xbf16>
    %33 = vector.shape_cast %32 : vector<1x128x128xbf16> to vector<128x128xbf16>
    %cst_24 = arith.constant dense<0.000000e+00> : vector<8x128xf32>
    %34 = tpu.matmul %31, %33, %cst_24 {dimension_numbers = #tpu.dot_dimension_numbers<[1], [0], [0], [1], [0, 0, 1, 1], [], []>} : vector<8x128xbf16>, vector<128x128xbf16>, vector<8x128xf32> -> vector<8x128xf32>
    %c3_25 = arith.constant 3 : index
    %c0_26 = arith.constant 0 : index
    %c0_27 = arith.constant 0 : index
    %35 = vector.load %arg3[%c3_25, %c0_26, %c0_27] : memref<23x1x128xf32, #tpu.memory_space<vmem>>, vector<1x1x128xf32>
    %36 = vector.shape_cast %35 : vector<1x1x128xf32> to vector<1x128xf32>
    %37 = vector.broadcast %36 : vector<1x128xf32> to vector<8x128xf32>
    %38 = arith.addf %34, %37 : vector<8x128xf32>
    %39 = arith.truncf %38 : vector<8x128xf32> to vector<8x128xbf16>
    %40 = math.tanh %39 : vector<8x128xbf16>
    %c4 = arith.constant 4 : index
    %c0_28 = arith.constant 0 : index
    %c0_29 = arith.constant 0 : index
    %41 = vector.load %arg2[%c4, %c0_28, %c0_29] : memref<25x128x128xbf16, #tpu.memory_space<vmem>>, vector<1x128x128xbf16>
    %42 = vector.shape_cast %41 : vector<1x128x128xbf16> to vector<128x128xbf16>
    %cst_30 = arith.constant dense<0.000000e+00> : vector<8x128xf32>
    %43 = tpu.matmul %40, %42, %cst_30 {dimension_numbers = #tpu.dot_dimension_numbers<[1], [0], [0], [1], [0, 0, 1, 1], [], []>} : vector<8x128xbf16>, vector<128x128xbf16>, vector<8x128xf32> -> vector<8x128xf32>
    %c4_31 = arith.constant 4 : index
    %c0_32 = arith.constant 0 : index
    %c0_33 = arith.constant 0 : index
    %44 = vector.load %arg3[%c4_31, %c0_32, %c0_33] : memref<23x1x128xf32, #tpu.memory_space<vmem>>, vector<1x1x128xf32>
    %45 = vector.shape_cast %44 : vector<1x1x128xf32> to vector<1x128xf32>
    %46 = vector.broadcast %45 : vector<1x128xf32> to vector<8x128xf32>
    %47 = arith.addf %43, %46 : vector<8x128xf32>
    %48 = arith.truncf %47 : vector<8x128xf32> to vector<8x128xbf16>
    %49 = math.tanh %48 : vector<8x128xbf16>
    %c5 = arith.constant 5 : index
    %c0_34 = arith.constant 0 : index
    %c0_35 = arith.constant 0 : index
    %50 = vector.load %arg2[%c5, %c0_34, %c0_35] : memref<25x128x128xbf16, #tpu.memory_space<vmem>>, vector<1x128x128xbf16>
    %51 = vector.shape_cast %50 : vector<1x128x128xbf16> to vector<128x128xbf16>
    %cst_36 = arith.constant dense<0.000000e+00> : vector<8x128xf32>
    %52 = tpu.matmul %49, %51, %cst_36 {dimension_numbers = #tpu.dot_dimension_numbers<[1], [0], [0], [1], [0, 0, 1, 1], [], []>} : vector<8x128xbf16>, vector<128x128xbf16>, vector<8x128xf32> -> vector<8x128xf32>
    %c5_37 = arith.constant 5 : index
    %c0_38 = arith.constant 0 : index
    %c0_39 = arith.constant 0 : index
    %53 = vector.load %arg3[%c5_37, %c0_38, %c0_39] : memref<23x1x128xf32, #tpu.memory_space<vmem>>, vector<1x1x128xf32>
    %54 = vector.shape_cast %53 : vector<1x1x128xf32> to vector<1x128xf32>
    %55 = vector.broadcast %54 : vector<1x128xf32> to vector<8x128xf32>
    %56 = arith.addf %52, %55 : vector<8x128xf32>
    %57 = tpu.iota {dimensions = array<i32: 1>} : vector<8x128xi32>
    %58 = arith.truncf %56 : vector<8x128xf32> to vector<8x128xbf16>
    %c80_i32 = arith.constant 80 : i32
    %59 = vector.broadcast %c80_i32 : i32 to vector<8x128xi32>
    %60 = arith.cmpi slt, %57, %59 : vector<8x128xi32>
    %61 = math.tanh %58 : vector<8x128xbf16>
    %62 = arith.select %60, %61, %58 : vector<8x128xi1>, vector<8x128xbf16>
    %c6 = arith.constant 6 : index
    %c0_40 = arith.constant 0 : index
    %c0_41 = arith.constant 0 : index
    %63 = vector.load %arg2[%c6, %c0_40, %c0_41] : memref<25x128x128xbf16, #tpu.memory_space<vmem>>, vector<1x128x128xbf16>
    %64 = vector.shape_cast %63 : vector<1x128x128xbf16> to vector<128x128xbf16>
    %cst_42 = arith.constant dense<0.000000e+00> : vector<8x128xf32>
    %65 = tpu.matmul %62, %64, %cst_42 {dimension_numbers = #tpu.dot_dimension_numbers<[1], [0], [0], [1], [0, 0, 1, 1], [], []>} : vector<8x128xbf16>, vector<128x128xbf16>, vector<8x128xf32> -> vector<8x128xf32>
    %c6_43 = arith.constant 6 : index
    %c0_44 = arith.constant 0 : index
    %c0_45 = arith.constant 0 : index
    %66 = vector.load %arg3[%c6_43, %c0_44, %c0_45] : memref<23x1x128xf32, #tpu.memory_space<vmem>>, vector<1x1x128xf32>
    %67 = vector.shape_cast %66 : vector<1x1x128xf32> to vector<1x128xf32>
    %68 = vector.broadcast %67 : vector<1x128xf32> to vector<8x128xf32>
    %69 = arith.addf %65, %68 : vector<8x128xf32>
    %70 = arith.truncf %69 : vector<8x128xf32> to vector<8x128xbf16>
    %71 = math.tanh %70 : vector<8x128xbf16>
    %c7 = arith.constant 7 : index
    %c0_46 = arith.constant 0 : index
    %c0_47 = arith.constant 0 : index
    %72 = vector.load %arg2[%c7, %c0_46, %c0_47] : memref<25x128x128xbf16, #tpu.memory_space<vmem>>, vector<1x128x128xbf16>
    %73 = vector.shape_cast %72 : vector<1x128x128xbf16> to vector<128x128xbf16>
    %cst_48 = arith.constant dense<0.000000e+00> : vector<8x128xf32>
    %74 = tpu.matmul %71, %73, %cst_48 {dimension_numbers = #tpu.dot_dimension_numbers<[1], [0], [0], [1], [0, 0, 1, 1], [], []>} : vector<8x128xbf16>, vector<128x128xbf16>, vector<8x128xf32> -> vector<8x128xf32>
    %c7_49 = arith.constant 7 : index
    %c0_50 = arith.constant 0 : index
    %c0_51 = arith.constant 0 : index
    %75 = vector.load %arg3[%c7_49, %c0_50, %c0_51] : memref<23x1x128xf32, #tpu.memory_space<vmem>>, vector<1x1x128xf32>
    %76 = vector.shape_cast %75 : vector<1x1x128xf32> to vector<1x128xf32>
    %77 = vector.broadcast %76 : vector<1x128xf32> to vector<8x128xf32>
    %78 = arith.addf %74, %77 : vector<8x128xf32>
    %79 = arith.extf %1 : vector<8x128xbf16> to vector<8x128xf32>
    %80 = arith.addf %78, %79 : vector<8x128xf32>
    %81 = arith.truncf %80 : vector<8x128xf32> to vector<8x128xbf16>
    %c8 = arith.constant 8 : index
    %c0_52 = arith.constant 0 : index
    %c0_53 = arith.constant 0 : index
    %82 = vector.load %arg2[%c8, %c0_52, %c0_53] : memref<25x128x128xbf16, #tpu.memory_space<vmem>>, vector<1x128x128xbf16>
    %83 = vector.shape_cast %82 : vector<1x128x128xbf16> to vector<128x128xbf16>
    %cst_54 = arith.constant dense<0.000000e+00> : vector<8x128xf32>
    %84 = tpu.matmul %81, %83, %cst_54 {dimension_numbers = #tpu.dot_dimension_numbers<[1], [0], [0], [1], [0, 0, 1, 1], [], []>} : vector<8x128xbf16>, vector<128x128xbf16>, vector<8x128xf32> -> vector<8x128xf32>
    %c8_55 = arith.constant 8 : index
    %c0_56 = arith.constant 0 : index
    %c0_57 = arith.constant 0 : index
    %85 = vector.load %arg3[%c8_55, %c0_56, %c0_57] : memref<23x1x128xf32, #tpu.memory_space<vmem>>, vector<1x1x128xf32>
    %86 = vector.shape_cast %85 : vector<1x1x128xf32> to vector<1x128xf32>
    %87 = vector.broadcast %86 : vector<1x128xf32> to vector<8x128xf32>
    %88 = arith.addf %84, %87 : vector<8x128xf32>
    %cst_58 = arith.constant 0.000000e+00 : f32
    %89 = vector.broadcast %cst_58 : f32 to vector<8x128xf32>
    %90 = arith.maximumf %88, %89 : vector<8x128xf32>
    %91 = arith.truncf %90 : vector<8x128xf32> to vector<8x128xbf16>
    %c9 = arith.constant 9 : index
    %c0_59 = arith.constant 0 : index
    %c0_60 = arith.constant 0 : index
    %92 = vector.load %arg2[%c9, %c0_59, %c0_60] : memref<25x128x128xbf16, #tpu.memory_space<vmem>>, vector<1x128x128xbf16>
    %93 = vector.shape_cast %92 : vector<1x128x128xbf16> to vector<128x128xbf16>
    %cst_61 = arith.constant dense<0.000000e+00> : vector<8x128xf32>
    %94 = tpu.matmul %91, %93, %cst_61 {dimension_numbers = #tpu.dot_dimension_numbers<[1], [0], [0], [1], [0, 0, 1, 1], [], []>} : vector<8x128xbf16>, vector<128x128xbf16>, vector<8x128xf32> -> vector<8x128xf32>
    %c9_62 = arith.constant 9 : index
    %c0_63 = arith.constant 0 : index
    %c0_64 = arith.constant 0 : index
    %95 = vector.load %arg3[%c9_62, %c0_63, %c0_64] : memref<23x1x128xf32, #tpu.memory_space<vmem>>, vector<1x1x128xf32>
    %96 = vector.shape_cast %95 : vector<1x1x128xf32> to vector<1x128xf32>
    %97 = vector.broadcast %96 : vector<1x128xf32> to vector<8x128xf32>
    %98 = arith.addf %94, %97 : vector<8x128xf32>
    %cst_65 = arith.constant 0.000000e+00 : f32
    %99 = vector.broadcast %cst_65 : f32 to vector<8x128xf32>
    %100 = arith.maximumf %98, %99 : vector<8x128xf32>
    %101 = arith.truncf %100 : vector<8x128xf32> to vector<8x128xbf16>
    %c10 = arith.constant 10 : index
    %c0_66 = arith.constant 0 : index
    %c0_67 = arith.constant 0 : index
    %102 = vector.load %arg2[%c10, %c0_66, %c0_67] : memref<25x128x128xbf16, #tpu.memory_space<vmem>>, vector<1x128x128xbf16>
    %103 = vector.shape_cast %102 : vector<1x128x128xbf16> to vector<128x128xbf16>
    %cst_68 = arith.constant dense<0.000000e+00> : vector<8x128xf32>
    %104 = tpu.matmul %101, %103, %cst_68 {dimension_numbers = #tpu.dot_dimension_numbers<[1], [0], [0], [1], [0, 0, 1, 1], [], []>} : vector<8x128xbf16>, vector<128x128xbf16>, vector<8x128xf32> -> vector<8x128xf32>
    %c10_69 = arith.constant 10 : index
    %c0_70 = arith.constant 0 : index
    %c0_71 = arith.constant 0 : index
    %105 = vector.load %arg3[%c10_69, %c0_70, %c0_71] : memref<23x1x128xf32, #tpu.memory_space<vmem>>, vector<1x1x128xf32>
    %106 = vector.shape_cast %105 : vector<1x1x128xf32> to vector<1x128xf32>
    %107 = vector.broadcast %106 : vector<1x128xf32> to vector<8x128xf32>
    %108 = arith.addf %104, %107 : vector<8x128xf32>
    %cst_72 = arith.constant 0.000000e+00 : f32
    %109 = vector.broadcast %cst_72 : f32 to vector<8x128xf32>
    %110 = arith.maximumf %108, %109 : vector<8x128xf32>
    %111 = arith.truncf %110 : vector<8x128xf32> to vector<8x128xbf16>
    %c11 = arith.constant 11 : index
    %c0_73 = arith.constant 0 : index
    %c0_74 = arith.constant 0 : index
    %112 = vector.load %arg2[%c11, %c0_73, %c0_74] : memref<25x128x128xbf16, #tpu.memory_space<vmem>>, vector<1x128x128xbf16>
    %113 = vector.shape_cast %112 : vector<1x128x128xbf16> to vector<128x128xbf16>
    %cst_75 = arith.constant dense<0.000000e+00> : vector<8x128xf32>
    %114 = tpu.matmul %111, %113, %cst_75 {dimension_numbers = #tpu.dot_dimension_numbers<[1], [0], [0], [1], [0, 0, 1, 1], [], []>} : vector<8x128xbf16>, vector<128x128xbf16>, vector<8x128xf32> -> vector<8x128xf32>
    %c11_76 = arith.constant 11 : index
    %c0_77 = arith.constant 0 : index
    %c0_78 = arith.constant 0 : index
    %115 = vector.load %arg3[%c11_76, %c0_77, %c0_78] : memref<23x1x128xf32, #tpu.memory_space<vmem>>, vector<1x1x128xf32>
    %116 = vector.shape_cast %115 : vector<1x1x128xf32> to vector<1x128xf32>
    %117 = vector.broadcast %116 : vector<1x128xf32> to vector<8x128xf32>
    %118 = arith.addf %114, %117 : vector<8x128xf32>
    %119 = arith.truncf %118 : vector<8x128xf32> to vector<8x128xbf16>
    %120 = math.tanh %119 : vector<8x128xbf16>
    %c12 = arith.constant 12 : index
    %c0_79 = arith.constant 0 : index
    %c0_80 = arith.constant 0 : index
    %121 = vector.load %arg2[%c12, %c0_79, %c0_80] : memref<25x128x128xbf16, #tpu.memory_space<vmem>>, vector<1x128x128xbf16>
    %122 = vector.shape_cast %121 : vector<1x128x128xbf16> to vector<128x128xbf16>
    %cst_81 = arith.constant dense<0.000000e+00> : vector<8x128xf32>
    %123 = tpu.matmul %120, %122, %cst_81 {dimension_numbers = #tpu.dot_dimension_numbers<[1], [0], [0], [1], [0, 0, 1, 1], [], []>} : vector<8x128xbf16>, vector<128x128xbf16>, vector<8x128xf32> -> vector<8x128xf32>
    %c12_82 = arith.constant 12 : index
    %c0_83 = arith.constant 0 : index
    %c0_84 = arith.constant 0 : index
    %124 = vector.load %arg3[%c12_82, %c0_83, %c0_84] : memref<23x1x128xf32, #tpu.memory_space<vmem>>, vector<1x1x128xf32>
    %125 = vector.shape_cast %124 : vector<1x1x128xf32> to vector<1x128xf32>
    %126 = vector.broadcast %125 : vector<1x128xf32> to vector<8x128xf32>
    %127 = arith.addf %123, %126 : vector<8x128xf32>
    %128 = arith.truncf %127 : vector<8x128xf32> to vector<8x128xbf16>
    %129 = math.tanh %128 : vector<8x128xbf16>
    %c13 = arith.constant 13 : index
    %c0_85 = arith.constant 0 : index
    %c0_86 = arith.constant 0 : index
    %130 = vector.load %arg2[%c13, %c0_85, %c0_86] : memref<25x128x128xbf16, #tpu.memory_space<vmem>>, vector<1x128x128xbf16>
    %131 = vector.shape_cast %130 : vector<1x128x128xbf16> to vector<128x128xbf16>
    %cst_87 = arith.constant dense<0.000000e+00> : vector<8x128xf32>
    %132 = tpu.matmul %129, %131, %cst_87 {dimension_numbers = #tpu.dot_dimension_numbers<[1], [0], [0], [1], [0, 0, 1, 1], [], []>} : vector<8x128xbf16>, vector<128x128xbf16>, vector<8x128xf32> -> vector<8x128xf32>
    %c13_88 = arith.constant 13 : index
    %c0_89 = arith.constant 0 : index
    %c0_90 = arith.constant 0 : index
    %133 = vector.load %arg3[%c13_88, %c0_89, %c0_90] : memref<23x1x128xf32, #tpu.memory_space<vmem>>, vector<1x1x128xf32>
    %134 = vector.shape_cast %133 : vector<1x1x128xf32> to vector<1x128xf32>
    %135 = vector.broadcast %134 : vector<1x128xf32> to vector<8x128xf32>
    %136 = arith.addf %132, %135 : vector<8x128xf32>
    %137 = tpu.iota {dimensions = array<i32: 1>} : vector<8x128xi32>
    %138 = arith.truncf %136 : vector<8x128xf32> to vector<8x128xbf16>
    %c80_i32_91 = arith.constant 80 : i32
    %139 = vector.broadcast %c80_i32_91 : i32 to vector<8x128xi32>
    %140 = arith.cmpi slt, %137, %139 : vector<8x128xi32>
    %141 = math.tanh %138 : vector<8x128xbf16>
    %142 = arith.select %140, %141, %138 : vector<8x128xi1>, vector<8x128xbf16>
    %c14 = arith.constant 14 : index
    %c0_92 = arith.constant 0 : index
    %c0_93 = arith.constant 0 : index
    %143 = vector.load %arg2[%c14, %c0_92, %c0_93] : memref<25x128x128xbf16, #tpu.memory_space<vmem>>, vector<1x128x128xbf16>
    %144 = vector.shape_cast %143 : vector<1x128x128xbf16> to vector<128x128xbf16>
    %cst_94 = arith.constant dense<0.000000e+00> : vector<8x128xf32>
    %145 = tpu.matmul %142, %144, %cst_94 {dimension_numbers = #tpu.dot_dimension_numbers<[1], [0], [0], [1], [0, 0, 1, 1], [], []>} : vector<8x128xbf16>, vector<128x128xbf16>, vector<8x128xf32> -> vector<8x128xf32>
    %c14_95 = arith.constant 14 : index
    %c0_96 = arith.constant 0 : index
    %c0_97 = arith.constant 0 : index
    %146 = vector.load %arg3[%c14_95, %c0_96, %c0_97] : memref<23x1x128xf32, #tpu.memory_space<vmem>>, vector<1x1x128xf32>
    %147 = vector.shape_cast %146 : vector<1x1x128xf32> to vector<1x128xf32>
    %148 = vector.broadcast %147 : vector<1x128xf32> to vector<8x128xf32>
    %149 = arith.addf %145, %148 : vector<8x128xf32>
    %150 = arith.truncf %149 : vector<8x128xf32> to vector<8x128xbf16>
    %151 = math.tanh %150 : vector<8x128xbf16>
    %c15 = arith.constant 15 : index
    %c0_98 = arith.constant 0 : index
    %c0_99 = arith.constant 0 : index
    %152 = vector.load %arg2[%c15, %c0_98, %c0_99] : memref<25x128x128xbf16, #tpu.memory_space<vmem>>, vector<1x128x128xbf16>
    %153 = vector.shape_cast %152 : vector<1x128x128xbf16> to vector<128x128xbf16>
    %cst_100 = arith.constant dense<0.000000e+00> : vector<8x128xf32>
    %154 = tpu.matmul %151, %153, %cst_100 {dimension_numbers = #tpu.dot_dimension_numbers<[1], [0], [0], [1], [0, 0, 1, 1], [], []>} : vector<8x128xbf16>, vector<128x128xbf16>, vector<8x128xf32> -> vector<8x128xf32>
    %c15_101 = arith.constant 15 : index
    %c0_102 = arith.constant 0 : index
    %c0_103 = arith.constant 0 : index
    %155 = vector.load %arg3[%c15_101, %c0_102, %c0_103] : memref<23x1x128xf32, #tpu.memory_space<vmem>>, vector<1x1x128xf32>
    %156 = vector.shape_cast %155 : vector<1x1x128xf32> to vector<1x128xf32>
    %157 = vector.broadcast %156 : vector<1x128xf32> to vector<8x128xf32>
    %158 = arith.addf %154, %157 : vector<8x128xf32>
    %159 = arith.extf %81 : vector<8x128xbf16> to vector<8x128xf32>
    %160 = arith.addf %158, %159 : vector<8x128xf32>
    %161 = arith.truncf %0 : vector<8x128xf32> to vector<8x128xbf16>
    %c16 = arith.constant 16 : index
    %c0_104 = arith.constant 0 : index
    %c0_105 = arith.constant 0 : index
    %162 = vector.load %arg2[%c16, %c0_104, %c0_105] : memref<25x128x128xbf16, #tpu.memory_space<vmem>>, vector<1x128x128xbf16>
    %163 = vector.shape_cast %162 : vector<1x128x128xbf16> to vector<128x128xbf16>
    %cst_106 = arith.constant dense<0.000000e+00> : vector<8x128xf32>
    %164 = tpu.matmul %161, %163, %cst_106 {dimension_numbers = #tpu.dot_dimension_numbers<[1], [0], [0], [1], [0, 0, 1, 1], [], []>} : vector<8x128xbf16>, vector<128x128xbf16>, vector<8x128xf32> -> vector<8x128xf32>
    %c16_107 = arith.constant 16 : index
    %c0_108 = arith.constant 0 : index
    %c0_109 = arith.constant 0 : index
    %165 = vector.load %arg3[%c16_107, %c0_108, %c0_109] : memref<23x1x128xf32, #tpu.memory_space<vmem>>, vector<1x1x128xf32>
    %166 = vector.shape_cast %165 : vector<1x1x128xf32> to vector<1x128xf32>
    %167 = vector.broadcast %166 : vector<1x128xf32> to vector<8x128xf32>
    %168 = arith.addf %164, %167 : vector<8x128xf32>
    %169 = arith.truncf %168 : vector<8x128xf32> to vector<8x128xbf16>
    %170 = math.tanh %169 : vector<8x128xbf16>
    %c17 = arith.constant 17 : index
    %c0_110 = arith.constant 0 : index
    %c0_111 = arith.constant 0 : index
    %171 = vector.load %arg2[%c17, %c0_110, %c0_111] : memref<25x128x128xbf16, #tpu.memory_space<vmem>>, vector<1x128x128xbf16>
    %172 = vector.shape_cast %171 : vector<1x128x128xbf16> to vector<128x128xbf16>
    %cst_112 = arith.constant dense<0.000000e+00> : vector<8x128xf32>
    %173 = tpu.matmul %161, %172, %cst_112 {dimension_numbers = #tpu.dot_dimension_numbers<[1], [0], [0], [1], [0, 0, 1, 1], [], []>} : vector<8x128xbf16>, vector<128x128xbf16>, vector<8x128xf32> -> vector<8x128xf32>
    %c16_113 = arith.constant 16 : index
    %c0_114 = arith.constant 0 : index
    %c0_115 = arith.constant 0 : index
    %174 = vector.load %arg3[%c16_113, %c0_114, %c0_115] : memref<23x1x128xf32, #tpu.memory_space<vmem>>, vector<1x1x128xf32>
    %175 = vector.shape_cast %174 : vector<1x1x128xf32> to vector<1x128xf32>
    %176 = vector.broadcast %175 : vector<1x128xf32> to vector<8x128xf32>
    %177 = arith.addf %173, %176 : vector<8x128xf32>
    %178 = arith.truncf %177 : vector<8x128xf32> to vector<8x128xbf16>
    %179 = math.tanh %178 : vector<8x128xbf16>
    %c18 = arith.constant 18 : index
    %c0_116 = arith.constant 0 : index
    %c0_117 = arith.constant 0 : index
    %180 = vector.load %arg2[%c18, %c0_116, %c0_117] : memref<25x128x128xbf16, #tpu.memory_space<vmem>>, vector<1x128x128xbf16>
    %181 = vector.shape_cast %180 : vector<1x128x128xbf16> to vector<128x128xbf16>
    %cst_118 = arith.constant dense<0.000000e+00> : vector<8x128xf32>
    %182 = tpu.matmul %170, %181, %cst_118 {dimension_numbers = #tpu.dot_dimension_numbers<[1], [0], [0], [1], [0, 0, 1, 1], [], []>} : vector<8x128xbf16>, vector<128x128xbf16>, vector<8x128xf32> -> vector<8x128xf32>
    %c19 = arith.constant 19 : index
    %c0_119 = arith.constant 0 : index
    %c0_120 = arith.constant 0 : index
    %183 = vector.load %arg2[%c19, %c0_119, %c0_120] : memref<25x128x128xbf16, #tpu.memory_space<vmem>>, vector<1x128x128xbf16>
    %184 = vector.shape_cast %183 : vector<1x128x128xbf16> to vector<128x128xbf16>
    %cst_121 = arith.constant dense<0.000000e+00> : vector<8x128xf32>
    %185 = tpu.matmul %179, %184, %cst_121 {dimension_numbers = #tpu.dot_dimension_numbers<[1], [0], [0], [1], [0, 0, 1, 1], [], []>} : vector<8x128xbf16>, vector<128x128xbf16>, vector<8x128xf32> -> vector<8x128xf32>
    %186 = arith.addf %182, %185 : vector<8x128xf32>
    %c17_122 = arith.constant 17 : index
    %c0_123 = arith.constant 0 : index
    %c0_124 = arith.constant 0 : index
    %187 = vector.load %arg3[%c17_122, %c0_123, %c0_124] : memref<23x1x128xf32, #tpu.memory_space<vmem>>, vector<1x1x128xf32>
    %188 = vector.shape_cast %187 : vector<1x1x128xf32> to vector<1x128xf32>
    %189 = vector.broadcast %188 : vector<1x128xf32> to vector<8x128xf32>
    %190 = arith.addf %186, %189 : vector<8x128xf32>
    %191 = arith.truncf %190 : vector<8x128xf32> to vector<8x128xbf16>
    %192 = math.tanh %191 : vector<8x128xbf16>
    %c20 = arith.constant 20 : index
    %c0_125 = arith.constant 0 : index
    %c0_126 = arith.constant 0 : index
    %193 = vector.load %arg2[%c20, %c0_125, %c0_126] : memref<25x128x128xbf16, #tpu.memory_space<vmem>>, vector<1x128x128xbf16>
    %194 = vector.shape_cast %193 : vector<1x128x128xbf16> to vector<128x128xbf16>
    %cst_127 = arith.constant dense<0.000000e+00> : vector<8x128xf32>
    %195 = tpu.matmul %192, %194, %cst_127 {dimension_numbers = #tpu.dot_dimension_numbers<[1], [0], [0], [1], [0, 0, 1, 1], [], []>} : vector<8x128xbf16>, vector<128x128xbf16>, vector<8x128xf32> -> vector<8x128xf32>
    %c18_128 = arith.constant 18 : index
    %c0_129 = arith.constant 0 : index
    %c0_130 = arith.constant 0 : index
    %196 = vector.load %arg3[%c18_128, %c0_129, %c0_130] : memref<23x1x128xf32, #tpu.memory_space<vmem>>, vector<1x1x128xf32>
    %197 = vector.shape_cast %196 : vector<1x1x128xf32> to vector<1x128xf32>
    %198 = vector.broadcast %197 : vector<1x128xf32> to vector<8x128xf32>
    %199 = arith.addf %195, %198 : vector<8x128xf32>
    %200 = arith.addf %160, %199 : vector<8x128xf32>
    %201 = arith.truncf %200 : vector<8x128xf32> to vector<8x128xbf16>
    %c21 = arith.constant 21 : index
    %c0_131 = arith.constant 0 : index
    %c0_132 = arith.constant 0 : index
    %202 = vector.load %arg2[%c21, %c0_131, %c0_132] : memref<25x128x128xbf16, #tpu.memory_space<vmem>>, vector<1x128x128xbf16>
    %203 = vector.shape_cast %202 : vector<1x128x128xbf16> to vector<128x128xbf16>
    %cst_133 = arith.constant dense<0.000000e+00> : vector<8x128xf32>
    %204 = tpu.matmul %201, %203, %cst_133 {dimension_numbers = #tpu.dot_dimension_numbers<[1], [0], [0], [1], [0, 0, 1, 1], [], []>} : vector<8x128xbf16>, vector<128x128xbf16>, vector<8x128xf32> -> vector<8x128xf32>
    %c19_134 = arith.constant 19 : index
    %c0_135 = arith.constant 0 : index
    %c0_136 = arith.constant 0 : index
    %205 = vector.load %arg3[%c19_134, %c0_135, %c0_136] : memref<23x1x128xf32, #tpu.memory_space<vmem>>, vector<1x1x128xf32>
    %206 = vector.shape_cast %205 : vector<1x1x128xf32> to vector<1x128xf32>
    %207 = vector.broadcast %206 : vector<1x128xf32> to vector<8x128xf32>
    %208 = arith.addf %204, %207 : vector<8x128xf32>
    %209 = arith.truncf %208 : vector<8x128xf32> to vector<8x128xbf16>
    %210 = math.tanh %209 : vector<8x128xbf16>
    %c22 = arith.constant 22 : index
    %c0_137 = arith.constant 0 : index
    %c0_138 = arith.constant 0 : index
    %211 = vector.load %arg2[%c22, %c0_137, %c0_138] : memref<25x128x128xbf16, #tpu.memory_space<vmem>>, vector<1x128x128xbf16>
    %212 = vector.shape_cast %211 : vector<1x128x128xbf16> to vector<128x128xbf16>
    %cst_139 = arith.constant dense<0.000000e+00> : vector<8x128xf32>
    %213 = tpu.matmul %210, %212, %cst_139 {dimension_numbers = #tpu.dot_dimension_numbers<[1], [0], [0], [1], [0, 0, 1, 1], [], []>} : vector<8x128xbf16>, vector<128x128xbf16>, vector<8x128xf32> -> vector<8x128xf32>
    %c20_140 = arith.constant 20 : index
    %c0_141 = arith.constant 0 : index
    %c0_142 = arith.constant 0 : index
    %214 = vector.load %arg3[%c20_140, %c0_141, %c0_142] : memref<23x1x128xf32, #tpu.memory_space<vmem>>, vector<1x1x128xf32>
    %215 = vector.shape_cast %214 : vector<1x1x128xf32> to vector<1x128xf32>
    %216 = vector.broadcast %215 : vector<1x128xf32> to vector<8x128xf32>
    %217 = arith.addf %213, %216 : vector<8x128xf32>
    %218 = arith.truncf %217 : vector<8x128xf32> to vector<8x128xbf16>
    %219 = math.tanh %218 : vector<8x128xbf16>
    %c23 = arith.constant 23 : index
    %c0_143 = arith.constant 0 : index
    %c0_144 = arith.constant 0 : index
    %220 = vector.load %arg2[%c23, %c0_143, %c0_144] : memref<25x128x128xbf16, #tpu.memory_space<vmem>>, vector<1x128x128xbf16>
    %221 = vector.shape_cast %220 : vector<1x128x128xbf16> to vector<128x128xbf16>
    %cst_145 = arith.constant dense<0.000000e+00> : vector<8x128xf32>
    %222 = tpu.matmul %219, %221, %cst_145 {dimension_numbers = #tpu.dot_dimension_numbers<[1], [0], [0], [1], [0, 0, 1, 1], [], []>} : vector<8x128xbf16>, vector<128x128xbf16>, vector<8x128xf32> -> vector<8x128xf32>
    %c21_146 = arith.constant 21 : index
    %c0_147 = arith.constant 0 : index
    %c0_148 = arith.constant 0 : index
    %223 = vector.load %arg3[%c21_146, %c0_147, %c0_148] : memref<23x1x128xf32, #tpu.memory_space<vmem>>, vector<1x1x128xf32>
    %224 = vector.shape_cast %223 : vector<1x1x128xf32> to vector<1x128xf32>
    %225 = vector.broadcast %224 : vector<1x128xf32> to vector<8x128xf32>
    %226 = arith.addf %222, %225 : vector<8x128xf32>
    %227 = arith.truncf %226 : vector<8x128xf32> to vector<8x128xbf16>
    %228 = math.tanh %227 : vector<8x128xbf16>
    %c24 = arith.constant 24 : index
    %c0_149 = arith.constant 0 : index
    %c0_150 = arith.constant 0 : index
    %229 = vector.load %arg2[%c24, %c0_149, %c0_150] : memref<25x128x128xbf16, #tpu.memory_space<vmem>>, vector<1x128x128xbf16>
    %230 = vector.shape_cast %229 : vector<1x128x128xbf16> to vector<128x128xbf16>
    %cst_151 = arith.constant dense<0.000000e+00> : vector<8x128xf32>
    %231 = tpu.matmul %228, %230, %cst_151 {dimension_numbers = #tpu.dot_dimension_numbers<[1], [0], [0], [1], [0, 0, 1, 1], [], []>} : vector<8x128xbf16>, vector<128x128xbf16>, vector<8x128xf32> -> vector<8x128xf32>
    %cst_152 = arith.constant 1.000000e+00 : f32
    %232 = vector.broadcast %cst_152 : f32 to vector<8x128xf32>
    %233 = arith.addf %232, %231 : vector<8x128xf32>
    %c22_153 = arith.constant 22 : index
    %c0_154 = arith.constant 0 : index
    %c0_155 = arith.constant 0 : index
    %234 = vector.load %arg3[%c22_153, %c0_154, %c0_155] : memref<23x1x128xf32, #tpu.memory_space<vmem>>, vector<1x1x128xf32>
    %235 = vector.shape_cast %234 : vector<1x1x128xf32> to vector<1x128xf32>
    %236 = vector.broadcast %235 : vector<1x128xf32> to vector<8x128xf32>
    %237 = arith.addf %233, %236 : vector<8x128xf32>
    %c0_156 = arith.constant 0 : index
    %c0_157 = arith.constant 0 : index
    %238 = vector.load %arg4[%c0_156, %c0_157] : memref<8x128xf32, #tpu.memory_space<vmem>>, vector<8x128xf32>
    tpu.vector_store %arg4[%c0_156, %c0_157], %237 {strides = array<i32>} : memref<8x128xf32, #tpu.memory_space<vmem>>, vector<8x128xf32>,
    return
  }
  func.func @transform_0(%arg0: i32) -> (i32, i32) {
    %c0_i32 = arith.constant 0 : i32
    %c0_i32_0 = arith.constant 0 : i32
    return %arg0, %c0_i32 : i32, i32
  }
  func.func @transform_1(%arg0: i32) -> (i32, i32, i32) {
    %c0_i32 = arith.constant 0 : i32
    %c0_i32_0 = arith.constant 0 : i32
    %c0_i32_1 = arith.constant 0 : i32
    %c0_i32_2 = arith.constant 0 : i32
    return %c0_i32, %c0_i32_0, %c0_i32_1 : i32, i32, i32
  }
  func.func @transform_2(%arg0: i32) -> (i32, i32, i32) {
    %c0_i32 = arith.constant 0 : i32
    %c0_i32_0 = arith.constant 0 : i32
    %c0_i32_1 = arith.constant 0 : i32
    %c0_i32_2 = arith.constant 0 : i32
    return %c0_i32, %c0_i32_0, %c0_i32_1 : i32, i32, i32
  }
  func.func @transform_3(%arg0: i32) -> (i32, i32) {
    %c0_i32 = arith.constant 0 : i32
    %c0_i32_0 = arith.constant 0 : i32
    return %arg0, %c0_i32 : i32, i32
  }
}

</mosaic_0001>

<llo_original>
// kernel: _lambda_.1
$region0: #{_lambda_.1}
  #allocation0 [shape = 'u32[]', space=smem, size = 0x4, offset = 0x4, fixed_abs, tag = 'smem constant byte address 0x4 - core index']
  #allocation1 [shape = 'u32[144,128]{1,0:T(1,128)}', space=vmem, size = 0x12000, scoped, tag = 'internal scratch']
  %s0 = inlined_call_operand.vmem [shape: f32[8,128], index: 0, kind: input, shape index: {}]
  %s1 = inlined_call_operand.hbm [shape: bf16[25,128,128], index: 1, kind: input, shape index: {}]
  %s2 = inlined_call_operand.vmem [shape: f32[23,1,128], index: 2, kind: input, shape index: {}]
  %s3 = inlined_call_operand.vmem [shape: f32[8,128], index: 3, kind: output, shape index: {}]
  %s4 = sld [smem:[#allocation0]]
  $region26: #{_lambda_.1} parent=0
    _
  %s6 = ssub.s32 1, %s4
  %s7 = scalar_select 0, %s6, %s4
  $region1: #{_lambda_.1} parent=0
    #allocation2 [shape = 'u8[819200]{0}', space=vmem, size = 0xc8000, scoped, tag = 'input window, operand 1, single buffered']
    #allocation3 [shape = 's32[1]{0}', space=sflag, size = 0x4, scoped, tag = 'scoped memory for _lambda_.1']
    %8 = vsyncpa [#allocation3], 0
    // Predicated region
    $region2: #{_lambda_.1} parent=1 // pred_check
      _
    $region3: #{_lambda_.1} parent=1 // pred_check_branch
      %10 = sbr.rel (0) target = $region5
    $region4: #{_lambda_.1} parent=1 // pred_region
      _
    $region5: #{_lambda_.1} parent=1 // pred_fallthru
      _
    // Predicated region
    $region6: #{_lambda_.1} parent=1 // pred_check
      _
    $region7: #{_lambda_.1} parent=1 // pred_check_branch
      %12 = sbr.rel (0) target = $region9
    $region8: #{_lambda_.1} parent=1 // pred_region
      %s14 = ssub.s32 25600, 25600
      %15 = vsyncadd [#allocation3], %s14
      %s16 = sshll.u32 [#allocation2], 4
      %s17 = int_to_ptr.vmem [resolvable:$true] %s16
      %22 = dma.hbm_to_vmem [thread:$0]  %s1, 25600, %s17, [#allocation3], 64, 64, 4
    $region9: #{_lambda_.1} parent=1 // pred_fallthru
      _
    // Predicated region
    $region10: #{_lambda_.1} parent=1 // pred_check
      _
    $region11: #{_lambda_.1} parent=1 // pred_check_branch
      %24 = sbr.rel (0) target = $region13
    $region12: #{_lambda_.1} parent=1 // pred_region
      _
    $region13: #{_lambda_.1} parent=1 // pred_fallthru
      _
    // Predicated region
    $region14: #{_lambda_.1} parent=1 // pred_check
      _
    $region15: #{_lambda_.1} parent=1 // pred_check_branch
      %26 = sbr.rel (0) target = $region17
    $region16: #{_lambda_.1} parent=1 // pred_region
      %27 = dma.done [#allocation3], 25600
    $region17: #{_lambda_.1} parent=1 // pred_fallthru
      _
    %v29 = vld [vmem:[%s0] sm:$0xff]
    %v30 = vpack.c.bf16 %v29, %v29
    %v31 = vld [vmem:[#allocation2] sm:$0xf]
    %v32 = vld [vmem:[#allocation2 + $0x4] sm:$0xf]
    %v33 = vld [vmem:[#allocation2 + $0x8] sm:$0xf]
    %v34 = vld [vmem:[#allocation2 + $0xc] sm:$0xf]
    %v35 = vld [vmem:[#allocation2 + $0x10] sm:$0xf]
    %v36 = vld [vmem:[#allocation2 + $0x14] sm:$0xf]
    %v37 = vld [vmem:[#allocation2 + $0x18] sm:$0xf]
    %v38 = vld [vmem:[#allocation2 + $0x1c] sm:$0xf]
    %v39 = vld [vmem:[#allocation2 + $0x20] sm:$0xf]
    %v40 = vld [vmem:[#allocation2 + $0x24] sm:$0xf]
    %v41 = vld [vmem:[#allocation2 + $0x28] sm:$0xf]
    %v42 = vld [vmem:[#allocation2 + $0x2c] sm:$0xf]
    %v43 = vld [vmem:[#allocation2 + $0x30] sm:$0xf]
    %v44 = vld [vmem:[#allocation2 + $0x34] sm:$0xf]
    %v45 = vld [vmem:[#allocation2 + $0x38] sm:$0xf]
    %v46 = vld [vmem:[#allocation2 + $0x3c] sm:$0xf]
    %v47 = vld [vmem:[%s2] sm:$0x1]
    %v49 = vlaneseq
    %v50 = vshrl.u32 %v49, 7
    %v51 = vsub.s32 0, %v50
    %v52 = vrot.slane %v47, %v51
    %v70 = vunpack.c.l.b16 %v31
    %v71 = vunpack.c.l.b16 %v32
    %v72 = vunpack.c.l.b16 %v33
    %v73 = vunpack.c.l.b16 %v34
    %v74 = vunpack.c.l.b16 %v35
    %v75 = vunpack.c.l.b16 %v36
    %v76 = vunpack.c.l.b16 %v37
    %v77 = vunpack.c.l.b16 %v38
    %v78 = vunpack.c.l.b16 %v39
    %v79 = vunpack.c.l.b16 %v40
    %v80 = vunpack.c.l.b16 %v41
    %v81 = vunpack.c.l.b16 %v42
    %v82 = vunpack.c.l.b16 %v43
    %v83 = vunpack.c.l.b16 %v44
    %v84 = vunpack.c.l.b16 %v45
    %v85 = vunpack.c.l.b16 %v46
    %v86 = vpack.c.b16 %v71, %v70
    %v87 = vpack.c.b16 %v73, %v72
    %v88 = vpack.c.b16 %v75, %v74
    %v89 = vpack.c.b16 %v77, %v76
    %v90 = vpack.c.b16 %v79, %v78
    %v91 = vpack.c.b16 %v81, %v80
    %v92 = vpack.c.b16 %v83, %v82
    %v93 = vpack.c.b16 %v85, %v84
    %102 = vmatprep.subr.bf16.mxu0 0
    %103 = vmatpush1.bf16.msra.mxu0 %v86
    %104 = vmatprep.subr.bf16.mxu0 0
    %105 = vmatpush1.bf16.msra.mxu0 %v87
    %106 = vmatprep.subr.bf16.mxu0 0
    %107 = vmatpush1.bf16.msra.mxu0 %v88
    %108 = vmatprep.subr.bf16.mxu0 0
    %109 = vmatpush1.bf16.msra.mxu0 %v89
    %110 = vmatprep.subr.bf16.mxu0 0
    %111 = vmatpush1.bf16.msra.mxu0 %v90
    %112 = vmatprep.subr.bf16.mxu0 0
    %113 = vmatpush1.bf16.msra.mxu0 %v91
    %114 = vmatprep.subr.bf16.mxu0 0
    %115 = vmatpush1.bf16.msra.mxu0 %v92
    %116 = vmatprep.subr.bf16.mxu0 0
    %117 = vmatpush1.bf16.msra.mxu0 %v93
    %118 = vmatprep.subr.bf16.mxu0 0
    %119 = vmatpush1.bf16.msra.mxu0 0
    %120 = vmatprep.subr.bf16.mxu0 0
    %121 = vmatpush1.bf16.msra.mxu0 0
    %122 = vmatprep.subr.bf16.mxu0 0
    %123 = vmatpush1.bf16.msra.mxu0 0
    %124 = vmatprep.subr.bf16.mxu0 0
    %125 = vmatpush1.bf16.msra.mxu0 0
    %126 = vmatprep.subr.bf16.mxu0 0
    %127 = vmatpush1.bf16.msra.mxu0 0
    %128 = vmatprep.subr.bf16.mxu0 0
    %129 = vmatpush1.bf16.msra.mxu0 0
    %130 = vmatprep.subr.bf16.mxu0 0
    %131 = vmatpush1.bf16.msra.mxu0 0
    %132 = vmatprep.subr.bf16.mxu0 0
    %133 = vmatpush1.bf16.msra.mxu0 0
    %134 = vmatprep.mubr.bf16.mxu0 0
    %135 = vmatmul.mubr.bf16.gmra.mrb[0].mxu0 %v30
    %v136 = vpop.f32.mrb[0].mxu0
    %v137 = vadd.f32 %v52, %v136
    %v138 = vpop.f32.mrb[0].mxu0
    %v139 = vpop.f32.mrb[0].mxu0
    %v140 = vpop.f32.mrb[0].mxu0
    %141 = vdwg.mxu0
    %v142 = vmax.f32 %v137, 0.0
    %v143 = vpack.c.bf16 %v142, %v142
    %s144 = scalar_lea.vmem [#allocation2], 64
    %v145 = vld [vmem:[%s144] sm:$0xf]
    %v146 = vld [vmem:[%s144 + $0x4] sm:$0xf]
    %v147 = vld [vmem:[%s144 + $0x8] sm:$0xf]
    %v148 = vld [vmem:[%s144 + $0xc] sm:$0xf]
    %v149 = vld [vmem:[%s144 + $0x10] sm:$0xf]
    %v150 = vld [vmem:[%s144 + $0x14] sm:$0xf]
    %v151 = vld [vmem:[%s144 + $0x18] sm:$0xf]
    %v152 = vld [vmem:[%s144 + $0x1c] sm:$0xf]
    %v153 = vld [vmem:[%s144 + $0x20] sm:$0xf]
    %v154 = vld [vmem:[%s144 + $0x24] sm:$0xf]
    %v155 = vld [vmem:[%s144 + $0x28] sm:$0xf]
    %v156 = vld [vmem:[%s144 + $0x2c] sm:$0xf]
    %v157 = vld [vmem:[%s144 + $0x30] sm:$0xf]
    %v158 = vld [vmem:[%s144 + $0x34] sm:$0xf]
    %v159 = vld [vmem:[%s144 + $0x38] sm:$0xf]
    %v160 = vld [vmem:[%s144 + $0x3c] sm:$0xf]
    %s161 = scalar_lea.vmem %s2, 1
    %v162 = vld [vmem:[%s161] sm:$0x1]
    %v164 = vlaneseq
    %v165 = vshrl.u32 %v164, 7
    %v166 = vsub.s32 0, %v165
    %v167 = vrot.slane %v162, %v166
    %v185 = vunpack.c.l.b16 %v145
    %v186 = vunpack.c.l.b16 %v146
    %v187 = vunpack.c.l.b16 %v147
    %v188 = vunpack.c.l.b16 %v148
    %v189 = vunpack.c.l.b16 %v149
    %v190 = vunpack.c.l.b16 %v150
    %v191 = vunpack.c.l.b16 %v151
    %v192 = vunpack.c.l.b16 %v152
    %v193 = vunpack.c.l.b16 %v153
    %v194 = vunpack.c.l.b16 %v154
    %v195 = vunpack.c.l.b16 %v155
    %v196 = vunpack.c.l.b16 %v156
    %v197 = vunpack.c.l.b16 %v157
    %v198 = vunpack.c.l.b16 %v158
    %v199 = vunpack.c.l.b16 %v159
    %v200 = vunpack.c.l.b16 %v160
    %v201 = vpack.c.b16 %v186, %v185
    %v202 = vpack.c.b16 %v188, %v187
    %v203 = vpack.c.b16 %v190, %v189
    %v204 = vpack.c.b16 %v192, %v191
    %v205 = vpack.c.b16 %v194, %v193
    %v206 = vpack.c.b16 %v196, %v195
    %v207 = vpack.c.b16 %v198, %v197
    %v208 = vpack.c.b16 %v200, %v199
    %217 = vmatprep.subr.bf16.mxu0 0
    %218 = vmatpush1.bf16.msra.mxu0 %v201
    %219 = vmatprep.subr.bf16.mxu0 0
    %220 = vmatpush1.bf16.msra.mxu0 %v202
    %221 = vmatprep.subr.bf16.mxu0 0
    %222 = vmatpush1.bf16.msra.mxu0 %v203
    %223 = vmatprep.subr.bf16.mxu0 0
    %224 = vmatpush1.bf16.msra.mxu0 %v204
    %225 = vmatprep.subr.bf16.mxu0 0
    %226 = vmatpush1.bf16.msra.mxu0 %v205
    %227 = vmatprep.subr.bf16.mxu0 0
    %228 = vmatpush1.bf16.msra.mxu0 %v206
    %229 = vmatprep.subr.bf16.mxu0 0
    %230 = vmatpush1.bf16.msra.mxu0 %v207
    %231 = vmatprep.subr.bf16.mxu0 0
    %232 = vmatpush1.bf16.msra.mxu0 %v208
    %233 = vmatprep.subr.bf16.mxu0 0
    %234 = vmatpush1.bf16.msra.mxu0 0
    %235 = vmatprep.subr.bf16.mxu0 0
    %236 = vmatpush1.bf16.msra.mxu0 0
    %237 = vmatprep.subr.bf16.mxu0 0
    %238 = vmatpush1.bf16.msra.mxu0 0
    %239 = vmatprep.subr.bf16.mxu0 0
    %240 = vmatpush1.bf16.msra.mxu0 0
    %241 = vmatprep.subr.bf16.mxu0 0
    %242 = vmatpush1.bf16.msra.mxu0 0
    %243 = vmatprep.subr.bf16.mxu0 0
    %244 = vmatpush1.bf16.msra.mxu0 0
    %245 = vmatprep.subr.bf16.mxu0 0
    %246 = vmatpush1.bf16.msra.mxu0 0
    %247 = vmatprep.subr.bf16.mxu0 0
    %248 = vmatpush1.bf16.msra.mxu0 0
    %249 = vmatprep.mubr.bf16.mxu0 0
    %250 = vmatmul.mubr.bf16.gmra.mrb[0].mxu0 %v143
    %v251 = vpop.f32.mrb[0].mxu0
    %v252 = vadd.f32 %v167, %v251
    %v253 = vpop.f32.mrb[0].mxu0
    %v254 = vpop.f32.mrb[0].mxu0
    %v255 = vpop.f32.mrb[0].mxu0
    %256 = vdwg.mxu0
    %v257 = vmax.f32 %v252, 0.0
    %v258 = vpack.c.bf16 %v257, %v257
    %s259 = scalar_lea.vmem [#allocation2], 128
    %v260 = vld [vmem:[%s259] sm:$0xf]
    %v261 = vld [vmem:[%s259 + $0x4] sm:$0xf]
    %v262 = vld [vmem:[%s259 + $0x8] sm:$0xf]
    %v263 = vld [vmem:[%s259 + $0xc] sm:$0xf]
    %v264 = vld [vmem:[%s259 + $0x10] sm:$0xf]
    %v265 = vld [vmem:[%s259 + $0x14] sm:$0xf]
    %v266 = vld [vmem:[%s259 + $0x18] sm:$0xf]
    %v267 = vld [vmem:[%s259 + $0x1c] sm:$0xf]
    %v268 = vld [vmem:[%s259 + $0x20] sm:$0xf]
    %v269 = vld [vmem:[%s259 + $0x24] sm:$0xf]
    %v270 = vld [vmem:[%s259 + $0x28] sm:$0xf]
    %v271 = vld [vmem:[%s259 + $0x2c] sm:$0xf]
    %v272 = vld [vmem:[%s259 + $0x30] sm:$0xf]
    %v273 = vld [vmem:[%s259 + $0x34] sm:$0xf]
    %v274 = vld [vmem:[%s259 + $0x38] sm:$0xf]
    %v275 = vld [vmem:[%s259 + $0x3c] sm:$0xf]
    %s276 = scalar_lea.vmem %s2, 2
    %v277 = vld [vmem:[%s276] sm:$0x1]
    %v279 = vlaneseq
    %v280 = vshrl.u32 %v279, 7
    %v281 = vsub.s32 0, %v280
    %v282 = vrot.slane %v277, %v281
    %v300 = vunpack.c.l.b16 %v260
    %v301 = vunpack.c.l.b16 %v261
    %v302 = vunpack.c.l.b16 %v262
    %v303 = vunpack.c.l.b16 %v263
    %v304 = vunpack.c.l.b16 %v264
    %v305 = vunpack.c.l.b16 %v265
    %v306 = vunpack.c.l.b16 %v266
    %v307 = vunpack.c.l.b16 %v267
    %v308 = vunpack.c.l.b16 %v268
    %v309 = vunpack.c.l.b16 %v269
    %v310 = vunpack.c.l.b16 %v270
    %v311 = vunpack.c.l.b16 %v271
    %v312 = vunpack.c.l.b16 %v272
    %v313 = vunpack.c.l.b16 %v273
    %v314 = vunpack.c.l.b16 %v274
    %v315 = vunpack.c.l.b16 %v275
    %v316 = vpack.c.b16 %v301, %v300
    %v317 = vpack.c.b16 %v303, %v302
    %v318 = vpack.c.b16 %v305, %v304
    %v319 = vpack.c.b16 %v307, %v306
    %v320 = vpack.c.b16 %v309, %v308
    %v321 = vpack.c.b16 %v311, %v310
    %v322 = vpack.c.b16 %v313, %v312
    %v323 = vpack.c.b16 %v315, %v314
    %332 = vmatprep.subr.bf16.mxu0 0
    %333 = vmatpush1.bf16.msra.mxu0 %v316
    %334 = vmatprep.subr.bf16.mxu0 0
    %335 = vmatpush1.bf16.msra.mxu0 %v317
    %336 = vmatprep.subr.bf16.mxu0 0
    %337 = vmatpush1.bf16.msra.mxu0 %v318
    %338 = vmatprep.subr.bf16.mxu0 0
    %339 = vmatpush1.bf16.msra.mxu0 %v319
    %340 = vmatprep.subr.bf16.mxu0 0
    %341 = vmatpush1.bf16.msra.mxu0 %v320
    %342 = vmatprep.subr.bf16.mxu0 0
    %343 = vmatpush1.bf16.msra.mxu0 %v321
    %344 = vmatprep.subr.bf16.mxu0 0
    %345 = vmatpush1.bf16.msra.mxu0 %v322
    %346 = vmatprep.subr.bf16.mxu0 0
    %347 = vmatpush1.bf16.msra.mxu0 %v323
    %348 = vmatprep.subr.bf16.mxu0 0
    %349 = vmatpush1.bf16.msra.mxu0 0
    %350 = vmatprep.subr.bf16.mxu0 0
    %351 = vmatpush1.bf16.msra.mxu0 0
    %352 = vmatprep.subr.bf16.mxu0 0
    %353 = vmatpush1.bf16.msra.mxu0 0
    %354 = vmatprep.subr.bf16.mxu0 0
    %355 = vmatpush1.bf16.msra.mxu0 0
    %356 = vmatprep.subr.bf16.mxu0 0
    %357 = vmatpush1.bf16.msra.mxu0 0
    %358 = vmatprep.subr.bf16.mxu0 0
    %359 = vmatpush1.bf16.msra.mxu0 0
    %360 = vmatprep.subr.bf16.mxu0 0
    %361 = vmatpush1.bf16.msra.mxu0 0
    %362 = vmatprep.subr.bf16.mxu0 0
    %363 = vmatpush1.bf16.msra.mxu0 0
    %364 = vmatprep.mubr.bf16.mxu0 0
    %365 = vmatmul.mubr.bf16.gmra.mrb[0].mxu0 %v258
    %v366 = vpop.f32.mrb[0].mxu0
    %v367 = vadd.f32 %v282, %v366
    %v368 = vpop.f32.mrb[0].mxu0
    %v369 = vpop.f32.mrb[0].mxu0
    %v370 = vpop.f32.mrb[0].mxu0
    %371 = vdwg.mxu0
    %v372 = vmax.f32 %v367, 0.0
    %v373 = vpack.c.bf16 %v372, %v372
    %s374 = scalar_lea.vmem [#allocation2], 192
    %v375 = vld [vmem:[%s374] sm:$0xf]
    %v376 = vld [vmem:[%s374 + $0x4] sm:$0xf]
    %v377 = vld [vmem:[%s374 + $0x8] sm:$0xf]
    %v378 = vld [vmem:[%s374 + $0xc] sm:$0xf]
    %v379 = vld [vmem:[%s374 + $0x10] sm:$0xf]
    %v380 = vld [vmem:[%s374 + $0x14] sm:$0xf]
    %v381 = vld [vmem:[%s374 + $0x18] sm:$0xf]
    %v382 = vld [vmem:[%s374 + $0x1c] sm:$0xf]
    %v383 = vld [vmem:[%s374 + $0x20] sm:$0xf]
    %v384 = vld [vmem:[%s374 + $0x24] sm:$0xf]
    %v385 = vld [vmem:[%s374 + $0x28] sm:$0xf]
    %v386 = vld [vmem:[%s374 + $0x2c] sm:$0xf]
    %v387 = vld [vmem:[%s374 + $0x30] sm:$0xf]
    %v388 = vld [vmem:[%s374 + $0x34] sm:$0xf]
    %v389 = vld [vmem:[%s374 + $0x38] sm:$0xf]
    %v390 = vld [vmem:[%s374 + $0x3c] sm:$0xf]
    %s391 = scalar_lea.vmem %s2, 3
    %v392 = vld [vmem:[%s391] sm:$0x1]
    %v394 = vlaneseq
    %v395 = vshrl.u32 %v394, 7
    %v396 = vsub.s32 0, %v395
    %v397 = vrot.slane %v392, %v396
    %v415 = vunpack.c.l.b16 %v375
    %v416 = vunpack.c.l.b16 %v376
    %v417 = vunpack.c.l.b16 %v377
    %v418 = vunpack.c.l.b16 %v378
    %v419 = vunpack.c.l.b16 %v379
    %v420 = vunpack.c.l.b16 %v380
    %v421 = vunpack.c.l.b16 %v381
    %v422 = vunpack.c.l.b16 %v382
    %v423 = vunpack.c.l.b16 %v383
    %v424 = vunpack.c.l.b16 %v384
    %v425 = vunpack.c.l.b16 %v385
    %v426 = vunpack.c.l.b16 %v386
    %v427 = vunpack.c.l.b16 %v387
    %v428 = vunpack.c.l.b16 %v388
    %v429 = vunpack.c.l.b16 %v389
    %v430 = vunpack.c.l.b16 %v390
    %v431 = vpack.c.b16 %v416, %v415
    %v432 = vpack.c.b16 %v418, %v417
    %v433 = vpack.c.b16 %v420, %v419
    %v434 = vpack.c.b16 %v422, %v421
    %v435 = vpack.c.b16 %v424, %v423
    %v436 = vpack.c.b16 %v426, %v425
    %v437 = vpack.c.b16 %v428, %v427
    %v438 = vpack.c.b16 %v430, %v429
    %447 = vmatprep.subr.bf16.mxu0 0
    %448 = vmatpush1.bf16.msra.mxu0 %v431
    %449 = vmatprep.subr.bf16.mxu0 0
    %450 = vmatpush1.bf16.msra.mxu0 %v432
    %451 = vmatprep.subr.bf16.mxu0 0
    %452 = vmatpush1.bf16.msra.mxu0 %v433
    %453 = vmatprep.subr.bf16.mxu0 0
    %454 = vmatpush1.bf16.msra.mxu0 %v434
    %455 = vmatprep.subr.bf16.mxu0 0
    %456 = vmatpush1.bf16.msra.mxu0 %v435
    %457 = vmatprep.subr.bf16.mxu0 0
    %458 = vmatpush1.bf16.msra.mxu0 %v436
    %459 = vmatprep.subr.bf16.mxu0 0
    %460 = vmatpush1.bf16.msra.mxu0 %v437
    %461 = vmatprep.subr.bf16.mxu0 0
    %462 = vmatpush1.bf16.msra.mxu0 %v438
    %463 = vmatprep.subr.bf16.mxu0 0
    %464 = vmatpush1.bf16.msra.mxu0 0
    %465 = vmatprep.subr.bf16.mxu0 0
    %466 = vmatpush1.bf16.msra.mxu0 0
    %467 = vmatprep.subr.bf16.mxu0 0
    %468 = vmatpush1.bf16.msra.mxu0 0
    %469 = vmatprep.subr.bf16.mxu0 0
    %470 = vmatpush1.bf16.msra.mxu0 0
    %471 = vmatprep.subr.bf16.mxu0 0
    %472 = vmatpush1.bf16.msra.mxu0 0
    %473 = vmatprep.subr.bf16.mxu0 0
    %474 = vmatpush1.bf16.msra.mxu0 0
    %475 = vmatprep.subr.bf16.mxu0 0
    %476 = vmatpush1.bf16.msra.mxu0 0
    %477 = vmatprep.subr.bf16.mxu0 0
    %478 = vmatpush1.bf16.msra.mxu0 0
    %479 = vmatprep.mubr.bf16.mxu0 0
    %480 = vmatmul.mubr.bf16.gmra.mrb[0].mxu0 %v373
    %v481 = vpop.f32.mrb[0].mxu0
    %v482 = vadd.f32 %v397, %v481
    %v483 = vpop.f32.mrb[0].mxu0
    %v484 = vpop.f32.mrb[0].mxu0
    %v485 = vpop.f32.mrb[0].mxu0
    %486 = vdwg.mxu0
    %v487 = vpack.c.bf16 %v482, %v482
    %v488 = vtanh.bf16.pop %v487
    %s489 = scalar_lea.vmem [#allocation2], 256
    %v490 = vld [vmem:[%s489] sm:$0xf]
    %v491 = vld [vmem:[%s489 + $0x4] sm:$0xf]
    %v492 = vld [vmem:[%s489 + $0x8] sm:$0xf]
    %v493 = vld [vmem:[%s489 + $0xc] sm:$0xf]
    %v494 = vld [vmem:[%s489 + $0x10] sm:$0xf]
    %v495 = vld [vmem:[%s489 + $0x14] sm:$0xf]
    %v496 = vld [vmem:[%s489 + $0x18] sm:$0xf]
    %v497 = vld [vmem:[%s489 + $0x1c] sm:$0xf]
    %v498 = vld [vmem:[%s489 + $0x20] sm:$0xf]
    %v499 = vld [vmem:[%s489 + $0x24] sm:$0xf]
    %v500 = vld [vmem:[%s489 + $0x28] sm:$0xf]
    %v501 = vld [vmem:[%s489 + $0x2c] sm:$0xf]
    %v502 = vld [vmem:[%s489 + $0x30] sm:$0xf]
    %v503 = vld [vmem:[%s489 + $0x34] sm:$0xf]
    %v504 = vld [vmem:[%s489 + $0x38] sm:$0xf]
    %v505 = vld [vmem:[%s489 + $0x3c] sm:$0xf]
    %s506 = scalar_lea.vmem %s2, 4
    %v507 = vld [vmem:[%s506] sm:$0x1]
    %v509 = vlaneseq
    %v510 = vshrl.u32 %v509, 7
    %v511 = vsub.s32 0, %v510
    %v512 = vrot.slane %v507, %v511
    %v530 = vunpack.c.l.b16 %v490
    %v531 = vunpack.c.l.b16 %v491
    %v532 = vunpack.c.l.b16 %v492
    %v533 = vunpack.c.l.b16 %v493
    %v534 = vunpack.c.l.b16 %v494
    %v535 = vunpack.c.l.b16 %v495
    %v536 = vunpack.c.l.b16 %v496
    %v537 = vunpack.c.l.b16 %v497
    %v538 = vunpack.c.l.b16 %v498
    %v539 = vunpack.c.l.b16 %v499
    %v540 = vunpack.c.l.b16 %v500
    %v541 = vunpack.c.l.b16 %v501
    %v542 = vunpack.c.l.b16 %v502
    %v543 = vunpack.c.l.b16 %v503
    %v544 = vunpack.c.l.b16 %v504
    %v545 = vunpack.c.l.b16 %v505
    %v546 = vpack.c.b16 %v531, %v530
    %v547 = vpack.c.b16 %v533, %v532
    %v548 = vpack.c.b16 %v535, %v534
    %v549 = vpack.c.b16 %v537, %v536
    %v550 = vpack.c.b16 %v539, %v538
    %v551 = vpack.c.b16 %v541, %v540
    %v552 = vpack.c.b16 %v543, %v542
    %v553 = vpack.c.b16 %v545, %v544
    %562 = vmatprep.subr.bf16.mxu0 0
    %563 = vmatpush1.bf16.msra.mxu0 %v546
    %564 = vmatprep.subr.bf16.mxu0 0
    %565 = vmatpush1.bf16.msra.mxu0 %v547
    %566 = vmatprep.subr.bf16.mxu0 0
    %567 = vmatpush1.bf16.msra.mxu0 %v548
    %568 = vmatprep.subr.bf16.mxu0 0
    %569 = vmatpush1.bf16.msra.mxu0 %v549
    %570 = vmatprep.subr.bf16.mxu0 0
    %571 = vmatpush1.bf16.msra.mxu0 %v550
    %572 = vmatprep.subr.bf16.mxu0 0
    %573 = vmatpush1.bf16.msra.mxu0 %v551
    %574 = vmatprep.subr.bf16.mxu0 0
    %575 = vmatpush1.bf16.msra.mxu0 %v552
    %576 = vmatprep.subr.bf16.mxu0 0
    %577 = vmatpush1.bf16.msra.mxu0 %v553
    %578 = vmatprep.subr.bf16.mxu0 0
    %579 = vmatpush1.bf16.msra.mxu0 0
    %580 = vmatprep.subr.bf16.mxu0 0
    %581 = vmatpush1.bf16.msra.mxu0 0
    %582 = vmatprep.subr.bf16.mxu0 0
    %583 = vmatpush1.bf16.msra.mxu0 0
    %584 = vmatprep.subr.bf16.mxu0 0
    %585 = vmatpush1.bf16.msra.mxu0 0
    %586 = vmatprep.subr.bf16.mxu0 0
    %587 = vmatpush1.bf16.msra.mxu0 0
    %588 = vmatprep.subr.bf16.mxu0 0
    %589 = vmatpush1.bf16.msra.mxu0 0
    %590 = vmatprep.subr.bf16.mxu0 0
    %591 = vmatpush1.bf16.msra.mxu0 0
    %592 = vmatprep.subr.bf16.mxu0 0
    %593 = vmatpush1.bf16.msra.mxu0 0
    %594 = vmatprep.mubr.bf16.mxu0 0
    %595 = vmatmul.mubr.bf16.gmra.mrb[0].mxu0 %v488
    %v596 = vpop.f32.mrb[0].mxu0
    %v597 = vadd.f32 %v512, %v596
    %v598 = vpop.f32.mrb[0].mxu0
    %v599 = vpop.f32.mrb[0].mxu0
    %v600 = vpop.f32.mrb[0].mxu0
    %601 = vdwg.mxu0
    %v602 = vpack.c.bf16 %v597, %v597
    %v603 = vtanh.bf16.pop %v602
    %s604 = scalar_lea.vmem [#allocation2], 320
    %v605 = vld [vmem:[%s604] sm:$0xf]
    %v606 = vld [vmem:[%s604 + $0x4] sm:$0xf]
    %v607 = vld [vmem:[%s604 + $0x8] sm:$0xf]
    %v608 = vld [vmem:[%s604 + $0xc] sm:$0xf]
    %v609 = vld [vmem:[%s604 + $0x10] sm:$0xf]
    %v610 = vld [vmem:[%s604 + $0x14] sm:$0xf]
    %v611 = vld [vmem:[%s604 + $0x18] sm:$0xf]
    %v612 = vld [vmem:[%s604 + $0x1c] sm:$0xf]
    %v613 = vld [vmem:[%s604 + $0x20] sm:$0xf]
    %v614 = vld [vmem:[%s604 + $0x24] sm:$0xf]
    %v615 = vld [vmem:[%s604 + $0x28] sm:$0xf]
    %v616 = vld [vmem:[%s604 + $0x2c] sm:$0xf]
    %v617 = vld [vmem:[%s604 + $0x30] sm:$0xf]
    %v618 = vld [vmem:[%s604 + $0x34] sm:$0xf]
    %v619 = vld [vmem:[%s604 + $0x38] sm:$0xf]
    %v620 = vld [vmem:[%s604 + $0x3c] sm:$0xf]
    %s621 = scalar_lea.vmem %s2, 5
    %v622 = vld [vmem:[%s621] sm:$0x1]
    %v624 = vlaneseq
    %v625 = vshrl.u32 %v624, 7
    %v626 = vsub.s32 0, %v625
    %v627 = vrot.slane %v622, %v626
    %v645 = vunpack.c.l.b16 %v605
    %v646 = vunpack.c.l.b16 %v606
    %v647 = vunpack.c.l.b16 %v607
    %v648 = vunpack.c.l.b16 %v608
    %v649 = vunpack.c.l.b16 %v609
    %v650 = vunpack.c.l.b16 %v610
    %v651 = vunpack.c.l.b16 %v611
    %v652 = vunpack.c.l.b16 %v612
    %v653 = vunpack.c.l.b16 %v613
    %v654 = vunpack.c.l.b16 %v614
    %v655 = vunpack.c.l.b16 %v615
    %v656 = vunpack.c.l.b16 %v616
    %v657 = vunpack.c.l.b16 %v617
    %v658 = vunpack.c.l.b16 %v618
    %v659 = vunpack.c.l.b16 %v619
    %v660 = vunpack.c.l.b16 %v620
    %v661 = vpack.c.b16 %v646, %v645
    %v662 = vpack.c.b16 %v648, %v647
    %v663 = vpack.c.b16 %v650, %v649
    %v664 = vpack.c.b16 %v652, %v651
    %v665 = vpack.c.b16 %v654, %v653
    %v666 = vpack.c.b16 %v656, %v655
    %v667 = vpack.c.b16 %v658, %v657
    %v668 = vpack.c.b16 %v660, %v659
    %677 = vmatprep.subr.bf16.mxu0 0
    %678 = vmatpush1.bf16.msra.mxu0 %v661
    %679 = vmatprep.subr.bf16.mxu0 0
    %680 = vmatpush1.bf16.msra.mxu0 %v662
    %681 = vmatprep.subr.bf16.mxu0 0
    %682 = vmatpush1.bf16.msra.mxu0 %v663
    %683 = vmatprep.subr.bf16.mxu0 0
    %684 = vmatpush1.bf16.msra.mxu0 %v664
    %685 = vmatprep.subr.bf16.mxu0 0
    %686 = vmatpush1.bf16.msra.mxu0 %v665
    %687 = vmatprep.subr.bf16.mxu0 0
    %688 = vmatpush1.bf16.msra.mxu0 %v666
    %689 = vmatprep.subr.bf16.mxu0 0
    %690 = vmatpush1.bf16.msra.mxu0 %v667
    %691 = vmatprep.subr.bf16.mxu0 0
    %692 = vmatpush1.bf16.msra.mxu0 %v668
    %693 = vmatprep.subr.bf16.mxu0 0
    %694 = vmatpush1.bf16.msra.mxu0 0
    %695 = vmatprep.subr.bf16.mxu0 0
    %696 = vmatpush1.bf16.msra.mxu0 0
    %697 = vmatprep.subr.bf16.mxu0 0
    %698 = vmatpush1.bf16.msra.mxu0 0
    %699 = vmatprep.subr.bf16.mxu0 0
    %700 = vmatpush1.bf16.msra.mxu0 0
    %701 = vmatprep.subr.bf16.mxu0 0
    %702 = vmatpush1.bf16.msra.mxu0 0
    %703 = vmatprep.subr.bf16.mxu0 0
    %704 = vmatpush1.bf16.msra.mxu0 0
    %705 = vmatprep.subr.bf16.mxu0 0
    %706 = vmatpush1.bf16.msra.mxu0 0
    %707 = vmatprep.subr.bf16.mxu0 0
    %708 = vmatpush1.bf16.msra.mxu0 0
    %709 = vmatprep.mubr.bf16.mxu0 0
    %710 = vmatmul.mubr.bf16.gmra.mrb[0].mxu0 %v603
    %v711 = vpop.f32.mrb[0].mxu0
    %v712 = vadd.f32 %v627, %v711
    %v713 = vpop.f32.mrb[0].mxu0
    %v714 = vpop.f32.mrb[0].mxu0
    %v715 = vpop.f32.mrb[0].mxu0
    %716 = vdwg.mxu0
    %v717 = vlaneseq
    %v718 = vand.u32 %v717, 127
    %v719 = vpack.c.bf16 %v712, %v712
    %vm720 = vcmp.lt.s32.totalorder %v718, 80
    %v721 = vtanh.bf16.pop %v719
    %vm722 = vmpackc.low %vm720, %vm720
    %v723 = vsel %vm722, %v721, %v719
    %s724 = scalar_lea.vmem [#allocation2], 384
    %v725 = vld [vmem:[%s724] sm:$0xf]
    %v726 = vld [vmem:[%s724 + $0x4] sm:$0xf]
    %v727 = vld [vmem:[%s724 + $0x8] sm:$0xf]
    %v728 = vld [vmem:[%s724 + $0xc] sm:$0xf]
    %v729 = vld [vmem:[%s724 + $0x10] sm:$0xf]
    %v730 = vld [vmem:[%s724 + $0x14] sm:$0xf]
    %v731 = vld [vmem:[%s724 + $0x18] sm:$0xf]
    %v732 = vld [vmem:[%s724 + $0x1c] sm:$0xf]
    %v733 = vld [vmem:[%s724 + $0x20] sm:$0xf]
    %v734 = vld [vmem:[%s724 + $0x24] sm:$0xf]
    %v735 = vld [vmem:[%s724 + $0x28] sm:$0xf]
    %v736 = vld [vmem:[%s724 + $0x2c] sm:$0xf]
    %v737 = vld [vmem:[%s724 + $0x30] sm:$0xf]
    %v738 = vld [vmem:[%s724 + $0x34] sm:$0xf]
    %v739 = vld [vmem:[%s724 + $0x38] sm:$0xf]
    %v740 = vld [vmem:[%s724 + $0x3c] sm:$0xf]
    %s741 = scalar_lea.vmem %s2, 6
    %v742 = vld [vmem:[%s741] sm:$0x1]
    %v744 = vlaneseq
    %v745 = vshrl.u32 %v744, 7
    %v746 = vsub.s32 0, %v745
    %v747 = vrot.slane %v742, %v746
    %v765 = vunpack.c.l.b16 %v725
    %v766 = vunpack.c.l.b16 %v726
    %v767 = vunpack.c.l.b16 %v727
    %v768 = vunpack.c.l.b16 %v728
    %v769 = vunpack.c.l.b16 %v729
    %v770 = vunpack.c.l.b16 %v730
    %v771 = vunpack.c.l.b16 %v731
    %v772 = vunpack.c.l.b16 %v732
    %v773 = vunpack.c.l.b16 %v733
    %v774 = vunpack.c.l.b16 %v734
    %v775 = vunpack.c.l.b16 %v735
    %v776 = vunpack.c.l.b16 %v736
    %v777 = vunpack.c.l.b16 %v737
    %v778 = vunpack.c.l.b16 %v738
    %v779 = vunpack.c.l.b16 %v739
    %v780 = vunpack.c.l.b16 %v740
    %v781 = vpack.c.b16 %v766, %v765
    %v782 = vpack.c.b16 %v768, %v767
    %v783 = vpack.c.b16 %v770, %v769
    %v784 = vpack.c.b16 %v772, %v771
    %v785 = vpack.c.b16 %v774, %v773
    %v786 = vpack.c.b16 %v776, %v775
    %v787 = vpack.c.b16 %v778, %v777
    %v788 = vpack.c.b16 %v780, %v779
    %797 = vmatprep.subr.bf16.mxu0 0
    %798 = vmatpush1.bf16.msra.mxu0 %v781
    %799 = vmatprep.subr.bf16.mxu0 0
    %800 = vmatpush1.bf16.msra.mxu0 %v782
    %801 = vmatprep.subr.bf16.mxu0 0
    %802 = vmatpush1.bf16.msra.mxu0 %v783
    %803 = vmatprep.subr.bf16.mxu0 0
    %804 = vmatpush1.bf16.msra.mxu0 %v784
    %805 = vmatprep.subr.bf16.mxu0 0
    %806 = vmatpush1.bf16.msra.mxu0 %v785
    %807 = vmatprep.subr.bf16.mxu0 0
    %808 = vmatpush1.bf16.msra.mxu0 %v786
    %809 = vmatprep.subr.bf16.mxu0 0
    %810 = vmatpush1.bf16.msra.mxu0 %v787
    %811 = vmatprep.subr.bf16.mxu0 0
    %812 = vmatpush1.bf16.msra.mxu0 %v788
    %813 = vmatprep.subr.bf16.mxu0 0
    %814 = vmatpush1.bf16.msra.mxu0 0
    %815 = vmatprep.subr.bf16.mxu0 0
    %816 = vmatpush1.bf16.msra.mxu0 0
    %817 = vmatprep.subr.bf16.mxu0 0
    %818 = vmatpush1.bf16.msra.mxu0 0
    %819 = vmatprep.subr.bf16.mxu0 0
    %820 = vmatpush1.bf16.msra.mxu0 0
    %821 = vmatprep.subr.bf16.mxu0 0
    %822 = vmatpush1.bf16.msra.mxu0 0
    %823 = vmatprep.subr.bf16.mxu0 0
    %824 = vmatpush1.bf16.msra.mxu0 0
    %825 = vmatprep.subr.bf16.mxu0 0
    %826 = vmatpush1.bf16.msra.mxu0 0
    %827 = vmatprep.subr.bf16.mxu0 0
    %828 = vmatpush1.bf16.msra.mxu0 0
    %829 = vmatprep.mubr.bf16.mxu0 0
    %830 = vmatmul.mubr.bf16.gmra.mrb[0].mxu0 %v723
    %v831 = vpop.f32.mrb[0].mxu0
    %v832 = vadd.f32 %v747, %v831
    %v833 = vpop.f32.mrb[0].mxu0
    %v834 = vpop.f32.mrb[0].mxu0
    %v835 = vpop.f32.mrb[0].mxu0
    %836 = vdwg.mxu0
    %v837 = vpack.c.bf16 %v832, %v832
    %v838 = vtanh.bf16.pop %v837
    %s839 = scalar_lea.vmem [#allocation2], 448
    %v840 = vld [vmem:[%s839] sm:$0xf]
    %v841 = vld [vmem:[%s839 + $0x4] sm:$0xf]
    %v842 = vld [vmem:[%s839 + $0x8] sm:$0xf]
    %v843 = vld [vmem:[%s839 + $0xc] sm:$0xf]
    %v844 = vld [vmem:[%s839 + $0x10] sm:$0xf]
    %v845 = vld [vmem:[%s839 + $0x14] sm:$0xf]
    %v846 = vld [vmem:[%s839 + $0x18] sm:$0xf]
    %v847 = vld [vmem:[%s839 + $0x1c] sm:$0xf]
    %v848 = vld [vmem:[%s839 + $0x20] sm:$0xf]
    %v849 = vld [vmem:[%s839 + $0x24] sm:$0xf]
    %v850 = vld [vmem:[%s839 + $0x28] sm:$0xf]
    %v851 = vld [vmem:[%s839 + $0x2c] sm:$0xf]
    %v852 = vld [vmem:[%s839 + $0x30] sm:$0xf]
    %v853 = vld [vmem:[%s839 + $0x34] sm:$0xf]
    %v854 = vld [vmem:[%s839 + $0x38] sm:$0xf]
    %v855 = vld [vmem:[%s839 + $0x3c] sm:$0xf]
    %s856 = scalar_lea.vmem %s2, 7
    %v857 = vld [vmem:[%s856] sm:$0x1]
    %v859 = vlaneseq
    %v860 = vshrl.u32 %v859, 7
    %v861 = vsub.s32 0, %v860
    %v862 = vrot.slane %v857, %v861
    %v880 = vunpack.c.l.b16 %v840
    %v881 = vunpack.c.l.b16 %v841
    %v882 = vunpack.c.l.b16 %v842
    %v883 = vunpack.c.l.b16 %v843
    %v884 = vunpack.c.l.b16 %v844
    %v885 = vunpack.c.l.b16 %v845
    %v886 = vunpack.c.l.b16 %v846
    %v887 = vunpack.c.l.b16 %v847
    %v888 = vunpack.c.l.b16 %v848
    %v889 = vunpack.c.l.b16 %v849
    %v890 = vunpack.c.l.b16 %v850
    %v891 = vunpack.c.l.b16 %v851
    %v892 = vunpack.c.l.b16 %v852
    %v893 = vunpack.c.l.b16 %v853
    %v894 = vunpack.c.l.b16 %v854
    %v895 = vunpack.c.l.b16 %v855
    %v896 = vpack.c.b16 %v881, %v880
    %v897 = vpack.c.b16 %v883, %v882
    %v898 = vpack.c.b16 %v885, %v884
    %v899 = vpack.c.b16 %v887, %v886
    %v900 = vpack.c.b16 %v889, %v888
    %v901 = vpack.c.b16 %v891, %v890
    %v902 = vpack.c.b16 %v893, %v892
    %v903 = vpack.c.b16 %v895, %v894
    %912 = vmatprep.subr.bf16.mxu0 0
    %913 = vmatpush1.bf16.msra.mxu0 %v896
    %914 = vmatprep.subr.bf16.mxu0 0
    %915 = vmatpush1.bf16.msra.mxu0 %v897
    %916 = vmatprep.subr.bf16.mxu0 0
    %917 = vmatpush1.bf16.msra.mxu0 %v898
    %918 = vmatprep.subr.bf16.mxu0 0
    %919 = vmatpush1.bf16.msra.mxu0 %v899
    %920 = vmatprep.subr.bf16.mxu0 0
    %921 = vmatpush1.bf16.msra.mxu0 %v900
    %922 = vmatprep.subr.bf16.mxu0 0
    %923 = vmatpush1.bf16.msra.mxu0 %v901
    %924 = vmatprep.subr.bf16.mxu0 0
    %925 = vmatpush1.bf16.msra.mxu0 %v902
    %926 = vmatprep.subr.bf16.mxu0 0
    %927 = vmatpush1.bf16.msra.mxu0 %v903
    %928 = vmatprep.subr.bf16.mxu0 0
    %929 = vmatpush1.bf16.msra.mxu0 0
    %930 = vmatprep.subr.bf16.mxu0 0
    %931 = vmatpush1.bf16.msra.mxu0 0
    %932 = vmatprep.subr.bf16.mxu0 0
    %933 = vmatpush1.bf16.msra.mxu0 0
    %934 = vmatprep.subr.bf16.mxu0 0
    %935 = vmatpush1.bf16.msra.mxu0 0
    %936 = vmatprep.subr.bf16.mxu0 0
    %937 = vmatpush1.bf16.msra.mxu0 0
    %938 = vmatprep.subr.bf16.mxu0 0
    %939 = vmatpush1.bf16.msra.mxu0 0
    %940 = vmatprep.subr.bf16.mxu0 0
    %941 = vmatpush1.bf16.msra.mxu0 0
    %942 = vmatprep.subr.bf16.mxu0 0
    %943 = vmatpush1.bf16.msra.mxu0 0
    %944 = vmatprep.mubr.bf16.mxu0 0
    %945 = vmatmul.mubr.bf16.gmra.mrb[0].mxu0 %v838
    %v946 = vpop.f32.mrb[0].mxu0
    %v947 = vadd.f32 %v862, %v946
    %v948 = vpop.f32.mrb[0].mxu0
    %v949 = vpop.f32.mrb[0].mxu0
    %v950 = vpop.f32.mrb[0].mxu0
    %951 = vdwg.mxu0
    %v952 = vunpack.c.l.bf16 %v30
    %v953 = vadd.f32 %v947, %v952
    %v954 = vpack.c.bf16 %v953, %v953
    %s955 = scalar_lea.vmem [#allocation2], 512
    %v956 = vld [vmem:[%s955] sm:$0xf]
    %v957 = vld [vmem:[%s955 + $0x4] sm:$0xf]
    %v958 = vld [vmem:[%s955 + $0x8] sm:$0xf]
    %v959 = vld [vmem:[%s955 + $0xc] sm:$0xf]
    %v960 = vld [vmem:[%s955 + $0x10] sm:$0xf]
    %v961 = vld [vmem:[%s955 + $0x14] sm:$0xf]
    %v962 = vld [vmem:[%s955 + $0x18] sm:$0xf]
    %v963 = vld [vmem:[%s955 + $0x1c] sm:$0xf]
    %v964 = vld [vmem:[%s955 + $0x20] sm:$0xf]
    %v965 = vld [vmem:[%s955 + $0x24] sm:$0xf]
    %v966 = vld [vmem:[%s955 + $0x28] sm:$0xf]
    %v967 = vld [vmem:[%s955 + $0x2c] sm:$0xf]
    %v968 = vld [vmem:[%s955 + $0x30] sm:$0xf]
    %v969 = vld [vmem:[%s955 + $0x34] sm:$0xf]
    %v970 = vld [vmem:[%s955 + $0x38] sm:$0xf]
    %v971 = vld [vmem:[%s955 + $0x3c] sm:$0xf]
    %s972 = scalar_lea.vmem %s2, 8
    %v973 = vld [vmem:[%s972] sm:$0x1]
    %v975 = vlaneseq
    %v976 = vshrl.u32 %v975, 7
    %v977 = vsub.s32 0, %v976
    %v978 = vrot.slane %v973, %v977
    %v996 = vunpack.c.l.b16 %v956
    %v997 = vunpack.c.l.b16 %v957
    %v998 = vunpack.c.l.b16 %v958
    %v999 = vunpack.c.l.b16 %v959
    %v1000 = vunpack.c.l.b16 %v960
    %v1001 = vunpack.c.l.b16 %v961
    %v1002 = vunpack.c.l.b16 %v962
    %v1003 = vunpack.c.l.b16 %v963
    %v1004 = vunpack.c.l.b16 %v964
    %v1005 = vunpack.c.l.b16 %v965
    %v1006 = vunpack.c.l.b16 %v966
    %v1007 = vunpack.c.l.b16 %v967
    %v1008 = vunpack.c.l.b16 %v968
    %v1009 = vunpack.c.l.b16 %v969
    %v1010 = vunpack.c.l.b16 %v970
    %v1011 = vunpack.c.l.b16 %v971
    %v1012 = vpack.c.b16 %v997, %v996
    %v1013 = vpack.c.b16 %v999, %v998
    %v1014 = vpack.c.b16 %v1001, %v1000
    %v1015 = vpack.c.b16 %v1003, %v1002
    %v1016 = vpack.c.b16 %v1005, %v1004
    %v1017 = vpack.c.b16 %v1007, %v1006
    %v1018 = vpack.c.b16 %v1009, %v1008
    %v1019 = vpack.c.b16 %v1011, %v1010
    %1028 = vmatprep.subr.bf16.mxu0 0
    %1029 = vmatpush1.bf16.msra.mxu0 %v1012
    %1030 = vmatprep.subr.bf16.mxu0 0
    %1031 = vmatpush1.bf16.msra.mxu0 %v1013
    %1032 = vmatprep.subr.bf16.mxu0 0
    %1033 = vmatpush1.bf16.msra.mxu0 %v1014
    %1034 = vmatprep.subr.bf16.mxu0 0
    %1035 = vmatpush1.bf16.msra.mxu0 %v1015
    %1036 = vmatprep.subr.bf16.mxu0 0
    %1037 = vmatpush1.bf16.msra.mxu0 %v1016
    %1038 = vmatprep.subr.bf16.mxu0 0
    %1039 = vmatpush1.bf16.msra.mxu0 %v1017
    %1040 = vmatprep.subr.bf16.mxu0 0
    %1041 = vmatpush1.bf16.msra.mxu0 %v1018
    %1042 = vmatprep.subr.bf16.mxu0 0
    %1043 = vmatpush1.bf16.msra.mxu0 %v1019
    %1044 = vmatprep.subr.bf16.mxu0 0
    %1045 = vmatpush1.bf16.msra.mxu0 0
    %1046 = vmatprep.subr.bf16.mxu0 0
    %1047 = vmatpush1.bf16.msra.mxu0 0
    %1048 = vmatprep.subr.bf16.mxu0 0
    %1049 = vmatpush1.bf16.msra.mxu0 0
    %1050 = vmatprep.subr.bf16.mxu0 0
    %1051 = vmatpush1.bf16.msra.mxu0 0
    %1052 = vmatprep.subr.bf16.mxu0 0
    %1053 = vmatpush1.bf16.msra.mxu0 0
    %1054 = vmatprep.subr.bf16.mxu0 0
    %1055 = vmatpush1.bf16.msra.mxu0 0
    %1056 = vmatprep.subr.bf16.mxu0 0
    %1057 = vmatpush1.bf16.msra.mxu0 0
    %1058 = vmatprep.subr.bf16.mxu0 0
    %1059 = vmatpush1.bf16.msra.mxu0 0
    %1060 = vmatprep.mubr.bf16.mxu0 0
    %1061 = vmatmul.mubr.bf16.gmra.mrb[0].mxu0 %v954
    %v1062 = vpop.f32.mrb[0].mxu0
    %v1063 = vadd.f32 %v978, %v1062
    %v1064 = vpop.f32.mrb[0].mxu0
    %v1065 = vpop.f32.mrb[0].mxu0
    %v1066 = vpop.f32.mrb[0].mxu0
    %1067 = vdwg.mxu0
    %v1068 = vmax.f32 %v1063, 0.0
    %v1069 = vpack.c.bf16 %v1068, %v1068
    %s1070 = scalar_lea.vmem [#allocation2], 576
    %v1071 = vld [vmem:[%s1070] sm:$0xf]
    %v1072 = vld [vmem:[%s1070 + $0x4] sm:$0xf]
    %v1073 = vld [vmem:[%s1070 + $0x8] sm:$0xf]
    %v1074 = vld [vmem:[%s1070 + $0xc] sm:$0xf]
    %v1075 = vld [vmem:[%s1070 + $0x10] sm:$0xf]
    %v1076 = vld [vmem:[%s1070 + $0x14] sm:$0xf]
    %v1077 = vld [vmem:[%s1070 + $0x18] sm:$0xf]
    %v1078 = vld [vmem:[%s1070 + $0x1c] sm:$0xf]
    %v1079 = vld [vmem:[%s1070 + $0x20] sm:$0xf]
    %v1080 = vld [vmem:[%s1070 + $0x24] sm:$0xf]
    %v1081 = vld [vmem:[%s1070 + $0x28] sm:$0xf]
    %v1082 = vld [vmem:[%s1070 + $0x2c] sm:$0xf]
    %v1083 = vld [vmem:[%s1070 + $0x30] sm:$0xf]
    %v1084 = vld [vmem:[%s1070 + $0x34] sm:$0xf]
    %v1085 = vld [vmem:[%s1070 + $0x38] sm:$0xf]
    %v1086 = vld [vmem:[%s1070 + $0x3c] sm:$0xf]
    %s1087 = scalar_lea.vmem %s2, 9
    %v1088 = vld [vmem:[%s1087] sm:$0x1]
    %v1090 = vlaneseq
    %v1091 = vshrl.u32 %v1090, 7
    %v1092 = vsub.s32 0, %v1091
    %v1093 = vrot.slane %v1088, %v1092
    %v1111 = vunpack.c.l.b16 %v1071
    %v1112 = vunpack.c.l.b16 %v1072
    %v1113 = vunpack.c.l.b16 %v1073
    %v1114 = vunpack.c.l.b16 %v1074
    %v1115 = vunpack.c.l.b16 %v1075
    %v1116 = vunpack.c.l.b16 %v1076
    %v1117 = vunpack.c.l.b16 %v1077
    %v1118 = vunpack.c.l.b16 %v1078
    %v1119 = vunpack.c.l.b16 %v1079
    %v1120 = vunpack.c.l.b16 %v1080
    %v1121 = vunpack.c.l.b16 %v1081
    %v1122 = vunpack.c.l.b16 %v1082
    %v1123 = vunpack.c.l.b16 %v1083
    %v1124 = vunpack.c.l.b16 %v1084
    %v1125 = vunpack.c.l.b16 %v1085
    %v1126 = vunpack.c.l.b16 %v1086
    %v1127 = vpack.c.b16 %v1112, %v1111
    %v1128 = vpack.c.b16 %v1114, %v1113
    %v1129 = vpack.c.b16 %v1116, %v1115
    %v1130 = vpack.c.b16 %v1118, %v1117
    %v1131 = vpack.c.b16 %v1120, %v1119
    %v1132 = vpack.c.b16 %v1122, %v1121
    %v1133 = vpack.c.b16 %v1124, %v1123
    %v1134 = vpack.c.b16 %v1126, %v1125
    %1143 = vmatprep.subr.bf16.mxu0 0
    %1144 = vmatpush1.bf16.msra.mxu0 %v1127
    %1145 = vmatprep.subr.bf16.mxu0 0
    %1146 = vmatpush1.bf16.msra.mxu0 %v1128
    %1147 = vmatprep.subr.bf16.mxu0 0
    %1148 = vmatpush1.bf16.msra.mxu0 %v1129
    %1149 = vmatprep.subr.bf16.mxu0 0
    %1150 = vmatpush1.bf16.msra.mxu0 %v1130
    %1151 = vmatprep.subr.bf16.mxu0 0
    %1152 = vmatpush1.bf16.msra.mxu0 %v1131
    %1153 = vmatprep.subr.bf16.mxu0 0
    %1154 = vmatpush1.bf16.msra.mxu0 %v1132
    %1155 = vmatprep.subr.bf16.mxu0 0
    %1156 = vmatpush1.bf16.msra.mxu0 %v1133
    %1157 = vmatprep.subr.bf16.mxu0 0
    %1158 = vmatpush1.bf16.msra.mxu0 %v1134
    %1159 = vmatprep.subr.bf16.mxu0 0
    %1160 = vmatpush1.bf16.msra.mxu0 0
    %1161 = vmatprep.subr.bf16.mxu0 0
    %1162 = vmatpush1.bf16.msra.mxu0 0
    %1163 = vmatprep.subr.bf16.mxu0 0
    %1164 = vmatpush1.bf16.msra.mxu0 0
    %1165 = vmatprep.subr.bf16.mxu0 0
    %1166 = vmatpush1.bf16.msra.mxu0 0
    %1167 = vmatprep.subr.bf16.mxu0 0
    %1168 = vmatpush1.bf16.msra.mxu0 0
    %1169 = vmatprep.subr.bf16.mxu0 0
    %1170 = vmatpush1.bf16.msra.mxu0 0
    %1171 = vmatprep.subr.bf16.mxu0 0
    %1172 = vmatpush1.bf16.msra.mxu0 0
    %1173 = vmatprep.subr.bf16.mxu0 0
    %1174 = vmatpush1.bf16.msra.mxu0 0
    %1175 = vmatprep.mubr.bf16.mxu0 0
    %1176 = vmatmul.mubr.bf16.gmra.mrb[0].mxu0 %v1069
    %v1177 = vpop.f32.mrb[0].mxu0
    %v1178 = vadd.f32 %v1093, %v1177
    %v1179 = vpop.f32.mrb[0].mxu0
    %v1180 = vpop.f32.mrb[0].mxu0
    %v1181 = vpop.f32.mrb[0].mxu0
    %1182 = vdwg.mxu0
    %v1183 = vmax.f32 %v1178, 0.0
    %v1184 = vpack.c.bf16 %v1183, %v1183
    %s1185 = scalar_lea.vmem [#allocation2], 640
    %v1186 = vld [vmem:[%s1185] sm:$0xf]
    %v1187 = vld [vmem:[%s1185 + $0x4] sm:$0xf]
    %v1188 = vld [vmem:[%s1185 + $0x8] sm:$0xf]
    %v1189 = vld [vmem:[%s1185 + $0xc] sm:$0xf]
    %v1190 = vld [vmem:[%s1185 + $0x10] sm:$0xf]
    %v1191 = vld [vmem:[%s1185 + $0x14] sm:$0xf]
    %v1192 = vld [vmem:[%s1185 + $0x18] sm:$0xf]
    %v1193 = vld [vmem:[%s1185 + $0x1c] sm:$0xf]
    %v1194 = vld [vmem:[%s1185 + $0x20] sm:$0xf]
    %v1195 = vld [vmem:[%s1185 + $0x24] sm:$0xf]
    %v1196 = vld [vmem:[%s1185 + $0x28] sm:$0xf]
    %v1197 = vld [vmem:[%s1185 + $0x2c] sm:$0xf]
    %v1198 = vld [vmem:[%s1185 + $0x30] sm:$0xf]
    %v1199 = vld [vmem:[%s1185 + $0x34] sm:$0xf]
    %v1200 = vld [vmem:[%s1185 + $0x38] sm:$0xf]
    %v1201 = vld [vmem:[%s1185 + $0x3c] sm:$0xf]
    %s1202 = scalar_lea.vmem %s2, 10
    %v1203 = vld [vmem:[%s1202] sm:$0x1]
    %v1205 = vlaneseq
    %v1206 = vshrl.u32 %v1205, 7
    %v1207 = vsub.s32 0, %v1206
    %v1208 = vrot.slane %v1203, %v1207
    %v1226 = vunpack.c.l.b16 %v1186
    %v1227 = vunpack.c.l.b16 %v1187
    %v1228 = vunpack.c.l.b16 %v1188
    %v1229 = vunpack.c.l.b16 %v1189
    %v1230 = vunpack.c.l.b16 %v1190
    %v1231 = vunpack.c.l.b16 %v1191
    %v1232 = vunpack.c.l.b16 %v1192
    %v1233 = vunpack.c.l.b16 %v1193
    %v1234 = vunpack.c.l.b16 %v1194
    %v1235 = vunpack.c.l.b16 %v1195
    %v1236 = vunpack.c.l.b16 %v1196
    %v1237 = vunpack.c.l.b16 %v1197
    %v1238 = vunpack.c.l.b16 %v1198
    %v1239 = vunpack.c.l.b16 %v1199
    %v1240 = vunpack.c.l.b16 %v1200
    %v1241 = vunpack.c.l.b16 %v1201
    %v1242 = vpack.c.b16 %v1227, %v1226
    %v1243 = vpack.c.b16 %v1229, %v1228
    %v1244 = vpack.c.b16 %v1231, %v1230
    %v1245 = vpack.c.b16 %v1233, %v1232
    %v1246 = vpack.c.b16 %v1235, %v1234
    %v1247 = vpack.c.b16 %v1237, %v1236
    %v1248 = vpack.c.b16 %v1239, %v1238
    %v1249 = vpack.c.b16 %v1241, %v1240
    %1258 = vmatprep.subr.bf16.mxu0 0
    %1259 = vmatpush1.bf16.msra.mxu0 %v1242
    %1260 = vmatprep.subr.bf16.mxu0 0
    %1261 = vmatpush1.bf16.msra.mxu0 %v1243
    %1262 = vmatprep.subr.bf16.mxu0 0
    %1263 = vmatpush1.bf16.msra.mxu0 %v1244
    %1264 = vmatprep.subr.bf16.mxu0 0
    %1265 = vmatpush1.bf16.msra.mxu0 %v1245
    %1266 = vmatprep.subr.bf16.mxu0 0
    %1267 = vmatpush1.bf16.msra.mxu0 %v1246
    %1268 = vmatprep.subr.bf16.mxu0 0
    %1269 = vmatpush1.bf16.msra.mxu0 %v1247
    %1270 = vmatprep.subr.bf16.mxu0 0
    %1271 = vmatpush1.bf16.msra.mxu0 %v1248
    %1272 = vmatprep.subr.bf16.mxu0 0
    %1273 = vmatpush1.bf16.msra.mxu0 %v1249
    %1274 = vmatprep.subr.bf16.mxu0 0
    %1275 = vmatpush1.bf16.msra.mxu0 0
    %1276 = vmatprep.subr.bf16.mxu0 0
    %1277 = vmatpush1.bf16.msra.mxu0 0
    %1278 = vmatprep.subr.bf16.mxu0 0
    %1279 = vmatpush1.bf16.msra.mxu0 0
    %1280 = vmatprep.subr.bf16.mxu0 0
    %1281 = vmatpush1.bf16.msra.mxu0 0
    %1282 = vmatprep.subr.bf16.mxu0 0
    %1283 = vmatpush1.bf16.msra.mxu0 0
    %1284 = vmatprep.subr.bf16.mxu0 0
    %1285 = vmatpush1.bf16.msra.mxu0 0
    %1286 = vmatprep.subr.bf16.mxu0 0
    %1287 = vmatpush1.bf16.msra.mxu0 0
    %1288 = vmatprep.subr.bf16.mxu0 0
    %1289 = vmatpush1.bf16.msra.mxu0 0
    %1290 = vmatprep.mubr.bf16.mxu0 0
    %1291 = vmatmul.mubr.bf16.gmra.mrb[0].mxu0 %v1184
    %v1292 = vpop.f32.mrb[0].mxu0
    %v1293 = vadd.f32 %v1208, %v1292
    %v1294 = vpop.f32.mrb[0].mxu0
    %v1295 = vpop.f32.mrb[0].mxu0
    %v1296 = vpop.f32.mrb[0].mxu0
    %1297 = vdwg.mxu0
    %v1298 = vmax.f32 %v1293, 0.0
    %v1299 = vpack.c.bf16 %v1298, %v1298
    %s1300 = scalar_lea.vmem [#allocation2], 704
    %v1301 = vld [vmem:[%s1300] sm:$0xf]
    %v1302 = vld [vmem:[%s1300 + $0x4] sm:$0xf]
    %v1303 = vld [vmem:[%s1300 + $0x8] sm:$0xf]
    %v1304 = vld [vmem:[%s1300 + $0xc] sm:$0xf]
    %v1305 = vld [vmem:[%s1300 + $0x10] sm:$0xf]
    %v1306 = vld [vmem:[%s1300 + $0x14] sm:$0xf]
    %v1307 = vld [vmem:[%s1300 + $0x18] sm:$0xf]
    %v1308 = vld [vmem:[%s1300 + $0x1c] sm:$0xf]
    %v1309 = vld [vmem:[%s1300 + $0x20] sm:$0xf]
    %v1310 = vld [vmem:[%s1300 + $0x24] sm:$0xf]
    %v1311 = vld [vmem:[%s1300 + $0x28] sm:$0xf]
    %v1312 = vld [vmem:[%s1300 + $0x2c] sm:$0xf]
    %v1313 = vld [vmem:[%s1300 + $0x30] sm:$0xf]
    %v1314 = vld [vmem:[%s1300 + $0x34] sm:$0xf]
    %v1315 = vld [vmem:[%s1300 + $0x38] sm:$0xf]
    %v1316 = vld [vmem:[%s1300 + $0x3c] sm:$0xf]
    %s1317 = scalar_lea.vmem %s2, 11
    %v1318 = vld [vmem:[%s1317] sm:$0x1]
    %v1320 = vlaneseq
    %v1321 = vshrl.u32 %v1320, 7
    %v1322 = vsub.s32 0, %v1321
    %v1323 = vrot.slane %v1318, %v1322
    %v1341 = vunpack.c.l.b16 %v1301
    %v1342 = vunpack.c.l.b16 %v1302
    %v1343 = vunpack.c.l.b16 %v1303
    %v1344 = vunpack.c.l.b16 %v1304
    %v1345 = vunpack.c.l.b16 %v1305
    %v1346 = vunpack.c.l.b16 %v1306
    %v1347 = vunpack.c.l.b16 %v1307
    %v1348 = vunpack.c.l.b16 %v1308
    %v1349 = vunpack.c.l.b16 %v1309
    %v1350 = vunpack.c.l.b16 %v1310
    %v1351 = vunpack.c.l.b16 %v1311
    %v1352 = vunpack.c.l.b16 %v1312
    %v1353 = vunpack.c.l.b16 %v1313
    %v1354 = vunpack.c.l.b16 %v1314
    %v1355 = vunpack.c.l.b16 %v1315
    %v1356 = vunpack.c.l.b16 %v1316
    %v1357 = vpack.c.b16 %v1342, %v1341
    %v1358 = vpack.c.b16 %v1344, %v1343
    %v1359 = vpack.c.b16 %v1346, %v1345
    %v1360 = vpack.c.b16 %v1348, %v1347
    %v1361 = vpack.c.b16 %v1350, %v1349
    %v1362 = vpack.c.b16 %v1352, %v1351
    %v1363 = vpack.c.b16 %v1354, %v1353
    %v1364 = vpack.c.b16 %v1356, %v1355
    %1373 = vmatprep.subr.bf16.mxu0 0
    %1374 = vmatpush1.bf16.msra.mxu0 %v1357
    %1375 = vmatprep.subr.bf16.mxu0 0
    %1376 = vmatpush1.bf16.msra.mxu0 %v1358
    %1377 = vmatprep.subr.bf16.mxu0 0
    %1378 = vmatpush1.bf16.msra.mxu0 %v1359
    %1379 = vmatprep.subr.bf16.mxu0 0
    %1380 = vmatpush1.bf16.msra.mxu0 %v1360
    %1381 = vmatprep.subr.bf16.mxu0 0
    %1382 = vmatpush1.bf16.msra.mxu0 %v1361
    %1383 = vmatprep.subr.bf16.mxu0 0
    %1384 = vmatpush1.bf16.msra.mxu0 %v1362
    %1385 = vmatprep.subr.bf16.mxu0 0
    %1386 = vmatpush1.bf16.msra.mxu0 %v1363
    %1387 = vmatprep.subr.bf16.mxu0 0
    %1388 = vmatpush1.bf16.msra.mxu0 %v1364
    %1389 = vmatprep.subr.bf16.mxu0 0
    %1390 = vmatpush1.bf16.msra.mxu0 0
    %1391 = vmatprep.subr.bf16.mxu0 0
    %1392 = vmatpush1.bf16.msra.mxu0 0
    %1393 = vmatprep.subr.bf16.mxu0 0
    %1394 = vmatpush1.bf16.msra.mxu0 0
    %1395 = vmatprep.subr.bf16.mxu0 0
    %1396 = vmatpush1.bf16.msra.mxu0 0
    %1397 = vmatprep.subr.bf16.mxu0 0
    %1398 = vmatpush1.bf16.msra.mxu0 0
    %1399 = vmatprep.subr.bf16.mxu0 0
    %1400 = vmatpush1.bf16.msra.mxu0 0
    %1401 = vmatprep.subr.bf16.mxu0 0
    %1402 = vmatpush1.bf16.msra.mxu0 0
    %1403 = vmatprep.subr.bf16.mxu0 0
    %1404 = vmatpush1.bf16.msra.mxu0 0
    %1405 = vmatprep.mubr.bf16.mxu0 0
    %1406 = vmatmul.mubr.bf16.gmra.mrb[0].mxu0 %v1299
    %v1407 = vpop.f32.mrb[0].mxu0
    %v1408 = vadd.f32 %v1323, %v1407
    %v1409 = vpop.f32.mrb[0].mxu0
    %v1410 = vpop.f32.mrb[0].mxu0
    %v1411 = vpop.f32.mrb[0].mxu0
    %1412 = vdwg.mxu0
    %v1413 = vpack.c.bf16 %v1408, %v1408
    %v1414 = vtanh.bf16.pop %v1413
    %s1415 = scalar_lea.vmem [#allocation2], 768
    %v1416 = vld [vmem:[%s1415] sm:$0xf]
    %v1417 = vld [vmem:[%s1415 + $0x4] sm:$0xf]
    %v1418 = vld [vmem:[%s1415 + $0x8] sm:$0xf]
    %v1419 = vld [vmem:[%s1415 + $0xc] sm:$0xf]
    %v1420 = vld [vmem:[%s1415 + $0x10] sm:$0xf]
    %v1421 = vld [vmem:[%s1415 + $0x14] sm:$0xf]
    %v1422 = vld [vmem:[%s1415 + $0x18] sm:$0xf]
    %v1423 = vld [vmem:[%s1415 + $0x1c] sm:$0xf]
    %v1424 = vld [vmem:[%s1415 + $0x20] sm:$0xf]
    %v1425 = vld [vmem:[%s1415 + $0x24] sm:$0xf]
    %v1426 = vld [vmem:[%s1415 + $0x28] sm:$0xf]
    %v1427 = vld [vmem:[%s1415 + $0x2c] sm:$0xf]
    %v1428 = vld [vmem:[%s1415 + $0x30] sm:$0xf]
    %v1429 = vld [vmem:[%s1415 + $0x34] sm:$0xf]
    %v1430 = vld [vmem:[%s1415 + $0x38] sm:$0xf]
    %v1431 = vld [vmem:[%s1415 + $0x3c] sm:$0xf]
    %s1432 = scalar_lea.vmem %s2, 12
    %v1433 = vld [vmem:[%s1432] sm:$0x1]
    %v1435 = vlaneseq
    %v1436 = vshrl.u32 %v1435, 7
    %v1437 = vsub.s32 0, %v1436
    %v1438 = vrot.slane %v1433, %v1437
    %v1456 = vunpack.c.l.b16 %v1416
    %v1457 = vunpack.c.l.b16 %v1417
    %v1458 = vunpack.c.l.b16 %v1418
    %v1459 = vunpack.c.l.b16 %v1419
    %v1460 = vunpack.c.l.b16 %v1420
    %v1461 = vunpack.c.l.b16 %v1421
    %v1462 = vunpack.c.l.b16 %v1422
    %v1463 = vunpack.c.l.b16 %v1423
    %v1464 = vunpack.c.l.b16 %v1424
    %v1465 = vunpack.c.l.b16 %v1425
    %v1466 = vunpack.c.l.b16 %v1426
    %v1467 = vunpack.c.l.b16 %v1427
    %v1468 = vunpack.c.l.b16 %v1428
    %v1469 = vunpack.c.l.b16 %v1429
    %v1470 = vunpack.c.l.b16 %v1430
    %v1471 = vunpack.c.l.b16 %v1431
    %v1472 = vpack.c.b16 %v1457, %v1456
    %v1473 = vpack.c.b16 %v1459, %v1458
    %v1474 = vpack.c.b16 %v1461, %v1460
    %v1475 = vpack.c.b16 %v1463, %v1462
    %v1476 = vpack.c.b16 %v1465, %v1464
    %v1477 = vpack.c.b16 %v1467, %v1466
    %v1478 = vpack.c.b16 %v1469, %v1468
    %v1479 = vpack.c.b16 %v1471, %v1470
    %1488 = vmatprep.subr.bf16.mxu0 0
    %1489 = vmatpush1.bf16.msra.mxu0 %v1472
    %1490 = vmatprep.subr.bf16.mxu0 0
    %1491 = vmatpush1.bf16.msra.mxu0 %v1473
    %1492 = vmatprep.subr.bf16.mxu0 0
    %1493 = vmatpush1.bf16.msra.mxu0 %v1474
    %1494 = vmatprep.subr.bf16.mxu0 0
    %1495 = vmatpush1.bf16.msra.mxu0 %v1475
    %1496 = vmatprep.subr.bf16.mxu0 0
    %1497 = vmatpush1.bf16.msra.mxu0 %v1476
    %1498 = vmatprep.subr.bf16.mxu0 0
    %1499 = vmatpush1.bf16.msra.mxu0 %v1477
    %1500 = vmatprep.subr.bf16.mxu0 0
    %1501 = vmatpush1.bf16.msra.mxu0 %v1478
    %1502 = vmatprep.subr.bf16.mxu0 0
    %1503 = vmatpush1.bf16.msra.mxu0 %v1479
    %1504 = vmatprep.subr.bf16.mxu0 0
    %1505 = vmatpush1.bf16.msra.mxu0 0
    %1506 = vmatprep.subr.bf16.mxu0 0
    %1507 = vmatpush1.bf16.msra.mxu0 0
    %1508 = vmatprep.subr.bf16.mxu0 0
    %1509 = vmatpush1.bf16.msra.mxu0 0
    %1510 = vmatprep.subr.bf16.mxu0 0
    %1511 = vmatpush1.bf16.msra.mxu0 0
    %1512 = vmatprep.subr.bf16.mxu0 0
    %1513 = vmatpush1.bf16.msra.mxu0 0
    %1514 = vmatprep.subr.bf16.mxu0 0
    %1515 = vmatpush1.bf16.msra.mxu0 0
    %1516 = vmatprep.subr.bf16.mxu0 0
    %1517 = vmatpush1.bf16.msra.mxu0 0
    %1518 = vmatprep.subr.bf16.mxu0 0
    %1519 = vmatpush1.bf16.msra.mxu0 0
    %1520 = vmatprep.mubr.bf16.mxu0 0
    %1521 = vmatmul.mubr.bf16.gmra.mrb[0].mxu0 %v1414
    %v1522 = vpop.f32.mrb[0].mxu0
    %v1523 = vadd.f32 %v1438, %v1522
    %v1524 = vpop.f32.mrb[0].mxu0
    %v1525 = vpop.f32.mrb[0].mxu0
    %v1526 = vpop.f32.mrb[0].mxu0
    %1527 = vdwg.mxu0
    %v1528 = vpack.c.bf16 %v1523, %v1523
    %v1529 = vtanh.bf16.pop %v1528
    %s1530 = scalar_lea.vmem [#allocation2], 832
    %v1531 = vld [vmem:[%s1530] sm:$0xf]
    %v1532 = vld [vmem:[%s1530 + $0x4] sm:$0xf]
    %v1533 = vld [vmem:[%s1530 + $0x8] sm:$0xf]
    %v1534 = vld [vmem:[%s1530 + $0xc] sm:$0xf]
    %v1535 = vld [vmem:[%s1530 + $0x10] sm:$0xf]
    %v1536 = vld [vmem:[%s1530 + $0x14] sm:$0xf]
    %v1537 = vld [vmem:[%s1530 + $0x18] sm:$0xf]
    %v1538 = vld [vmem:[%s1530 + $0x1c] sm:$0xf]
    %v1539 = vld [vmem:[%s1530 + $0x20] sm:$0xf]
    %v1540 = vld [vmem:[%s1530 + $0x24] sm:$0xf]
    %v1541 = vld [vmem:[%s1530 + $0x28] sm:$0xf]
    %v1542 = vld [vmem:[%s1530 + $0x2c] sm:$0xf]
    %v1543 = vld [vmem:[%s1530 + $0x30] sm:$0xf]
    %v1544 = vld [vmem:[%s1530 + $0x34] sm:$0xf]
    %v1545 = vld [vmem:[%s1530 + $0x38] sm:$0xf]
    %v1546 = vld [vmem:[%s1530 + $0x3c] sm:$0xf]
    %s1547 = scalar_lea.vmem %s2, 13
    %v1548 = vld [vmem:[%s1547] sm:$0x1]
    %v1550 = vlaneseq
    %v1551 = vshrl.u32 %v1550, 7
    %v1552 = vsub.s32 0, %v1551
    %v1553 = vrot.slane %v1548, %v1552
    %v1571 = vunpack.c.l.b16 %v1531
    %v1572 = vunpack.c.l.b16 %v1532
    %v1573 = vunpack.c.l.b16 %v1533
    %v1574 = vunpack.c.l.b16 %v1534
    %v1575 = vunpack.c.l.b16 %v1535
    %v1576 = vunpack.c.l.b16 %v1536
    %v1577 = vunpack.c.l.b16 %v1537
    %v1578 = vunpack.c.l.b16 %v1538
    %v1579 = vunpack.c.l.b16 %v1539
    %v1580 = vunpack.c.l.b16 %v1540
    %v1581 = vunpack.c.l.b16 %v1541
    %v1582 = vunpack.c.l.b16 %v1542
    %v1583 = vunpack.c.l.b16 %v1543
    %v1584 = vunpack.c.l.b16 %v1544
    %v1585 = vunpack.c.l.b16 %v1545
    %v1586 = vunpack.c.l.b16 %v1546
    %v1587 = vpack.c.b16 %v1572, %v1571
    %v1588 = vpack.c.b16 %v1574, %v1573
    %v1589 = vpack.c.b16 %v1576, %v1575
    %v1590 = vpack.c.b16 %v1578, %v1577
    %v1591 = vpack.c.b16 %v1580, %v1579
    %v1592 = vpack.c.b16 %v1582, %v1581
    %v1593 = vpack.c.b16 %v1584, %v1583
    %v1594 = vpack.c.b16 %v1586, %v1585
    %1603 = vmatprep.subr.bf16.mxu0 0
    %1604 = vmatpush1.bf16.msra.mxu0 %v1587
    %1605 = vmatprep.subr.bf16.mxu0 0
    %1606 = vmatpush1.bf16.msra.mxu0 %v1588
    %1607 = vmatprep.subr.bf16.mxu0 0
    %1608 = vmatpush1.bf16.msra.mxu0 %v1589
    %1609 = vmatprep.subr.bf16.mxu0 0
    %1610 = vmatpush1.bf16.msra.mxu0 %v1590
    %1611 = vmatprep.subr.bf16.mxu0 0
    %1612 = vmatpush1.bf16.msra.mxu0 %v1591
    %1613 = vmatprep.subr.bf16.mxu0 0
    %1614 = vmatpush1.bf16.msra.mxu0 %v1592
    %1615 = vmatprep.subr.bf16.mxu0 0
    %1616 = vmatpush1.bf16.msra.mxu0 %v1593
    %1617 = vmatprep.subr.bf16.mxu0 0
    %1618 = vmatpush1.bf16.msra.mxu0 %v1594
    %1619 = vmatprep.subr.bf16.mxu0 0
    %1620 = vmatpush1.bf16.msra.mxu0 0
    %1621 = vmatprep.subr.bf16.mxu0 0
    %1622 = vmatpush1.bf16.msra.mxu0 0
    %1623 = vmatprep.subr.bf16.mxu0 0
    %1624 = vmatpush1.bf16.msra.mxu0 0
    %1625 = vmatprep.subr.bf16.mxu0 0
    %1626 = vmatpush1.bf16.msra.mxu0 0
    %1627 = vmatprep.subr.bf16.mxu0 0
    %1628 = vmatpush1.bf16.msra.mxu0 0
    %1629 = vmatprep.subr.bf16.mxu0 0
    %1630 = vmatpush1.bf16.msra.mxu0 0
    %1631 = vmatprep.subr.bf16.mxu0 0
    %1632 = vmatpush1.bf16.msra.mxu0 0
    %1633 = vmatprep.subr.bf16.mxu0 0
    %1634 = vmatpush1.bf16.msra.mxu0 0
    %1635 = vmatprep.mubr.bf16.mxu0 0
    %1636 = vmatmul.mubr.bf16.gmra.mrb[0].mxu0 %v1529
    %v1637 = vpop.f32.mrb[0].mxu0
    %v1638 = vadd.f32 %v1553, %v1637
    %v1639 = vpop.f32.mrb[0].mxu0
    %v1640 = vpop.f32.mrb[0].mxu0
    %v1641 = vpop.f32.mrb[0].mxu0
    %1642 = vdwg.mxu0
    %v1643 = vpack.c.bf16 %v1638, %v1638
    %v1644 = vtanh.bf16.pop %v1643
    %v1645 = vsel %vm722, %v1644, %v1643
    %s1646 = scalar_lea.vmem [#allocation2], 896
    %v1647 = vld [vmem:[%s1646] sm:$0xf]
    %v1648 = vld [vmem:[%s1646 + $0x4] sm:$0xf]
    %v1649 = vld [vmem:[%s1646 + $0x8] sm:$0xf]
    %v1650 = vld [vmem:[%s1646 + $0xc] sm:$0xf]
    %v1651 = vld [vmem:[%s1646 + $0x10] sm:$0xf]
    %v1652 = vld [vmem:[%s1646 + $0x14] sm:$0xf]
    %v1653 = vld [vmem:[%s1646 + $0x18] sm:$0xf]
    %v1654 = vld [vmem:[%s1646 + $0x1c] sm:$0xf]
    %v1655 = vld [vmem:[%s1646 + $0x20] sm:$0xf]
    %v1656 = vld [vmem:[%s1646 + $0x24] sm:$0xf]
    %v1657 = vld [vmem:[%s1646 + $0x28] sm:$0xf]
    %v1658 = vld [vmem:[%s1646 + $0x2c] sm:$0xf]
    %v1659 = vld [vmem:[%s1646 + $0x30] sm:$0xf]
    %v1660 = vld [vmem:[%s1646 + $0x34] sm:$0xf]
    %v1661 = vld [vmem:[%s1646 + $0x38] sm:$0xf]
    %v1662 = vld [vmem:[%s1646 + $0x3c] sm:$0xf]
    %s1663 = scalar_lea.vmem %s2, 14
    %v1664 = vld [vmem:[%s1663] sm:$0x1]
    %v1666 = vlaneseq
    %v1667 = vshrl.u32 %v1666, 7
    %v1668 = vsub.s32 0, %v1667
    %v1669 = vrot.slane %v1664, %v1668
    %v1687 = vunpack.c.l.b16 %v1647
    %v1688 = vunpack.c.l.b16 %v1648
    %v1689 = vunpack.c.l.b16 %v1649
    %v1690 = vunpack.c.l.b16 %v1650
    %v1691 = vunpack.c.l.b16 %v1651
    %v1692 = vunpack.c.l.b16 %v1652
    %v1693 = vunpack.c.l.b16 %v1653
    %v1694 = vunpack.c.l.b16 %v1654
    %v1695 = vunpack.c.l.b16 %v1655
    %v1696 = vunpack.c.l.b16 %v1656
    %v1697 = vunpack.c.l.b16 %v1657
    %v1698 = vunpack.c.l.b16 %v1658
    %v1699 = vunpack.c.l.b16 %v1659
    %v1700 = vunpack.c.l.b16 %v1660
    %v1701 = vunpack.c.l.b16 %v1661
    %v1702 = vunpack.c.l.b16 %v1662
    %v1703 = vpack.c.b16 %v1688, %v1687
    %v1704 = vpack.c.b16 %v1690, %v1689
    %v1705 = vpack.c.b16 %v1692, %v1691
    %v1706 = vpack.c.b16 %v1694, %v1693
    %v1707 = vpack.c.b16 %v1696, %v1695
    %v1708 = vpack.c.b16 %v1698, %v1697
    %v1709 = vpack.c.b16 %v1700, %v1699
    %v1710 = vpack.c.b16 %v1702, %v1701
    %1719 = vmatprep.subr.bf16.mxu0 0
    %1720 = vmatpush1.bf16.msra.mxu0 %v1703
    %1721 = vmatprep.subr.bf16.mxu0 0
    %1722 = vmatpush1.bf16.msra.mxu0 %v1704
    %1723 = vmatprep.subr.bf16.mxu0 0
    %1724 = vmatpush1.bf16.msra.mxu0 %v1705
    %1725 = vmatprep.subr.bf16.mxu0 0
    %1726 = vmatpush1.bf16.msra.mxu0 %v1706
    %1727 = vmatprep.subr.bf16.mxu0 0
    %1728 = vmatpush1.bf16.msra.mxu0 %v1707
    %1729 = vmatprep.subr.bf16.mxu0 0
    %1730 = vmatpush1.bf16.msra.mxu0 %v1708
    %1731 = vmatprep.subr.bf16.mxu0 0
    %1732 = vmatpush1.bf16.msra.mxu0 %v1709
    %1733 = vmatprep.subr.bf16.mxu0 0
    %1734 = vmatpush1.bf16.msra.mxu0 %v1710
    %1735 = vmatprep.subr.bf16.mxu0 0
    %1736 = vmatpush1.bf16.msra.mxu0 0
    %1737 = vmatprep.subr.bf16.mxu0 0
    %1738 = vmatpush1.bf16.msra.mxu0 0
    %1739 = vmatprep.subr.bf16.mxu0 0
    %1740 = vmatpush1.bf16.msra.mxu0 0
    %1741 = vmatprep.subr.bf16.mxu0 0
    %1742 = vmatpush1.bf16.msra.mxu0 0
    %1743 = vmatprep.subr.bf16.mxu0 0
    %1744 = vmatpush1.bf16.msra.mxu0 0
    %1745 = vmatprep.subr.bf16.mxu0 0
    %1746 = vmatpush1.bf16.msra.mxu0 0
    %1747 = vmatprep.subr.bf16.mxu0 0
    %1748 = vmatpush1.bf16.msra.mxu0 0
    %1749 = vmatprep.subr.bf16.mxu0 0
    %1750 = vmatpush1.bf16.msra.mxu0 0
    %1751 = vmatprep.mubr.bf16.mxu0 0
    %1752 = vmatmul.mubr.bf16.gmra.mrb[0].mxu0 %v1645
    %v1753 = vpop.f32.mrb[0].mxu0
    %v1754 = vadd.f32 %v1669, %v1753
    %v1755 = vpop.f32.mrb[0].mxu0
    %v1756 = vpop.f32.mrb[0].mxu0
    %v1757 = vpop.f32.mrb[0].mxu0
    %1758 = vdwg.mxu0
    %v1759 = vpack.c.bf16 %v1754, %v1754
    %v1760 = vtanh.bf16.pop %v1759
    %s1761 = scalar_lea.vmem [#allocation2], 960
    %v1762 = vld [vmem:[%s1761] sm:$0xf]
    %v1763 = vld [vmem:[%s1761 + $0x4] sm:$0xf]
    %v1764 = vld [vmem:[%s1761 + $0x8] sm:$0xf]
    %v1765 = vld [vmem:[%s1761 + $0xc] sm:$0xf]
    %v1766 = vld [vmem:[%s1761 + $0x10] sm:$0xf]
    %v1767 = vld [vmem:[%s1761 + $0x14] sm:$0xf]
    %v1768 = vld [vmem:[%s1761 + $0x18] sm:$0xf]
    %v1769 = vld [vmem:[%s1761 + $0x1c] sm:$0xf]
    %v1770 = vld [vmem:[%s1761 + $0x20] sm:$0xf]
    %v1771 = vld [vmem:[%s1761 + $0x24] sm:$0xf]
    %v1772 = vld [vmem:[%s1761 + $0x28] sm:$0xf]
    %v1773 = vld [vmem:[%s1761 + $0x2c] sm:$0xf]
    %v1774 = vld [vmem:[%s1761 + $0x30] sm:$0xf]
    %v1775 = vld [vmem:[%s1761 + $0x34] sm:$0xf]
    %v1776 = vld [vmem:[%s1761 + $0x38] sm:$0xf]
    %v1777 = vld [vmem:[%s1761 + $0x3c] sm:$0xf]
    %s1778 = scalar_lea.vmem %s2, 15
    %v1779 = vld [vmem:[%s1778] sm:$0x1]
    %v1781 = vlaneseq
    %v1782 = vshrl.u32 %v1781, 7
    %v1783 = vsub.s32 0, %v1782
    %v1784 = vrot.slane %v1779, %v1783
    %v1802 = vunpack.c.l.b16 %v1762
    %v1803 = vunpack.c.l.b16 %v1763
    %v1804 = vunpack.c.l.b16 %v1764
    %v1805 = vunpack.c.l.b16 %v1765
    %v1806 = vunpack.c.l.b16 %v1766
    %v1807 = vunpack.c.l.b16 %v1767
    %v1808 = vunpack.c.l.b16 %v1768
    %v1809 = vunpack.c.l.b16 %v1769
    %v1810 = vunpack.c.l.b16 %v1770
    %v1811 = vunpack.c.l.b16 %v1771
    %v1812 = vunpack.c.l.b16 %v1772
    %v1813 = vunpack.c.l.b16 %v1773
    %v1814 = vunpack.c.l.b16 %v1774
    %v1815 = vunpack.c.l.b16 %v1775
    %v1816 = vunpack.c.l.b16 %v1776
    %v1817 = vunpack.c.l.b16 %v1777
    %v1818 = vpack.c.b16 %v1803, %v1802
    %v1819 = vpack.c.b16 %v1805, %v1804
    %v1820 = vpack.c.b16 %v1807, %v1806
    %v1821 = vpack.c.b16 %v1809, %v1808
    %v1822 = vpack.c.b16 %v1811, %v1810
    %v1823 = vpack.c.b16 %v1813, %v1812
    %v1824 = vpack.c.b16 %v1815, %v1814
    %v1825 = vpack.c.b16 %v1817, %v1816
    %1834 = vmatprep.subr.bf16.mxu0 0
    %1835 = vmatpush1.bf16.msra.mxu0 %v1818
    %1836 = vmatprep.subr.bf16.mxu0 0
    %1837 = vmatpush1.bf16.msra.mxu0 %v1819
    %1838 = vmatprep.subr.bf16.mxu0 0
    %1839 = vmatpush1.bf16.msra.mxu0 %v1820
    %1840 = vmatprep.subr.bf16.mxu0 0
    %1841 = vmatpush1.bf16.msra.mxu0 %v1821
    %1842 = vmatprep.subr.bf16.mxu0 0
    %1843 = vmatpush1.bf16.msra.mxu0 %v1822
    %1844 = vmatprep.subr.bf16.mxu0 0
    %1845 = vmatpush1.bf16.msra.mxu0 %v1823
    %1846 = vmatprep.subr.bf16.mxu0 0
    %1847 = vmatpush1.bf16.msra.mxu0 %v1824
    %1848 = vmatprep.subr.bf16.mxu0 0
    %1849 = vmatpush1.bf16.msra.mxu0 %v1825
    %1850 = vmatprep.subr.bf16.mxu0 0
    %1851 = vmatpush1.bf16.msra.mxu0 0
    %1852 = vmatprep.subr.bf16.mxu0 0
    %1853 = vmatpush1.bf16.msra.mxu0 0
    %1854 = vmatprep.subr.bf16.mxu0 0
    %1855 = vmatpush1.bf16.msra.mxu0 0
    %1856 = vmatprep.subr.bf16.mxu0 0
    %1857 = vmatpush1.bf16.msra.mxu0 0
    %1858 = vmatprep.subr.bf16.mxu0 0
    %1859 = vmatpush1.bf16.msra.mxu0 0
    %1860 = vmatprep.subr.bf16.mxu0 0
    %1861 = vmatpush1.bf16.msra.mxu0 0
    %1862 = vmatprep.subr.bf16.mxu0 0
    %1863 = vmatpush1.bf16.msra.mxu0 0
    %1864 = vmatprep.subr.bf16.mxu0 0
    %1865 = vmatpush1.bf16.msra.mxu0 0
    %1866 = vmatprep.mubr.bf16.mxu0 0
    %1867 = vmatmul.mubr.bf16.gmra.mrb[0].mxu0 %v1760
    %v1868 = vpop.f32.mrb[0].mxu0
    %v1869 = vadd.f32 %v1784, %v1868
    %v1870 = vpop.f32.mrb[0].mxu0
    %v1871 = vpop.f32.mrb[0].mxu0
    %v1872 = vpop.f32.mrb[0].mxu0
    %1873 = vdwg.mxu0
    %v1874 = vunpack.c.l.bf16 %v954
    %v1875 = vadd.f32 %v1869, %v1874
    %s1876 = scalar_lea.vmem [#allocation2], 1024
    %v1877 = vld [vmem:[%s1876] sm:$0xf]
    %v1878 = vld [vmem:[%s1876 + $0x4] sm:$0xf]
    %v1879 = vld [vmem:[%s1876 + $0x8] sm:$0xf]
    %v1880 = vld [vmem:[%s1876 + $0xc] sm:$0xf]
    %v1881 = vld [vmem:[%s1876 + $0x10] sm:$0xf]
    %v1882 = vld [vmem:[%s1876 + $0x14] sm:$0xf]
    %v1883 = vld [vmem:[%s1876 + $0x18] sm:$0xf]
    %v1884 = vld [vmem:[%s1876 + $0x1c] sm:$0xf]
    %v1885 = vld [vmem:[%s1876 + $0x20] sm:$0xf]
    %v1886 = vld [vmem:[%s1876 + $0x24] sm:$0xf]
    %v1887 = vld [vmem:[%s1876 + $0x28] sm:$0xf]
    %v1888 = vld [vmem:[%s1876 + $0x2c] sm:$0xf]
    %v1889 = vld [vmem:[%s1876 + $0x30] sm:$0xf]
    %v1890 = vld [vmem:[%s1876 + $0x34] sm:$0xf]
    %v1891 = vld [vmem:[%s1876 + $0x38] sm:$0xf]
    %v1892 = vld [vmem:[%s1876 + $0x3c] sm:$0xf]
    %s1893 = scalar_lea.vmem %s2, 16
    %v1894 = vld [vmem:[%s1893] sm:$0x1]
    %v1896 = vlaneseq
    %v1897 = vshrl.u32 %v1896, 7
    %v1898 = vsub.s32 0, %v1897
    %v1899 = vrot.slane %v1894, %v1898
    %v1917 = vunpack.c.l.b16 %v1877
    %v1918 = vunpack.c.l.b16 %v1878
    %v1919 = vunpack.c.l.b16 %v1879
    %v1920 = vunpack.c.l.b16 %v1880
    %v1921 = vunpack.c.l.b16 %v1881
    %v1922 = vunpack.c.l.b16 %v1882
    %v1923 = vunpack.c.l.b16 %v1883
    %v1924 = vunpack.c.l.b16 %v1884
    %v1925 = vunpack.c.l.b16 %v1885
    %v1926 = vunpack.c.l.b16 %v1886
    %v1927 = vunpack.c.l.b16 %v1887
    %v1928 = vunpack.c.l.b16 %v1888
    %v1929 = vunpack.c.l.b16 %v1889
    %v1930 = vunpack.c.l.b16 %v1890
    %v1931 = vunpack.c.l.b16 %v1891
    %v1932 = vunpack.c.l.b16 %v1892
    %v1933 = vpack.c.b16 %v1918, %v1917
    %v1934 = vpack.c.b16 %v1920, %v1919
    %v1935 = vpack.c.b16 %v1922, %v1921
    %v1936 = vpack.c.b16 %v1924, %v1923
    %v1937 = vpack.c.b16 %v1926, %v1925
    %v1938 = vpack.c.b16 %v1928, %v1927
    %v1939 = vpack.c.b16 %v1930, %v1929
    %v1940 = vpack.c.b16 %v1932, %v1931
    %1949 = vmatprep.subr.bf16.mxu0 0
    %1950 = vmatpush1.bf16.msra.mxu0 %v1933
    %1951 = vmatprep.subr.bf16.mxu0 0
    %1952 = vmatpush1.bf16.msra.mxu0 %v1934
    %1953 = vmatprep.subr.bf16.mxu0 0
    %1954 = vmatpush1.bf16.msra.mxu0 %v1935
    %1955 = vmatprep.subr.bf16.mxu0 0
    %1956 = vmatpush1.bf16.msra.mxu0 %v1936
    %1957 = vmatprep.subr.bf16.mxu0 0
    %1958 = vmatpush1.bf16.msra.mxu0 %v1937
    %1959 = vmatprep.subr.bf16.mxu0 0
    %1960 = vmatpush1.bf16.msra.mxu0 %v1938
    %1961 = vmatprep.subr.bf16.mxu0 0
    %1962 = vmatpush1.bf16.msra.mxu0 %v1939
    %1963 = vmatprep.subr.bf16.mxu0 0
    %1964 = vmatpush1.bf16.msra.mxu0 %v1940
    %1965 = vmatprep.subr.bf16.mxu0 0
    %1966 = vmatpush1.bf16.msra.mxu0 0
    %1967 = vmatprep.subr.bf16.mxu0 0
    %1968 = vmatpush1.bf16.msra.mxu0 0
    %1969 = vmatprep.subr.bf16.mxu0 0
    %1970 = vmatpush1.bf16.msra.mxu0 0
    %1971 = vmatprep.subr.bf16.mxu0 0
    %1972 = vmatpush1.bf16.msra.mxu0 0
    %1973 = vmatprep.subr.bf16.mxu0 0
    %1974 = vmatpush1.bf16.msra.mxu0 0
    %1975 = vmatprep.subr.bf16.mxu0 0
    %1976 = vmatpush1.bf16.msra.mxu0 0
    %1977 = vmatprep.subr.bf16.mxu0 0
    %1978 = vmatpush1.bf16.msra.mxu0 0
    %1979 = vmatprep.subr.bf16.mxu0 0
    %1980 = vmatpush1.bf16.msra.mxu0 0
    %1981 = vmatprep.mubr.bf16.mxu0 0
    %1982 = vmatmul.mubr.bf16.gmra.mrb[0].mxu0 %v30
    %v1983 = vpop.f32.mrb[0].mxu0
    %v1984 = vadd.f32 %v1899, %v1983
    %v1985 = vpop.f32.mrb[0].mxu0
    %v1986 = vpop.f32.mrb[0].mxu0
    %v1987 = vpop.f32.mrb[0].mxu0
    %1988 = vdwg.mxu0
    %v1989 = vpack.c.bf16 %v1984, %v1984
    %v1990 = vtanh.bf16.pop %v1989
    %s1991 = scalar_lea.vmem [#allocation2], 1088
    %v1992 = vld [vmem:[%s1991] sm:$0xf]
    %v1993 = vld [vmem:[%s1991 + $0x4] sm:$0xf]
    %v1994 = vld [vmem:[%s1991 + $0x8] sm:$0xf]
    %v1995 = vld [vmem:[%s1991 + $0xc] sm:$0xf]
    %v1996 = vld [vmem:[%s1991 + $0x10] sm:$0xf]
    %v1997 = vld [vmem:[%s1991 + $0x14] sm:$0xf]
    %v1998 = vld [vmem:[%s1991 + $0x18] sm:$0xf]
    %v1999 = vld [vmem:[%s1991 + $0x1c] sm:$0xf]
    %v2000 = vld [vmem:[%s1991 + $0x20] sm:$0xf]
    %v2001 = vld [vmem:[%s1991 + $0x24] sm:$0xf]
    %v2002 = vld [vmem:[%s1991 + $0x28] sm:$0xf]
    %v2003 = vld [vmem:[%s1991 + $0x2c] sm:$0xf]
    %v2004 = vld [vmem:[%s1991 + $0x30] sm:$0xf]
    %v2005 = vld [vmem:[%s1991 + $0x34] sm:$0xf]
    %v2006 = vld [vmem:[%s1991 + $0x38] sm:$0xf]
    %v2007 = vld [vmem:[%s1991 + $0x3c] sm:$0xf]
    %v2024 = vunpack.c.l.b16 %v1992
    %v2025 = vunpack.c.l.b16 %v1993
    %v2026 = vunpack.c.l.b16 %v1994
    %v2027 = vunpack.c.l.b16 %v1995
    %v2028 = vunpack.c.l.b16 %v1996
    %v2029 = vunpack.c.l.b16 %v1997
    %v2030 = vunpack.c.l.b16 %v1998
    %v2031 = vunpack.c.l.b16 %v1999
    %v2032 = vunpack.c.l.b16 %v2000
    %v2033 = vunpack.c.l.b16 %v2001
    %v2034 = vunpack.c.l.b16 %v2002
    %v2035 = vunpack.c.l.b16 %v2003
    %v2036 = vunpack.c.l.b16 %v2004
    %v2037 = vunpack.c.l.b16 %v2005
    %v2038 = vunpack.c.l.b16 %v2006
    %v2039 = vunpack.c.l.b16 %v2007
    %v2040 = vpack.c.b16 %v2025, %v2024
    %v2041 = vpack.c.b16 %v2027, %v2026
    %v2042 = vpack.c.b16 %v2029, %v2028
    %v2043 = vpack.c.b16 %v2031, %v2030
    %v2044 = vpack.c.b16 %v2033, %v2032
    %v2045 = vpack.c.b16 %v2035, %v2034
    %v2046 = vpack.c.b16 %v2037, %v2036
    %v2047 = vpack.c.b16 %v2039, %v2038
    %2056 = vmatprep.subr.bf16.mxu0 0
    %2057 = vmatpush1.bf16.msra.mxu0 %v2040
    %2058 = vmatprep.subr.bf16.mxu0 0
    %2059 = vmatpush1.bf16.msra.mxu0 %v2041
    %2060 = vmatprep.subr.bf16.mxu0 0
    %2061 = vmatpush1.bf16.msra.mxu0 %v2042
    %2062 = vmatprep.subr.bf16.mxu0 0
    %2063 = vmatpush1.bf16.msra.mxu0 %v2043
    %2064 = vmatprep.subr.bf16.mxu0 0
    %2065 = vmatpush1.bf16.msra.mxu0 %v2044
    %2066 = vmatprep.subr.bf16.mxu0 0
    %2067 = vmatpush1.bf16.msra.mxu0 %v2045
    %2068 = vmatprep.subr.bf16.mxu0 0
    %2069 = vmatpush1.bf16.msra.mxu0 %v2046
    %2070 = vmatprep.subr.bf16.mxu0 0
    %2071 = vmatpush1.bf16.msra.mxu0 %v2047
    %2072 = vmatprep.subr.bf16.mxu0 0
    %2073 = vmatpush1.bf16.msra.mxu0 0
    %2074 = vmatprep.subr.bf16.mxu0 0
    %2075 = vmatpush1.bf16.msra.mxu0 0
    %2076 = vmatprep.subr.bf16.mxu0 0
    %2077 = vmatpush1.bf16.msra.mxu0 0
    %2078 = vmatprep.subr.bf16.mxu0 0
    %2079 = vmatpush1.bf16.msra.mxu0 0
    %2080 = vmatprep.subr.bf16.mxu0 0
    %2081 = vmatpush1.bf16.msra.mxu0 0
    %2082 = vmatprep.subr.bf16.mxu0 0
    %2083 = vmatpush1.bf16.msra.mxu0 0
    %2084 = vmatprep.subr.bf16.mxu0 0
    %2085 = vmatpush1.bf16.msra.mxu0 0
    %2086 = vmatprep.subr.bf16.mxu0 0
    %2087 = vmatpush1.bf16.msra.mxu0 0
    %2088 = vmatprep.mubr.bf16.mxu0 0
    %2089 = vmatmul.mubr.bf16.gmra.mrb[0].mxu0 %v30
    %v2090 = vpop.f32.mrb[0].mxu0
    %v2091 = vadd.f32 %v1899, %v2090
    %v2092 = vpop.f32.mrb[0].mxu0
    %v2093 = vpop.f32.mrb[0].mxu0
    %v2094 = vpop.f32.mrb[0].mxu0
    %2095 = vdwg.mxu0
    %v2096 = vpack.c.bf16 %v2091, %v2091
    %v2097 = vtanh.bf16.pop %v2096
    %s2098 = scalar_lea.vmem [#allocation2], 1152
    %v2099 = vld [vmem:[%s2098] sm:$0xf]
    %v2100 = vld [vmem:[%s2098 + $0x4] sm:$0xf]
    %v2101 = vld [vmem:[%s2098 + $0x8] sm:$0xf]
    %v2102 = vld [vmem:[%s2098 + $0xc] sm:$0xf]
    %v2103 = vld [vmem:[%s2098 + $0x10] sm:$0xf]
    %v2104 = vld [vmem:[%s2098 + $0x14] sm:$0xf]
    %v2105 = vld [vmem:[%s2098 + $0x18] sm:$0xf]
    %v2106 = vld [vmem:[%s2098 + $0x1c] sm:$0xf]
    %v2107 = vld [vmem:[%s2098 + $0x20] sm:$0xf]
    %v2108 = vld [vmem:[%s2098 + $0x24] sm:$0xf]
    %v2109 = vld [vmem:[%s2098 + $0x28] sm:$0xf]
    %v2110 = vld [vmem:[%s2098 + $0x2c] sm:$0xf]
    %v2111 = vld [vmem:[%s2098 + $0x30] sm:$0xf]
    %v2112 = vld [vmem:[%s2098 + $0x34] sm:$0xf]
    %v2113 = vld [vmem:[%s2098 + $0x38] sm:$0xf]
    %v2114 = vld [vmem:[%s2098 + $0x3c] sm:$0xf]
    %s2115 = scalar_lea.vmem [#allocation2], 1216
    %v2116 = vld [vmem:[%s2115] sm:$0xf]
    %v2117 = vld [vmem:[%s2115 + $0x4] sm:$0xf]
    %v2118 = vld [vmem:[%s2115 + $0x8] sm:$0xf]
    %v2119 = vld [vmem:[%s2115 + $0xc] sm:$0xf]
    %v2120 = vld [vmem:[%s2115 + $0x10] sm:$0xf]
    %v2121 = vld [vmem:[%s2115 + $0x14] sm:$0xf]
    %v2122 = vld [vmem:[%s2115 + $0x18] sm:$0xf]
    %v2123 = vld [vmem:[%s2115 + $0x1c] sm:$0xf]
    %v2124 = vld [vmem:[%s2115 + $0x20] sm:$0xf]
    %v2125 = vld [vmem:[%s2115 + $0x24] sm:$0xf]
    %v2126 = vld [vmem:[%s2115 + $0x28] sm:$0xf]
    %v2127 = vld [vmem:[%s2115 + $0x2c] sm:$0xf]
    %v2128 = vld [vmem:[%s2115 + $0x30] sm:$0xf]
    %v2129 = vld [vmem:[%s2115 + $0x34] sm:$0xf]
    %v2130 = vld [vmem:[%s2115 + $0x38] sm:$0xf]
    %v2131 = vld [vmem:[%s2115 + $0x3c] sm:$0xf]
    %v2148 = vunpack.c.l.b16 %v2116
    %v2149 = vunpack.c.l.b16 %v2117
    %v2150 = vunpack.c.l.b16 %v2118
    %v2151 = vunpack.c.l.b16 %v2119
    %v2152 = vunpack.c.l.b16 %v2120
    %v2153 = vunpack.c.l.b16 %v2121
    %v2154 = vunpack.c.l.b16 %v2122
    %v2155 = vunpack.c.l.b16 %v2123
    %v2156 = vunpack.c.l.b16 %v2124
    %v2157 = vunpack.c.l.b16 %v2125
    %v2158 = vunpack.c.l.b16 %v2126
    %v2159 = vunpack.c.l.b16 %v2127
    %v2160 = vunpack.c.l.b16 %v2128
    %v2161 = vunpack.c.l.b16 %v2129
    %v2162 = vunpack.c.l.b16 %v2130
    %v2163 = vunpack.c.l.b16 %v2131
    %v2164 = vpack.c.b16 %v2149, %v2148
    %v2165 = vpack.c.b16 %v2151, %v2150
    %v2166 = vpack.c.b16 %v2153, %v2152
    %v2167 = vpack.c.b16 %v2155, %v2154
    %v2168 = vpack.c.b16 %v2157, %v2156
    %v2169 = vpack.c.b16 %v2159, %v2158
    %v2170 = vpack.c.b16 %v2161, %v2160
    %v2171 = vpack.c.b16 %v2163, %v2162
    %2180 = vmatprep.subr.bf16.mxu0 0
    %2181 = vmatpush1.bf16.msra.mxu0 %v2164
    %2182 = vmatprep.subr.bf16.mxu0 0
    %2183 = vmatpush1.bf16.msra.mxu0 %v2165
    %2184 = vmatprep.subr.bf16.mxu0 0
    %2185 = vmatpush1.bf16.msra.mxu0 %v2166
    %2186 = vmatprep.subr.bf16.mxu0 0
    %2187 = vmatpush1.bf16.msra.mxu0 %v2167
    %2188 = vmatprep.subr.bf16.mxu0 0
    %2189 = vmatpush1.bf16.msra.mxu0 %v2168
    %2190 = vmatprep.subr.bf16.mxu0 0
    %2191 = vmatpush1.bf16.msra.mxu0 %v2169
    %2192 = vmatprep.subr.bf16.mxu0 0
    %2193 = vmatpush1.bf16.msra.mxu0 %v2170
    %2194 = vmatprep.subr.bf16.mxu0 0
    %2195 = vmatpush1.bf16.msra.mxu0 %v2171
    %2196 = vmatprep.subr.bf16.mxu0 0
    %2197 = vmatpush1.bf16.msra.mxu0 0
    %2198 = vmatprep.subr.bf16.mxu0 0
    %2199 = vmatpush1.bf16.msra.mxu0 0
    %2200 = vmatprep.subr.bf16.mxu0 0
    %2201 = vmatpush1.bf16.msra.mxu0 0
    %2202 = vmatprep.subr.bf16.mxu0 0
    %2203 = vmatpush1.bf16.msra.mxu0 0
    %2204 = vmatprep.subr.bf16.mxu0 0
    %2205 = vmatpush1.bf16.msra.mxu0 0
    %2206 = vmatprep.subr.bf16.mxu0 0
    %2207 = vmatpush1.bf16.msra.mxu0 0
    %2208 = vmatprep.subr.bf16.mxu0 0
    %2209 = vmatpush1.bf16.msra.mxu0 0
    %2210 = vmatprep.subr.bf16.mxu0 0
    %2211 = vmatpush1.bf16.msra.mxu0 0
    %2212 = vmatprep.mubr.bf16.mxu0 0
    %2213 = vmatmul.mubr.bf16.gmra.mrb[0].mxu0 %v2097
    %v2214 = vpop.f32.mrb[0].mxu0
    %v2215 = vadd.f32 0.0, %v2214
    %v2216 = vpop.f32.mrb[0].mxu0
    %v2217 = vpop.f32.mrb[0].mxu0
    %v2218 = vpop.f32.mrb[0].mxu0
    %2219 = vdwg.mxu0
    %v2236 = vunpack.c.l.b16 %v2099
    %v2237 = vunpack.c.l.b16 %v2100
    %v2238 = vunpack.c.l.b16 %v2101
    %v2239 = vunpack.c.l.b16 %v2102
    %v2240 = vunpack.c.l.b16 %v2103
    %v2241 = vunpack.c.l.b16 %v2104
    %v2242 = vunpack.c.l.b16 %v2105
    %v2243 = vunpack.c.l.b16 %v2106
    %v2244 = vunpack.c.l.b16 %v2107
    %v2245 = vunpack.c.l.b16 %v2108
    %v2246 = vunpack.c.l.b16 %v2109
    %v2247 = vunpack.c.l.b16 %v2110
    %v2248 = vunpack.c.l.b16 %v2111
    %v2249 = vunpack.c.l.b16 %v2112
    %v2250 = vunpack.c.l.b16 %v2113
    %v2251 = vunpack.c.l.b16 %v2114
    %v2252 = vpack.c.b16 %v2237, %v2236
    %v2253 = vpack.c.b16 %v2239, %v2238
    %v2254 = vpack.c.b16 %v2241, %v2240
    %v2255 = vpack.c.b16 %v2243, %v2242
    %v2256 = vpack.c.b16 %v2245, %v2244
    %v2257 = vpack.c.b16 %v2247, %v2246
    %v2258 = vpack.c.b16 %v2249, %v2248
    %v2259 = vpack.c.b16 %v2251, %v2250
    %2268 = vmatprep.subr.bf16.mxu0 0
    %2269 = vmatpush1.bf16.msra.mxu0 %v2252
    %2270 = vmatprep.subr.bf16.mxu0 0
    %2271 = vmatpush1.bf16.msra.mxu0 %v2253
    %2272 = vmatprep.subr.bf16.mxu0 0
    %2273 = vmatpush1.bf16.msra.mxu0 %v2254
    %2274 = vmatprep.subr.bf16.mxu0 0
    %2275 = vmatpush1.bf16.msra.mxu0 %v2255
    %2276 = vmatprep.subr.bf16.mxu0 0
    %2277 = vmatpush1.bf16.msra.mxu0 %v2256
    %2278 = vmatprep.subr.bf16.mxu0 0
    %2279 = vmatpush1.bf16.msra.mxu0 %v2257
    %2280 = vmatprep.subr.bf16.mxu0 0
    %2281 = vmatpush1.bf16.msra.mxu0 %v2258
    %2282 = vmatprep.subr.bf16.mxu0 0
    %2283 = vmatpush1.bf16.msra.mxu0 %v2259
    %2284 = vmatprep.subr.bf16.mxu0 0
    %2285 = vmatpush1.bf16.msra.mxu0 0
    %2286 = vmatprep.subr.bf16.mxu0 0
    %2287 = vmatpush1.bf16.msra.mxu0 0
    %2288 = vmatprep.subr.bf16.mxu0 0
    %2289 = vmatpush1.bf16.msra.mxu0 0
    %2290 = vmatprep.subr.bf16.mxu0 0
    %2291 = vmatpush1.bf16.msra.mxu0 0
    %2292 = vmatprep.subr.bf16.mxu0 0
    %2293 = vmatpush1.bf16.msra.mxu0 0
    %2294 = vmatprep.subr.bf16.mxu0 0
    %2295 = vmatpush1.bf16.msra.mxu0 0
    %2296 = vmatprep.subr.bf16.mxu0 0
    %2297 = vmatpush1.bf16.msra.mxu0 0
    %2298 = vmatprep.subr.bf16.mxu0 0
    %2299 = vmatpush1.bf16.msra.mxu0 0
    %2300 = vmatprep.mubr.bf16.mxu0 0
    %2301 = vmatmul.mubr.bf16.gmra.mrb[0].mxu0 %v1990
    %v2302 = vpop.f32.mrb[0].mxu0
    %v2303 = vadd.f32 %v2215, %v2302
    %v2304 = vpop.f32.mrb[0].mxu0
    %v2305 = vpop.f32.mrb[0].mxu0
    %v2306 = vpop.f32.mrb[0].mxu0
    %2307 = vdwg.mxu0
    %s2308 = scalar_lea.vmem %s2, 17
    %v2309 = vld [vmem:[%s2308] sm:$0x1]
    %v2311 = vlaneseq
    %v2312 = vshrl.u32 %v2311, 7
    %v2313 = vsub.s32 0, %v2312
    %v2314 = vrot.slane %v2309, %v2313
    %v2316 = vadd.f32 %v2303, %v2314
    %v2317 = vpack.c.bf16 %v2316, %v2316
    %v2318 = vtanh.bf16.pop %v2317
    %s2319 = scalar_lea.vmem [#allocation2], 1280
    %v2320 = vld [vmem:[%s2319] sm:$0xf]
    %v2321 = vld [vmem:[%s2319 + $0x4] sm:$0xf]
    %v2322 = vld [vmem:[%s2319 + $0x8] sm:$0xf]
    %v2323 = vld [vmem:[%s2319 + $0xc] sm:$0xf]
    %v2324 = vld [vmem:[%s2319 + $0x10] sm:$0xf]
    %v2325 = vld [vmem:[%s2319 + $0x14] sm:$0xf]
    %v2326 = vld [vmem:[%s2319 + $0x18] sm:$0xf]
    %v2327 = vld [vmem:[%s2319 + $0x1c] sm:$0xf]
    %v2328 = vld [vmem:[%s2319 + $0x20] sm:$0xf]
    %v2329 = vld [vmem:[%s2319 + $0x24] sm:$0xf]
    %v2330 = vld [vmem:[%s2319 + $0x28] sm:$0xf]
    %v2331 = vld [vmem:[%s2319 + $0x2c] sm:$0xf]
    %v2332 = vld [vmem:[%s2319 + $0x30] sm:$0xf]
    %v2333 = vld [vmem:[%s2319 + $0x34] sm:$0xf]
    %v2334 = vld [vmem:[%s2319 + $0x38] sm:$0xf]
    %v2335 = vld [vmem:[%s2319 + $0x3c] sm:$0xf]
    %s2336 = scalar_lea.vmem %s2, 18
    %v2337 = vld [vmem:[%s2336] sm:$0x1]
    %v2339 = vlaneseq
    %v2340 = vshrl.u32 %v2339, 7
    %v2341 = vsub.s32 0, %v2340
    %v2342 = vrot.slane %v2337, %v2341
    %v2360 = vunpack.c.l.b16 %v2320
    %v2361 = vunpack.c.l.b16 %v2321
    %v2362 = vunpack.c.l.b16 %v2322
    %v2363 = vunpack.c.l.b16 %v2323
    %v2364 = vunpack.c.l.b16 %v2324
    %v2365 = vunpack.c.l.b16 %v2325
    %v2366 = vunpack.c.l.b16 %v2326
    %v2367 = vunpack.c.l.b16 %v2327
    %v2368 = vunpack.c.l.b16 %v2328
    %v2369 = vunpack.c.l.b16 %v2329
    %v2370 = vunpack.c.l.b16 %v2330
    %v2371 = vunpack.c.l.b16 %v2331
    %v2372 = vunpack.c.l.b16 %v2332
    %v2373 = vunpack.c.l.b16 %v2333
    %v2374 = vunpack.c.l.b16 %v2334
    %v2375 = vunpack.c.l.b16 %v2335
    %v2376 = vpack.c.b16 %v2361, %v2360
    %v2377 = vpack.c.b16 %v2363, %v2362
    %v2378 = vpack.c.b16 %v2365, %v2364
    %v2379 = vpack.c.b16 %v2367, %v2366
    %v2380 = vpack.c.b16 %v2369, %v2368
    %v2381 = vpack.c.b16 %v2371, %v2370
    %v2382 = vpack.c.b16 %v2373, %v2372
    %v2383 = vpack.c.b16 %v2375, %v2374
    %2392 = vmatprep.subr.bf16.mxu0 0
    %2393 = vmatpush1.bf16.msra.mxu0 %v2376
    %2394 = vmatprep.subr.bf16.mxu0 0
    %2395 = vmatpush1.bf16.msra.mxu0 %v2377
    %2396 = vmatprep.subr.bf16.mxu0 0
    %2397 = vmatpush1.bf16.msra.mxu0 %v2378
    %2398 = vmatprep.subr.bf16.mxu0 0
    %2399 = vmatpush1.bf16.msra.mxu0 %v2379
    %2400 = vmatprep.subr.bf16.mxu0 0
    %2401 = vmatpush1.bf16.msra.mxu0 %v2380
    %2402 = vmatprep.subr.bf16.mxu0 0
    %2403 = vmatpush1.bf16.msra.mxu0 %v2381
    %2404 = vmatprep.subr.bf16.mxu0 0
    %2405 = vmatpush1.bf16.msra.mxu0 %v2382
    %2406 = vmatprep.subr.bf16.mxu0 0
    %2407 = vmatpush1.bf16.msra.mxu0 %v2383
    %2408 = vmatprep.subr.bf16.mxu0 0
    %2409 = vmatpush1.bf16.msra.mxu0 0
    %2410 = vmatprep.subr.bf16.mxu0 0
    %2411 = vmatpush1.bf16.msra.mxu0 0
    %2412 = vmatprep.subr.bf16.mxu0 0
    %2413 = vmatpush1.bf16.msra.mxu0 0
    %2414 = vmatprep.subr.bf16.mxu0 0
    %2415 = vmatpush1.bf16.msra.mxu0 0
    %2416 = vmatprep.subr.bf16.mxu0 0
    %2417 = vmatpush1.bf16.msra.mxu0 0
    %2418 = vmatprep.subr.bf16.mxu0 0
    %2419 = vmatpush1.bf16.msra.mxu0 0
    %2420 = vmatprep.subr.bf16.mxu0 0
    %2421 = vmatpush1.bf16.msra.mxu0 0
    %2422 = vmatprep.subr.bf16.mxu0 0
    %2423 = vmatpush1.bf16.msra.mxu0 0
    %2424 = vmatprep.mubr.bf16.mxu0 0
    %2425 = vmatmul.mubr.bf16.gmra.mrb[0].mxu0 %v2318
    %v2426 = vpop.f32.mrb[0].mxu0
    %v2427 = vadd.f32 %v2342, %v2426
    %v2428 = vpop.f32.mrb[0].mxu0
    %v2429 = vpop.f32.mrb[0].mxu0
    %v2430 = vpop.f32.mrb[0].mxu0
    %2431 = vdwg.mxu0
    %v2432 = vadd.f32 %v1875, %v2427
    %v2433 = vpack.c.bf16 %v2432, %v2432
    %s2434 = scalar_lea.vmem [#allocation2], 1344
    %v2435 = vld [vmem:[%s2434] sm:$0xf]
    %v2436 = vld [vmem:[%s2434 + $0x4] sm:$0xf]
    %v2437 = vld [vmem:[%s2434 + $0x8] sm:$0xf]
    %v2438 = vld [vmem:[%s2434 + $0xc] sm:$0xf]
    %v2439 = vld [vmem:[%s2434 + $0x10] sm:$0xf]
    %v2440 = vld [vmem:[%s2434 + $0x14] sm:$0xf]
    %v2441 = vld [vmem:[%s2434 + $0x18] sm:$0xf]
    %v2442 = vld [vmem:[%s2434 + $0x1c] sm:$0xf]
    %v2443 = vld [vmem:[%s2434 + $0x20] sm:$0xf]
    %v2444 = vld [vmem:[%s2434 + $0x24] sm:$0xf]
    %v2445 = vld [vmem:[%s2434 + $0x28] sm:$0xf]
    %v2446 = vld [vmem:[%s2434 + $0x2c] sm:$0xf]
    %v2447 = vld [vmem:[%s2434 + $0x30] sm:$0xf]
    %v2448 = vld [vmem:[%s2434 + $0x34] sm:$0xf]
    %v2449 = vld [vmem:[%s2434 + $0x38] sm:$0xf]
    %v2450 = vld [vmem:[%s2434 + $0x3c] sm:$0xf]
    %s2451 = scalar_lea.vmem %s2, 19
    %v2452 = vld [vmem:[%s2451] sm:$0x1]
    %v2454 = vlaneseq
    %v2455 = vshrl.u32 %v2454, 7
    %v2456 = vsub.s32 0, %v2455
    %v2457 = vrot.slane %v2452, %v2456
    %v2475 = vunpack.c.l.b16 %v2435
    %v2476 = vunpack.c.l.b16 %v2436
    %v2477 = vunpack.c.l.b16 %v2437
    %v2478 = vunpack.c.l.b16 %v2438
    %v2479 = vunpack.c.l.b16 %v2439
    %v2480 = vunpack.c.l.b16 %v2440
    %v2481 = vunpack.c.l.b16 %v2441
    %v2482 = vunpack.c.l.b16 %v2442
    %v2483 = vunpack.c.l.b16 %v2443
    %v2484 = vunpack.c.l.b16 %v2444
    %v2485 = vunpack.c.l.b16 %v2445
    %v2486 = vunpack.c.l.b16 %v2446
    %v2487 = vunpack.c.l.b16 %v2447
    %v2488 = vunpack.c.l.b16 %v2448
    %v2489 = vunpack.c.l.b16 %v2449
    %v2490 = vunpack.c.l.b16 %v2450
    %v2491 = vpack.c.b16 %v2476, %v2475
    %v2492 = vpack.c.b16 %v2478, %v2477
    %v2493 = vpack.c.b16 %v2480, %v2479
    %v2494 = vpack.c.b16 %v2482, %v2481
    %v2495 = vpack.c.b16 %v2484, %v2483
    %v2496 = vpack.c.b16 %v2486, %v2485
    %v2497 = vpack.c.b16 %v2488, %v2487
    %v2498 = vpack.c.b16 %v2490, %v2489
    %2507 = vmatprep.subr.bf16.mxu0 0
    %2508 = vmatpush1.bf16.msra.mxu0 %v2491
    %2509 = vmatprep.subr.bf16.mxu0 0
    %2510 = vmatpush1.bf16.msra.mxu0 %v2492
    %2511 = vmatprep.subr.bf16.mxu0 0
    %2512 = vmatpush1.bf16.msra.mxu0 %v2493
    %2513 = vmatprep.subr.bf16.mxu0 0
    %2514 = vmatpush1.bf16.msra.mxu0 %v2494
    %2515 = vmatprep.subr.bf16.mxu0 0
    %2516 = vmatpush1.bf16.msra.mxu0 %v2495
    %2517 = vmatprep.subr.bf16.mxu0 0
    %2518 = vmatpush1.bf16.msra.mxu0 %v2496
    %2519 = vmatprep.subr.bf16.mxu0 0
    %2520 = vmatpush1.bf16.msra.mxu0 %v2497
    %2521 = vmatprep.subr.bf16.mxu0 0
    %2522 = vmatpush1.bf16.msra.mxu0 %v2498
    %2523 = vmatprep.subr.bf16.mxu0 0
    %2524 = vmatpush1.bf16.msra.mxu0 0
    %2525 = vmatprep.subr.bf16.mxu0 0
    %2526 = vmatpush1.bf16.msra.mxu0 0
    %2527 = vmatprep.subr.bf16.mxu0 0
    %2528 = vmatpush1.bf16.msra.mxu0 0
    %2529 = vmatprep.subr.bf16.mxu0 0
    %2530 = vmatpush1.bf16.msra.mxu0 0
    %2531 = vmatprep.subr.bf16.mxu0 0
    %2532 = vmatpush1.bf16.msra.mxu0 0
    %2533 = vmatprep.subr.bf16.mxu0 0
    %2534 = vmatpush1.bf16.msra.mxu0 0
    %2535 = vmatprep.subr.bf16.mxu0 0
    %2536 = vmatpush1.bf16.msra.mxu0 0
    %2537 = vmatprep.subr.bf16.mxu0 0
    %2538 = vmatpush1.bf16.msra.mxu0 0
    %2539 = vmatprep.mubr.bf16.mxu0 0
    %2540 = vmatmul.mubr.bf16.gmra.mrb[0].mxu0 %v2433
    %v2541 = vpop.f32.mrb[0].mxu0
    %v2542 = vadd.f32 %v2457, %v2541
    %v2543 = vpop.f32.mrb[0].mxu0
    %v2544 = vpop.f32.mrb[0].mxu0
    %v2545 = vpop.f32.mrb[0].mxu0
    %2546 = vdwg.mxu0
    %v2547 = vpack.c.bf16 %v2542, %v2542
    %v2548 = vtanh.bf16.pop %v2547
    %s2549 = scalar_lea.vmem [#allocation2], 1408
    %v2550 = vld [vmem:[%s2549] sm:$0xf]
    %v2551 = vld [vmem:[%s2549 + $0x4] sm:$0xf]
    %v2552 = vld [vmem:[%s2549 + $0x8] sm:$0xf]
    %v2553 = vld [vmem:[%s2549 + $0xc] sm:$0xf]
    %v2554 = vld [vmem:[%s2549 + $0x10] sm:$0xf]
    %v2555 = vld [vmem:[%s2549 + $0x14] sm:$0xf]
    %v2556 = vld [vmem:[%s2549 + $0x18] sm:$0xf]
    %v2557 = vld [vmem:[%s2549 + $0x1c] sm:$0xf]
    %v2558 = vld [vmem:[%s2549 + $0x20] sm:$0xf]
    %v2559 = vld [vmem:[%s2549 + $0x24] sm:$0xf]
    %v2560 = vld [vmem:[%s2549 + $0x28] sm:$0xf]
    %v2561 = vld [vmem:[%s2549 + $0x2c] sm:$0xf]
    %v2562 = vld [vmem:[%s2549 + $0x30] sm:$0xf]
    %v2563 = vld [vmem:[%s2549 + $0x34] sm:$0xf]
    %v2564 = vld [vmem:[%s2549 + $0x38] sm:$0xf]
    %v2565 = vld [vmem:[%s2549 + $0x3c] sm:$0xf]
    %s2566 = scalar_lea.vmem %s2, 20
    %v2567 = vld [vmem:[%s2566] sm:$0x1]
    %v2569 = vlaneseq
    %v2570 = vshrl.u32 %v2569, 7
    %v2571 = vsub.s32 0, %v2570
    %v2572 = vrot.slane %v2567, %v2571
    %v2590 = vunpack.c.l.b16 %v2550
    %v2591 = vunpack.c.l.b16 %v2551
    %v2592 = vunpack.c.l.b16 %v2552
    %v2593 = vunpack.c.l.b16 %v2553
    %v2594 = vunpack.c.l.b16 %v2554
    %v2595 = vunpack.c.l.b16 %v2555
    %v2596 = vunpack.c.l.b16 %v2556
    %v2597 = vunpack.c.l.b16 %v2557
    %v2598 = vunpack.c.l.b16 %v2558
    %v2599 = vunpack.c.l.b16 %v2559
    %v2600 = vunpack.c.l.b16 %v2560
    %v2601 = vunpack.c.l.b16 %v2561
    %v2602 = vunpack.c.l.b16 %v2562
    %v2603 = vunpack.c.l.b16 %v2563
    %v2604 = vunpack.c.l.b16 %v2564
    %v2605 = vunpack.c.l.b16 %v2565
    %v2606 = vpack.c.b16 %v2591, %v2590
    %v2607 = vpack.c.b16 %v2593, %v2592
    %v2608 = vpack.c.b16 %v2595, %v2594
    %v2609 = vpack.c.b16 %v2597, %v2596
    %v2610 = vpack.c.b16 %v2599, %v2598
    %v2611 = vpack.c.b16 %v2601, %v2600
    %v2612 = vpack.c.b16 %v2603, %v2602
    %v2613 = vpack.c.b16 %v2605, %v2604
    %2622 = vmatprep.subr.bf16.mxu0 0
    %2623 = vmatpush1.bf16.msra.mxu0 %v2606
    %2624 = vmatprep.subr.bf16.mxu0 0
    %2625 = vmatpush1.bf16.msra.mxu0 %v2607
    %2626 = vmatprep.subr.bf16.mxu0 0
    %2627 = vmatpush1.bf16.msra.mxu0 %v2608
    %2628 = vmatprep.subr.bf16.mxu0 0
    %2629 = vmatpush1.bf16.msra.mxu0 %v2609
    %2630 = vmatprep.subr.bf16.mxu0 0
    %2631 = vmatpush1.bf16.msra.mxu0 %v2610
    %2632 = vmatprep.subr.bf16.mxu0 0
    %2633 = vmatpush1.bf16.msra.mxu0 %v2611
    %2634 = vmatprep.subr.bf16.mxu0 0
    %2635 = vmatpush1.bf16.msra.mxu0 %v2612
    %2636 = vmatprep.subr.bf16.mxu0 0
    %2637 = vmatpush1.bf16.msra.mxu0 %v2613
    %2638 = vmatprep.subr.bf16.mxu0 0
    %2639 = vmatpush1.bf16.msra.mxu0 0
    %2640 = vmatprep.subr.bf16.mxu0 0
    %2641 = vmatpush1.bf16.msra.mxu0 0
    %2642 = vmatprep.subr.bf16.mxu0 0
    %2643 = vmatpush1.bf16.msra.mxu0 0
    %2644 = vmatprep.subr.bf16.mxu0 0
    %2645 = vmatpush1.bf16.msra.mxu0 0
    %2646 = vmatprep.subr.bf16.mxu0 0
    %2647 = vmatpush1.bf16.msra.mxu0 0
    %2648 = vmatprep.subr.bf16.mxu0 0
    %2649 = vmatpush1.bf16.msra.mxu0 0
    %2650 = vmatprep.subr.bf16.mxu0 0
    %2651 = vmatpush1.bf16.msra.mxu0 0
    %2652 = vmatprep.subr.bf16.mxu0 0
    %2653 = vmatpush1.bf16.msra.mxu0 0
    %2654 = vmatprep.mubr.bf16.mxu0 0
    %2655 = vmatmul.mubr.bf16.gmra.mrb[0].mxu0 %v2548
    %v2656 = vpop.f32.mrb[0].mxu0
    %v2657 = vadd.f32 %v2572, %v2656
    %v2658 = vpop.f32.mrb[0].mxu0
    %v2659 = vpop.f32.mrb[0].mxu0
    %v2660 = vpop.f32.mrb[0].mxu0
    %2661 = vdwg.mxu0
    %v2662 = vpack.c.bf16 %v2657, %v2657
    %v2663 = vtanh.bf16.pop %v2662
    %s2664 = scalar_lea.vmem [#allocation2], 1472
    %v2665 = vld [vmem:[%s2664] sm:$0xf]
    %v2666 = vld [vmem:[%s2664 + $0x4] sm:$0xf]
    %v2667 = vld [vmem:[%s2664 + $0x8] sm:$0xf]
    %v2668 = vld [vmem:[%s2664 + $0xc] sm:$0xf]
    %v2669 = vld [vmem:[%s2664 + $0x10] sm:$0xf]
    %v2670 = vld [vmem:[%s2664 + $0x14] sm:$0xf]
    %v2671 = vld [vmem:[%s2664 + $0x18] sm:$0xf]
    %v2672 = vld [vmem:[%s2664 + $0x1c] sm:$0xf]
    %v2673 = vld [vmem:[%s2664 + $0x20] sm:$0xf]
    %v2674 = vld [vmem:[%s2664 + $0x24] sm:$0xf]
    %v2675 = vld [vmem:[%s2664 + $0x28] sm:$0xf]
    %v2676 = vld [vmem:[%s2664 + $0x2c] sm:$0xf]
    %v2677 = vld [vmem:[%s2664 + $0x30] sm:$0xf]
    %v2678 = vld [vmem:[%s2664 + $0x34] sm:$0xf]
    %v2679 = vld [vmem:[%s2664 + $0x38] sm:$0xf]
    %v2680 = vld [vmem:[%s2664 + $0x3c] sm:$0xf]
    %s2681 = scalar_lea.vmem %s2, 21
    %v2682 = vld [vmem:[%s2681] sm:$0x1]
    %v2684 = vlaneseq
    %v2685 = vshrl.u32 %v2684, 7
    %v2686 = vsub.s32 0, %v2685
    %v2687 = vrot.slane %v2682, %v2686
    %v2705 = vunpack.c.l.b16 %v2665
    %v2706 = vunpack.c.l.b16 %v2666
    %v2707 = vunpack.c.l.b16 %v2667
    %v2708 = vunpack.c.l.b16 %v2668
    %v2709 = vunpack.c.l.b16 %v2669
    %v2710 = vunpack.c.l.b16 %v2670
    %v2711 = vunpack.c.l.b16 %v2671
    %v2712 = vunpack.c.l.b16 %v2672
    %v2713 = vunpack.c.l.b16 %v2673
    %v2714 = vunpack.c.l.b16 %v2674
    %v2715 = vunpack.c.l.b16 %v2675
    %v2716 = vunpack.c.l.b16 %v2676
    %v2717 = vunpack.c.l.b16 %v2677
    %v2718 = vunpack.c.l.b16 %v2678
    %v2719 = vunpack.c.l.b16 %v2679
    %v2720 = vunpack.c.l.b16 %v2680
    %v2721 = vpack.c.b16 %v2706, %v2705
    %v2722 = vpack.c.b16 %v2708, %v2707
    %v2723 = vpack.c.b16 %v2710, %v2709
    %v2724 = vpack.c.b16 %v2712, %v2711
    %v2725 = vpack.c.b16 %v2714, %v2713
    %v2726 = vpack.c.b16 %v2716, %v2715
    %v2727 = vpack.c.b16 %v2718, %v2717
    %v2728 = vpack.c.b16 %v2720, %v2719
    %2737 = vmatprep.subr.bf16.mxu0 0
    %2738 = vmatpush1.bf16.msra.mxu0 %v2721
    %2739 = vmatprep.subr.bf16.mxu0 0
    %2740 = vmatpush1.bf16.msra.mxu0 %v2722
    %2741 = vmatprep.subr.bf16.mxu0 0
    %2742 = vmatpush1.bf16.msra.mxu0 %v2723
    %2743 = vmatprep.subr.bf16.mxu0 0
    %2744 = vmatpush1.bf16.msra.mxu0 %v2724
    %2745 = vmatprep.subr.bf16.mxu0 0
    %2746 = vmatpush1.bf16.msra.mxu0 %v2725
    %2747 = vmatprep.subr.bf16.mxu0 0
    %2748 = vmatpush1.bf16.msra.mxu0 %v2726
    %2749 = vmatprep.subr.bf16.mxu0 0
    %2750 = vmatpush1.bf16.msra.mxu0 %v2727
    %2751 = vmatprep.subr.bf16.mxu0 0
    %2752 = vmatpush1.bf16.msra.mxu0 %v2728
    %2753 = vmatprep.subr.bf16.mxu0 0
    %2754 = vmatpush1.bf16.msra.mxu0 0
    %2755 = vmatprep.subr.bf16.mxu0 0
    %2756 = vmatpush1.bf16.msra.mxu0 0
    %2757 = vmatprep.subr.bf16.mxu0 0
    %2758 = vmatpush1.bf16.msra.mxu0 0
    %2759 = vmatprep.subr.bf16.mxu0 0
    %2760 = vmatpush1.bf16.msra.mxu0 0
    %2761 = vmatprep.subr.bf16.mxu0 0
    %2762 = vmatpush1.bf16.msra.mxu0 0
    %2763 = vmatprep.subr.bf16.mxu0 0
    %2764 = vmatpush1.bf16.msra.mxu0 0
    %2765 = vmatprep.subr.bf16.mxu0 0
    %2766 = vmatpush1.bf16.msra.mxu0 0
    %2767 = vmatprep.subr.bf16.mxu0 0
    %2768 = vmatpush1.bf16.msra.mxu0 0
    %2769 = vmatprep.mubr.bf16.mxu0 0
    %2770 = vmatmul.mubr.bf16.gmra.mrb[0].mxu0 %v2663
    %v2771 = vpop.f32.mrb[0].mxu0
    %v2772 = vadd.f32 %v2687, %v2771
    %v2773 = vpop.f32.mrb[0].mxu0
    %v2774 = vpop.f32.mrb[0].mxu0
    %v2775 = vpop.f32.mrb[0].mxu0
    %2776 = vdwg.mxu0
    %v2777 = vpack.c.bf16 %v2772, %v2772
    %v2778 = vtanh.bf16.pop %v2777
    %s2779 = scalar_lea.vmem [#allocation2], 1536
    %v2780 = vld [vmem:[%s2779] sm:$0xf]
    %v2781 = vld [vmem:[%s2779 + $0x4] sm:$0xf]
    %v2782 = vld [vmem:[%s2779 + $0x8] sm:$0xf]
    %v2783 = vld [vmem:[%s2779 + $0xc] sm:$0xf]
    %v2784 = vld [vmem:[%s2779 + $0x10] sm:$0xf]
    %v2785 = vld [vmem:[%s2779 + $0x14] sm:$0xf]
    %v2786 = vld [vmem:[%s2779 + $0x18] sm:$0xf]
    %v2787 = vld [vmem:[%s2779 + $0x1c] sm:$0xf]
    %v2788 = vld [vmem:[%s2779 + $0x20] sm:$0xf]
    %v2789 = vld [vmem:[%s2779 + $0x24] sm:$0xf]
    %v2790 = vld [vmem:[%s2779 + $0x28] sm:$0xf]
    %v2791 = vld [vmem:[%s2779 + $0x2c] sm:$0xf]
    %v2792 = vld [vmem:[%s2779 + $0x30] sm:$0xf]
    %v2793 = vld [vmem:[%s2779 + $0x34] sm:$0xf]
    %v2794 = vld [vmem:[%s2779 + $0x38] sm:$0xf]
    %v2795 = vld [vmem:[%s2779 + $0x3c] sm:$0xf]
    %v2812 = vunpack.c.l.b16 %v2780
    %v2813 = vunpack.c.l.b16 %v2781
    %v2814 = vunpack.c.l.b16 %v2782
    %v2815 = vunpack.c.l.b16 %v2783
    %v2816 = vunpack.c.l.b16 %v2784
    %v2817 = vunpack.c.l.b16 %v2785
    %v2818 = vunpack.c.l.b16 %v2786
    %v2819 = vunpack.c.l.b16 %v2787
    %v2820 = vunpack.c.l.b16 %v2788
    %v2821 = vunpack.c.l.b16 %v2789
    %v2822 = vunpack.c.l.b16 %v2790
    %v2823 = vunpack.c.l.b16 %v2791
    %v2824 = vunpack.c.l.b16 %v2792
    %v2825 = vunpack.c.l.b16 %v2793
    %v2826 = vunpack.c.l.b16 %v2794
    %v2827 = vunpack.c.l.b16 %v2795
    %v2828 = vpack.c.b16 %v2813, %v2812
    %v2829 = vpack.c.b16 %v2815, %v2814
    %v2830 = vpack.c.b16 %v2817, %v2816
    %v2831 = vpack.c.b16 %v2819, %v2818
    %v2832 = vpack.c.b16 %v2821, %v2820
    %v2833 = vpack.c.b16 %v2823, %v2822
    %v2834 = vpack.c.b16 %v2825, %v2824
    %v2835 = vpack.c.b16 %v2827, %v2826
    %2844 = vmatprep.subr.bf16.mxu0 0
    %2845 = vmatpush1.bf16.msra.mxu0 %v2828
    %2846 = vmatprep.subr.bf16.mxu0 0
    %2847 = vmatpush1.bf16.msra.mxu0 %v2829
    %2848 = vmatprep.subr.bf16.mxu0 0
    %2849 = vmatpush1.bf16.msra.mxu0 %v2830
    %2850 = vmatprep.subr.bf16.mxu0 0
    %2851 = vmatpush1.bf16.msra.mxu0 %v2831
    %2852 = vmatprep.subr.bf16.mxu0 0
    %2853 = vmatpush1.bf16.msra.mxu0 %v2832
    %2854 = vmatprep.subr.bf16.mxu0 0
    %2855 = vmatpush1.bf16.msra.mxu0 %v2833
    %2856 = vmatprep.subr.bf16.mxu0 0
    %2857 = vmatpush1.bf16.msra.mxu0 %v2834
    %2858 = vmatprep.subr.bf16.mxu0 0
    %2859 = vmatpush1.bf16.msra.mxu0 %v2835
    %2860 = vmatprep.subr.bf16.mxu0 0
    %2861 = vmatpush1.bf16.msra.mxu0 0
    %2862 = vmatprep.subr.bf16.mxu0 0
    %2863 = vmatpush1.bf16.msra.mxu0 0
    %2864 = vmatprep.subr.bf16.mxu0 0
    %2865 = vmatpush1.bf16.msra.mxu0 0
    %2866 = vmatprep.subr.bf16.mxu0 0
    %2867 = vmatpush1.bf16.msra.mxu0 0
    %2868 = vmatprep.subr.bf16.mxu0 0
    %2869 = vmatpush1.bf16.msra.mxu0 0
    %2870 = vmatprep.subr.bf16.mxu0 0
    %2871 = vmatpush1.bf16.msra.mxu0 0
    %2872 = vmatprep.subr.bf16.mxu0 0
    %2873 = vmatpush1.bf16.msra.mxu0 0
    %2874 = vmatprep.subr.bf16.mxu0 0
    %2875 = vmatpush1.bf16.msra.mxu0 0
    %2876 = vmatprep.mubr.bf16.mxu0 0
    %2877 = vmatmul.mubr.bf16.gmra.mrb[0].mxu0 %v2778
    %v2878 = vpop.f32.mrb[0].mxu0
    %v2879 = vadd.f32 1.0, %v2878
    %v2880 = vpop.f32.mrb[0].mxu0
    %v2881 = vpop.f32.mrb[0].mxu0
    %v2882 = vpop.f32.mrb[0].mxu0
    %2883 = vdwg.mxu0
    %s2884 = scalar_lea.vmem %s2, 22
    %v2885 = vld [vmem:[%s2884] sm:$0x1]
    %v2887 = vlaneseq
    %v2888 = vshrl.u32 %v2887, 7
    %v2889 = vsub.s32 0, %v2888
    %v2890 = vrot.slane %v2885, %v2889
    %v2892 = vadd.f32 %v2879, %v2890
    %2893 = vst [vmem:[%s3] sm:$0xff] %v2892
    // Predicated region
    $region18: #{_lambda_.1} parent=1 // pred_check
      _
    $region19: #{_lambda_.1} parent=1 // pred_check_branch
      %2895 = sbr.rel (0) target = $region21
    $region20: #{_lambda_.1} parent=1 // pred_region
      _
    $region21: #{_lambda_.1} parent=1 // pred_fallthru
      _
    // Predicated region
    $region22: #{_lambda_.1} parent=1 // pred_check
      _
    $region23: #{_lambda_.1} parent=1 // pred_check_branch
      %2897 = sbr.rel (0) target = $region25
    $region24: #{_lambda_.1} parent=1 // pred_region
      _
    $region25: #{_lambda_.1} parent=1 // pred_fallthru
      _
    %2898 = vsyncpa [#allocation3], 1

</llo_original>
